<compile_context>
chip_gen: v6e
topology: v6e:2x2x1
jax: 0.10.0
libtpu: 0.0.40
codegen_flags: <defaults>
</compile_context>

<pallas_src>
import jax
import jax.numpy as jnp
from jax import lax
from jax.experimental import pallas as pl
from jax.experimental.pallas import tpu as pltpu


_SELU_ALPHA = 1.6732632423543772
_SELU_SCALE = 1.0507009873554804


def _selu(x):
    # where + exp: exp goes to the EUP slot, one select on the VPU.
    return _SELU_SCALE * jnp.where(x > 0, x, _SELU_ALPHA * (jnp.exp(x) - 1.0))


def _round_up(v, m):
    return ((v + m - 1) // m) * m


# --------------------------- Pallas kernels ---------------------------------


def layer1_kernel(a_ref, x_ref, w1_ref, b1_ref, w2_ref, p2_ref):
    """P2_tile = selu((Â_tile @ X) @ W1 + b1) @ W2   (aggregate-first: in_dim < 256)."""
    ax = jnp.dot(a_ref[...], x_ref[...], preferred_element_type=jnp.float32)
    h1 = _selu(jnp.dot(ax, w1_ref[...], preferred_element_type=jnp.float32)
               + b1_ref[...])
    p2_ref[...] = jnp.dot(h1, w2_ref[...],
                          preferred_element_type=jnp.float32).astype(p2_ref.dtype)


def layer2_kernel(a_ref, p2_ref, w3_ref, b2_ref, p3_ref):
    """P3_tile = selu(Â_tile @ P2 + b2) @ W3pad."""
    h2 = _selu(jnp.dot(a_ref[...], p2_ref[...],
                       preferred_element_type=jnp.float32) + b2_ref[...])
    p3_ref[...] = jnp.dot(h2, w3_ref[...],
                          preferred_element_type=jnp.float32).astype(p3_ref.dtype)


def layer3_kernel(a_ref, p3_ref, b3_ref, h3_ref):
    """H3_tile = Â_tile @ P3 + b3pad."""
    h3_ref[...] = (jnp.dot(a_ref[...], p3_ref[...],
                           preferred_element_type=jnp.float32) + b3_ref[...])


def epilogue_kernel(s_ref, h3_ref, o_ref):
    """y = row_normalize(tanh(H3_tile / total_sum)**2)."""
    h = h3_ref[...] / s_ref[0, 0]
    t = jnp.tanh(h)
    t = t * t
    ssq = jnp.sum(t * t, axis=-1, keepdims=True)
    # x / max(||x||, 1e-12)  ==  x * rsqrt(max(||x||^2, 1e-24))
    o_ref[...] = t * lax.rsqrt(jnp.maximum(ssq, 1e-24))


# ------------------------------- wrapper -------------------------------------


def _ce(flops, trans, mem):
    return pl.CostEstimate(flops=int(flops), transcendentals=int(trans),
                           bytes_accessed=int(mem))


def gnn_forward(a_norm, x, params, *, tm=None):
    """a_norm: (N, N) dense normalized adjacency (f32); x: (N, in_dim) f32."""
    w1, b1, w2, b2, w3, b3 = params
    n, in_dim = x.shape
    h1_dim = w1.shape[1]          # 256
    h2_dim = w2.shape[1]          # 128
    out_dim = w3.shape[1]

    # --- tiling geometry -----------------------------------------------------
    if tm is None:
        tm = min(256, _round_up(n, 8))        # 128-256 row tiles; mult of 8 sublanes
    n_pad = _round_up(n, tm)
    out_pad = _round_up(out_dim, 128)         # lane-dense layer-3 / epilogue
    grid = (n_pad // tm,)

    f32, bf16 = jnp.float32, jnp.bfloat16

    # Pad (zero rows/cols isolate padding exactly) and cast the big operands to
    # bf16; accumulation stays f32 inside the kernels.
    a_bf = jnp.pad(a_norm.astype(bf16), ((0, n_pad - n), (0, n_pad - n)))
    x_bf = jnp.pad(x.astype(bf16), ((0, n_pad - n), (0, 0)))
    w3p = jnp.pad(w3, ((0, 0), (0, out_pad - out_dim)))
    b3p = jnp.pad(b3, ((0, 0), (0, out_pad - out_dim)))

    def row_spec(cols):
        return pl.BlockSpec((tm, cols), lambda i: (i, 0))

    def full(shape):
        return pl.BlockSpec(shape, lambda i: (0, 0))

    # VMEM budget: double-buffered Â row tile + resident feature operand + out
    # tile + weights + headroom (kept well under v7x's 64 MiB physical VMEM).
    a_tile_b = tm * n_pad * 2
    resident_b = max(n_pad * in_dim * 2, n_pad * h2_dim * 2, n_pad * out_pad * 4)
    out_tile_b = tm * max(h2_dim, out_pad) * 4
    weights_b = (in_dim * h1_dim + h1_dim + h1_dim * h2_dim
                 + h2_dim * out_pad + h2_dim + out_pad) * 4
    vmem_limit = 2 * a_tile_b + 2 * resident_b + 2 * out_tile_b + weights_b + (4 << 20)
    vmem_limit = int(min(max(vmem_limit, 32 << 20), 48 << 20))
    cp = pltpu.CompilerParams(dimension_semantics=("parallel",),
                              vmem_limit_bytes=vmem_limit)

    # --- layer 1 (+ fused projection of layer 2) ------------------------------
    # NOTE: aggregate-first order assumes in_dim < hidden (true here: 32 < 256);
    # it is mathematically identical to Â(XW1) either way.
    p2 = pl.pallas_call(
        layer1_kernel,
        out_shape=jax.ShapeDtypeStruct((n_pad, h2_dim), bf16),
        grid=grid,
        in_specs=[row_spec(n_pad), full((n_pad, in_dim)),
                  full((in_dim, h1_dim)), full((1, h1_dim)),
                  full((h1_dim, h2_dim))],
        out_specs=row_spec(h2_dim),
        compiler_params=cp,
        cost_estimate=_ce(
            2 * n_pad * n_pad * in_dim + 2 * n_pad * in_dim * h1_dim
            + 2 * n_pad * h1_dim * h2_dim,
            n_pad * h1_dim,
            n_pad * n_pad * 2 + n_pad * in_dim * 2 + weights_b
            + n_pad * h2_dim * 2),
    )(a_bf, x_bf, w1, b1, w2)

    # --- layer 2 (+ fused projection of layer 3) ------------------------------
    p3 = pl.pallas_call(
        layer2_kernel,
        out_shape=jax.ShapeDtypeStruct((n_pad, out_pad), bf16),
        grid=grid,
        in_specs=[row_spec(n_pad), full((n_pad, h2_dim)),
                  full((h2_dim, out_pad)), full((1, h2_dim))],
        out_specs=row_spec(out_pad),
        compiler_params=cp,
        cost_estimate=_ce(
            2 * n_pad * n_pad * h2_dim + 2 * n_pad * h2_dim * out_pad,
            n_pad * h2_dim,
            n_pad * n_pad * 2 + n_pad * h2_dim * 2 + weights_b
            + n_pad * out_pad * 2),
    )(a_bf, p2, w3p, b2)

    # --- layer 3 ---------------------------------------------------------------
    h3 = pl.pallas_call(
        layer3_kernel,
        out_shape=jax.ShapeDtypeStruct((n_pad, out_pad), f32),
        grid=grid,
        in_specs=[row_spec(n_pad), full((n_pad, out_pad)), full((1, out_pad))],
        out_specs=row_spec(out_pad),
        compiler_params=cp,
        cost_estimate=_ce(
            2 * n_pad * n_pad * out_pad, 0,
            n_pad * n_pad * 2 + n_pad * out_pad * 2 + n_pad * out_pad * 4),
    )(a_bf, p3, b3p)

    # TODO(synk): the global scalar sum over h3 is a cross-tile reduction; it is
    # done with a tiny jnp.sum between pallas_calls (padded cols of h3 are exact
    # zeros, so only the real rows need slicing).
    total = jnp.sum(h3[:n, :out_dim]).reshape(1, 1)

    # --- epilogue: x/sum, tanh**2, row L2 normalize ---------------------------
    y = pl.pallas_call(
        epilogue_kernel,
        out_shape=jax.ShapeDtypeStruct((n_pad, out_pad), f32),
        grid=grid,
        in_specs=[pl.BlockSpec(memory_space=pltpu.MemorySpace.SMEM),
                  row_spec(out_pad)],
        out_specs=row_spec(out_pad),
        compiler_params=cp,
        cost_estimate=_ce(8 * n_pad * out_pad,
                          n_pad * out_pad + n_pad,
                          2 * n_pad * out_pad * 4),
    )(total, h3)

    return y[:n, :out_dim]


# ------------------------------- glue / demo ----------------------------------


def build_normalized_adjacency(edge_index, num_nodes):
    """Dense Â = D^{-1/2}(A+I)D^{-1/2} from a (2, E) symmetric edge_index."""
    src, dst = edge_index[0], edge_index[1]
    a = jnp.zeros((num_nodes, num_nodes), jnp.float32).at[dst, src].add(1.0)
    diag = jnp.diagonal(a)
    a = a + jnp.diag(jnp.where(diag > 0, 0.0, 1.0))   # add *remaining* self-loops
    deg = a.sum(axis=1)
    dinv = jnp.where(deg > 0, 1.0 / jnp.sqrt(deg), 0.0)
    return dinv[:, None] * a * dinv[None, :]


def init_params(key, in_dim, out_dim):
    k1, k2, k3 = jax.random.split(key, 3)

    def glorot(k, fan_in, fan_out):
        lim = (6.0 / (fan_in + fan_out)) ** 0.5
        return jax.random.uniform(k, (fan_in, fan_out), jnp.float32, -lim, lim)

    return (glorot(k1, in_dim, 256), jnp.zeros((1, 256), jnp.float32),
            glorot(k2, 256, 128), jnp.zeros((1, 128), jnp.float32),
            glorot(k3, 128, out_dim), jnp.zeros((1, out_dim), jnp.float32))


def ref_forward(a, x, params):
    """Pure-JAX reference mirroring the kernel's bf16 operand rounding."""
    w1, b1, w2, b2, w3, b3 = params
    bf = jnp.bfloat16
    a_bf = a.astype(bf)
    ax = jnp.dot(a_bf, x.astype(bf), preferred_element_type=jnp.float32)
    h1 = _selu(jnp.dot(ax, w1) + b1)
    p2 = jnp.dot(h1, w2).astype(bf)
    h2 = _selu(jnp.dot(a_bf, p2, preferred_element_type=jnp.float32) + b2)
    p3 = jnp.dot(h2, w3).astype(bf)
    h3 = jnp.dot(a_bf, p3, preferred_element_type=jnp.float32) + b3
    h3 = h3 / jnp.sum(h3)
    t = jnp.tanh(h3) ** 2
    nrm = jnp.sqrt(jnp.sum(t * t, axis=-1, keepdims=True))
    return t / jnp.maximum(nrm, 1e-12)


if __name__ == "__main__":
    key = jax.random.PRNGKey(0)
    k_x, k_e, k_p = jax.random.split(key, 3)

    num_nodes, in_dim, out_dim, num_edges = 512, 32, 16, 2048

    x = jax.random.normal(k_x, (num_nodes, in_dim), jnp.float32)
    e = jax.random.randint(k_e, (2, num_edges), 0, num_nodes)
    edge_index = jnp.concatenate(
        [e, jnp.stack([e[1], e[0]])], axis=1).astype(jnp.int32)

    a_norm = build_normalized_adjacency(edge_index, num_nodes)
    params = init_params(k_p, in_dim, out_dim)

    # TODO(synk): dropout is implemented as identity (eval mode, training=False).
    fwd = jax.jit(gnn_forward)
    out = jax.block_until_ready(fwd(a_norm, x, params))

    expected = ref_forward(a_norm, x, params)
    assert out.shape == (num_nodes, out_dim)
    assert bool(jnp.all(jnp.isfinite(out)))
    assert jnp.allclose(out, expected, atol=2e-4, rtol=2e-3), (
        float(jnp.max(jnp.abs(out - expected))))
    print("KERNEL_OK")
</pallas_src>

<mosaic_0001>
module attributes {stable_mosaic.version = 11 : i64} {
  func.func @layer1_kernel(%arg0: i32, %arg1: memref<256x512xbf16, #tpu.memory_space<vmem>>, %arg2: memref<512x32xbf16, #tpu.memory_space<vmem>>, %arg3: memref<32x256xf32, #tpu.memory_space<vmem>>, %arg4: memref<1x256xf32, #tpu.memory_space<vmem>>, %arg5: memref<256x128xf32, #tpu.memory_space<vmem>>, %arg6: memref<256x128xbf16, #tpu.memory_space<vmem>>) attributes {dimension_semantics = [#tpu.dimension_semantics<parallel>], iteration_bounds = array<i64: 2>, scalar_prefetch = 0 : i64, scratch_operands = 0 : i64, tpu.core_type = #tpu.core_type<tc>, window_params = [{transform_indices = @transform_0, window_bounds = array<i64: 256, 512>}, {pipeline_mode = #tpu.pipeline_mode<synchronous>, transform_indices = @transform_1, window_bounds = array<i64: 512, 32>}, {pipeline_mode = #tpu.pipeline_mode<synchronous>, transform_indices = @transform_2, window_bounds = array<i64: 32, 256>}, {pipeline_mode = #tpu.pipeline_mode<synchronous>, transform_indices = @transform_3, window_bounds = array<i64: 1, 256>}, {pipeline_mode = #tpu.pipeline_mode<synchronous>, transform_indices = @transform_4, window_bounds = array<i64: 256, 128>}, {transform_indices = @transform_5, window_bounds = array<i64: 256, 128>}]} {
    %c0 = arith.constant 0 : index
    %c0_0 = arith.constant 0 : index
    %0 = vector.load %arg1[%c0, %c0_0] : memref<256x512xbf16, #tpu.memory_space<vmem>>, vector<256x512xbf16>
    %c0_1 = arith.constant 0 : index
    %c0_2 = arith.constant 0 : index
    %1 = vector.load %arg2[%c0_1, %c0_2] : memref<512x32xbf16, #tpu.memory_space<vmem>>, vector<512x32xbf16>
    %cst = arith.constant dense<0.000000e+00> : vector<256x32xf32>
    %2 = tpu.matmul %0, %1, %cst {dimension_numbers = #tpu.dot_dimension_numbers<[1], [0], [0], [1], [0, 0, 1, 1], [], []>} : vector<256x512xbf16>, vector<512x32xbf16>, vector<256x32xf32> -> vector<256x32xf32>
    %c0_3 = arith.constant 0 : index
    %c0_4 = arith.constant 0 : index
    %3 = vector.load %arg3[%c0_3, %c0_4] : memref<32x256xf32, #tpu.memory_space<vmem>>, vector<32x256xf32>
    %cst_5 = arith.constant dense<0.000000e+00> : vector<256x256xf32>
    %4 = tpu.matmul %2, %3, %cst_5 {dimension_numbers = #tpu.dot_dimension_numbers<[1], [0], [0], [1], [0, 0, 1, 1], [], []>} : vector<256x32xf32>, vector<32x256xf32>, vector<256x256xf32> -> vector<256x256xf32>
    %c0_6 = arith.constant 0 : index
    %c0_7 = arith.constant 0 : index
    %5 = vector.load %arg4[%c0_6, %c0_7] : memref<1x256xf32, #tpu.memory_space<vmem>>, vector<1x256xf32>
    %6 = vector.broadcast %5 : vector<1x256xf32> to vector<256x256xf32>
    %7 = arith.addf %4, %6 : vector<256x256xf32>
    %cst_8 = arith.constant 0.000000e+00 : f32
    %8 = vector.broadcast %cst_8 : f32 to vector<256x256xf32>
    %9 = arith.cmpf ogt, %7, %8 : vector<256x256xf32>
    %10 = math.exp %7 : vector<256x256xf32>
    %cst_9 = arith.constant 1.000000e+00 : f32
    %11 = vector.broadcast %cst_9 : f32 to vector<256x256xf32>
    %12 = arith.subf %10, %11 : vector<256x256xf32>
    %cst_10 = arith.constant 1.67326319 : f32
    %13 = vector.broadcast %cst_10 : f32 to vector<256x256xf32>
    %14 = arith.mulf %13, %12 : vector<256x256xf32>
    %15 = arith.select %9, %7, %14 : vector<256x256xi1>, vector<256x256xf32>
    %cst_11 = arith.constant 1.05070102 : f32
    %16 = vector.broadcast %cst_11 : f32 to vector<256x256xf32>
    %17 = arith.mulf %16, %15 : vector<256x256xf32>
    %c0_12 = arith.constant 0 : index
    %c0_13 = arith.constant 0 : index
    %18 = vector.load %arg5[%c0_12, %c0_13] : memref<256x128xf32, #tpu.memory_space<vmem>>, vector<256x128xf32>
    %cst_14 = arith.constant dense<0.000000e+00> : vector<256x128xf32>
    %19 = tpu.matmul %17, %18, %cst_14 {dimension_numbers = #tpu.dot_dimension_numbers<[1], [0], [0], [1], [0, 0, 1, 1], [], []>} : vector<256x256xf32>, vector<256x128xf32>, vector<256x128xf32> -> vector<256x128xf32>
    %20 = arith.truncf %19 : vector<256x128xf32> to vector<256x128xbf16>
    %c0_15 = arith.constant 0 : index
    %c0_16 = arith.constant 0 : index
    %21 = vector.load %arg6[%c0_15, %c0_16] : memref<256x128xbf16, #tpu.memory_space<vmem>>, vector<256x128xbf16>
    tpu.vector_store %arg6[%c0_15, %c0_16], %20 {strides = array<i32>} : memref<256x128xbf16, #tpu.memory_space<vmem>>, vector<256x128xbf16>,
    return
  }
  func.func @transform_0(%arg0: i32) -> (i32, i32) {
    %c0_i32 = arith.constant 0 : i32
    %c0_i32_0 = arith.constant 0 : i32
    return %arg0, %c0_i32 : i32, i32
  }
  func.func @transform_1(%arg0: i32) -> (i32, i32) {
    %c0_i32 = arith.constant 0 : i32
    %c0_i32_0 = arith.constant 0 : i32
    %c0_i32_1 = arith.constant 0 : i32
    return %c0_i32, %c0_i32_0 : i32, i32
  }
  func.func @transform_2(%arg0: i32) -> (i32, i32) {
    %c0_i32 = arith.constant 0 : i32
    %c0_i32_0 = arith.constant 0 : i32
    %c0_i32_1 = arith.constant 0 : i32
    return %c0_i32, %c0_i32_0 : i32, i32
  }
  func.func @transform_3(%arg0: i32) -> (i32, i32) {
    %c0_i32 = arith.constant 0 : i32
    %c0_i32_0 = arith.constant 0 : i32
    %c0_i32_1 = arith.constant 0 : i32
    return %c0_i32, %c0_i32_0 : i32, i32
  }
  func.func @transform_4(%arg0: i32) -> (i32, i32) {
    %c0_i32 = arith.constant 0 : i32
    %c0_i32_0 = arith.constant 0 : i32
    %c0_i32_1 = arith.constant 0 : i32
    return %c0_i32, %c0_i32_0 : i32, i32
  }
  func.func @transform_5(%arg0: i32) -> (i32, i32) {
    %c0_i32 = arith.constant 0 : i32
    %c0_i32_0 = arith.constant 0 : i32
    return %arg0, %c0_i32 : i32, i32
  }
}

module attributes {stable_mosaic.version = 11 : i64} {
  func.func @layer3_kernel(%arg0: i32, %arg1: memref<256x512xbf16, #tpu.memory_space<vmem>>, %arg2: memref<512x128xbf16, #tpu.memory_space<vmem>>, %arg3: memref<1x128xf32, #tpu.memory_space<vmem>>, %arg4: memref<256x128xf32, #tpu.memory_space<vmem>>) attributes {dimension_semantics = [#tpu.dimension_semantics<parallel>], iteration_bounds = array<i64: 2>, scalar_prefetch = 0 : i64, scratch_operands = 0 : i64, tpu.core_type = #tpu.core_type<tc>, window_params = [{transform_indices = @transform_0, window_bounds = array<i64: 256, 512>}, {pipeline_mode = #tpu.pipeline_mode<synchronous>, transform_indices = @transform_1, window_bounds = array<i64: 512, 128>}, {pipeline_mode = #tpu.pipeline_mode<synchronous>, transform_indices = @transform_2, window_bounds = array<i64: 1, 128>}, {transform_indices = @transform_3, window_bounds = array<i64: 256, 128>}]} {
    %c0 = arith.constant 0 : index
    %c0_0 = arith.constant 0 : index
    %0 = vector.load %arg1[%c0, %c0_0] : memref<256x512xbf16, #tpu.memory_space<vmem>>, vector<256x512xbf16>
    %c0_1 = arith.constant 0 : index
    %c0_2 = arith.constant 0 : index
    %1 = vector.load %arg2[%c0_1, %c0_2] : memref<512x128xbf16, #tpu.memory_space<vmem>>, vector<512x128xbf16>
    %cst = arith.constant dense<0.000000e+00> : vector<256x128xf32>
    %2 = tpu.matmul %0, %1, %cst {dimension_numbers = #tpu.dot_dimension_numbers<[1], [0], [0], [1], [0, 0, 1, 1], [], []>} : vector<256x512xbf16>, vector<512x128xbf16>, vector<256x128xf32> -> vector<256x128xf32>
    %c0_3 = arith.constant 0 : index
    %c0_4 = arith.constant 0 : index
    %3 = vector.load %arg3[%c0_3, %c0_4] : memref<1x128xf32, #tpu.memory_space<vmem>>, vector<1x128xf32>
    %4 = vector.broadcast %3 : vector<1x128xf32> to vector<256x128xf32>
    %5 = arith.addf %2, %4 : vector<256x128xf32>
    %c0_5 = arith.constant 0 : index
    %c0_6 = arith.constant 0 : index
    %6 = vector.load %arg4[%c0_5, %c0_6] : memref<256x128xf32, #tpu.memory_space<vmem>>, vector<256x128xf32>
    tpu.vector_store %arg4[%c0_5, %c0_6], %5 {strides = array<i32>} : memref<256x128xf32, #tpu.memory_space<vmem>>, vector<256x128xf32>,
    return
  }
  func.func @transform_0(%arg0: i32) -> (i32, i32) {
    %c0_i32 = arith.constant 0 : i32
    %c0_i32_0 = arith.constant 0 : i32
    return %arg0, %c0_i32 : i32, i32
  }
  func.func @transform_1(%arg0: i32) -> (i32, i32) {
    %c0_i32 = arith.constant 0 : i32
    %c0_i32_0 = arith.constant 0 : i32
    %c0_i32_1 = arith.constant 0 : i32
    return %c0_i32, %c0_i32_0 : i32, i32
  }
  func.func @transform_2(%arg0: i32) -> (i32, i32) {
    %c0_i32 = arith.constant 0 : i32
    %c0_i32_0 = arith.constant 0 : i32
    %c0_i32_1 = arith.constant 0 : i32
    return %c0_i32, %c0_i32_0 : i32, i32
  }
  func.func @transform_3(%arg0: i32) -> (i32, i32) {
    %c0_i32 = arith.constant 0 : i32
    %c0_i32_0 = arith.constant 0 : i32
    return %arg0, %c0_i32 : i32, i32
  }
}

module attributes {stable_mosaic.version = 11 : i64} {
  func.func @layer2_kernel(%arg0: i32, %arg1: memref<256x512xbf16, #tpu.memory_space<vmem>>, %arg2: memref<512x128xbf16, #tpu.memory_space<vmem>>, %arg3: memref<128x128xf32, #tpu.memory_space<vmem>>, %arg4: memref<1x128xf32, #tpu.memory_space<vmem>>, %arg5: memref<256x128xbf16, #tpu.memory_space<vmem>>) attributes {dimension_semantics = [#tpu.dimension_semantics<parallel>], iteration_bounds = array<i64: 2>, scalar_prefetch = 0 : i64, scratch_operands = 0 : i64, tpu.core_type = #tpu.core_type<tc>, window_params = [{transform_indices = @transform_0, window_bounds = array<i64: 256, 512>}, {pipeline_mode = #tpu.pipeline_mode<synchronous>, transform_indices = @transform_1, window_bounds = array<i64: 512, 128>}, {pipeline_mode = #tpu.pipeline_mode<synchronous>, transform_indices = @transform_2, window_bounds = array<i64: 128, 128>}, {pipeline_mode = #tpu.pipeline_mode<synchronous>, transform_indices = @transform_3, window_bounds = array<i64: 1, 128>}, {transform_indices = @transform_4, window_bounds = array<i64: 256, 128>}]} {
    %c0 = arith.constant 0 : index
    %c0_0 = arith.constant 0 : index
    %0 = vector.load %arg1[%c0, %c0_0] : memref<256x512xbf16, #tpu.memory_space<vmem>>, vector<256x512xbf16>
    %c0_1 = arith.constant 0 : index
    %c0_2 = arith.constant 0 : index
    %1 = vector.load %arg2[%c0_1, %c0_2] : memref<512x128xbf16, #tpu.memory_space<vmem>>, vector<512x128xbf16>
    %cst = arith.constant dense<0.000000e+00> : vector<256x128xf32>
    %2 = tpu.matmul %0, %1, %cst {dimension_numbers = #tpu.dot_dimension_numbers<[1], [0], [0], [1], [0, 0, 1, 1], [], []>} : vector<256x512xbf16>, vector<512x128xbf16>, vector<256x128xf32> -> vector<256x128xf32>
    %c0_3 = arith.constant 0 : index
    %c0_4 = arith.constant 0 : index
    %3 = vector.load %arg4[%c0_3, %c0_4] : memref<1x128xf32, #tpu.memory_space<vmem>>, vector<1x128xf32>
    %4 = vector.broadcast %3 : vector<1x128xf32> to vector<256x128xf32>
    %5 = arith.addf %2, %4 : vector<256x128xf32>
    %cst_5 = arith.constant 0.000000e+00 : f32
    %6 = vector.broadcast %cst_5 : f32 to vector<256x128xf32>
    %7 = arith.cmpf ogt, %5, %6 : vector<256x128xf32>
    %8 = math.exp %5 : vector<256x128xf32>
    %cst_6 = arith.constant 1.000000e+00 : f32
    %9 = vector.broadcast %cst_6 : f32 to vector<256x128xf32>
    %10 = arith.subf %8, %9 : vector<256x128xf32>
    %cst_7 = arith.constant 1.67326319 : f32
    %11 = vector.broadcast %cst_7 : f32 to vector<256x128xf32>
    %12 = arith.mulf %11, %10 : vector<256x128xf32>
    %13 = arith.select %7, %5, %12 : vector<256x128xi1>, vector<256x128xf32>
    %cst_8 = arith.constant 1.05070102 : f32
    %14 = vector.broadcast %cst_8 : f32 to vector<256x128xf32>
    %15 = arith.mulf %14, %13 : vector<256x128xf32>
    %c0_9 = arith.constant 0 : index
    %c0_10 = arith.constant 0 : index
    %16 = vector.load %arg3[%c0_9, %c0_10] : memref<128x128xf32, #tpu.memory_space<vmem>>, vector<128x128xf32>
    %cst_11 = arith.constant dense<0.000000e+00> : vector<256x128xf32>
    %17 = tpu.matmul %15, %16, %cst_11 {dimension_numbers = #tpu.dot_dimension_numbers<[1], [0], [0], [1], [0, 0, 1, 1], [], []>} : vector<256x128xf32>, vector<128x128xf32>, vector<256x128xf32> -> vector<256x128xf32>
    %18 = arith.truncf %17 : vector<256x128xf32> to vector<256x128xbf16>
    %c0_12 = arith.constant 0 : index
    %c0_13 = arith.constant 0 : index
    %19 = vector.load %arg5[%c0_12, %c0_13] : memref<256x128xbf16, #tpu.memory_space<vmem>>, vector<256x128xbf16>
    tpu.vector_store %arg5[%c0_12, %c0_13], %18 {strides = array<i32>} : memref<256x128xbf16, #tpu.memory_space<vmem>>, vector<256x128xbf16>,
    return
  }
  func.func @transform_0(%arg0: i32) -> (i32, i32) {
    %c0_i32 = arith.constant 0 : i32
    %c0_i32_0 = arith.constant 0 : i32
    return %arg0, %c0_i32 : i32, i32
  }
  func.func @transform_1(%arg0: i32) -> (i32, i32) {
    %c0_i32 = arith.constant 0 : i32
    %c0_i32_0 = arith.constant 0 : i32
    %c0_i32_1 = arith.constant 0 : i32
    return %c0_i32, %c0_i32_0 : i32, i32
  }
  func.func @transform_2(%arg0: i32) -> (i32, i32) {
    %c0_i32 = arith.constant 0 : i32
    %c0_i32_0 = arith.constant 0 : i32
    %c0_i32_1 = arith.constant 0 : i32
    return %c0_i32, %c0_i32_0 : i32, i32
  }
  func.func @transform_3(%arg0: i32) -> (i32, i32) {
    %c0_i32 = arith.constant 0 : i32
    %c0_i32_0 = arith.constant 0 : i32
    %c0_i32_1 = arith.constant 0 : i32
    return %c0_i32, %c0_i32_0 : i32, i32
  }
  func.func @transform_4(%arg0: i32) -> (i32, i32) {
    %c0_i32 = arith.constant 0 : i32
    %c0_i32_0 = arith.constant 0 : i32
    return %arg0, %c0_i32 : i32, i32
  }
}

module attributes {stable_mosaic.version = 11 : i64} {
  func.func @epilogue_kernel(%arg0: i32, %arg1: memref<1x1xf32, #tpu.memory_space<smem>>, %arg2: memref<256x128xf32, #tpu.memory_space<vmem>>, %arg3: memref<256x128xf32, #tpu.memory_space<vmem>>) attributes {dimension_semantics = [#tpu.dimension_semantics<parallel>], iteration_bounds = array<i64: 2>, scalar_prefetch = 0 : i64, scratch_operands = 0 : i64, tpu.core_type = #tpu.core_type<tc>, window_params = [{transform_indices = @transform_0, window_bounds = array<i64: 1, 1>}, {transform_indices = @transform_1, window_bounds = array<i64: 256, 128>}, {transform_indices = @transform_2, window_bounds = array<i64: 256, 128>}]} {
    %c0 = arith.constant 0 : index
    %c0_0 = arith.constant 0 : index
    %0 = vector.load %arg2[%c0, %c0_0] : memref<256x128xf32, #tpu.memory_space<vmem>>, vector<256x128xf32>
    %c0_1 = arith.constant 0 : index
    %c0_2 = arith.constant 0 : index
    %1 = memref.load %arg1[%c0_1, %c0_2] : memref<1x1xf32, #tpu.memory_space<smem>>
    %2 = vector.broadcast %1 : f32 to vector<256x128xf32>
    %3 = arith.divf %0, %2 : vector<256x128xf32>
    %4 = math.tanh %3 : vector<256x128xf32>
    %5 = arith.mulf %4, %4 : vector<256x128xf32>
    %6 = arith.mulf %5, %5 : vector<256x128xf32>
    %cst = arith.constant dense<0.000000e+00> : vector<256xf32>
    %7 = vector.multi_reduction <add>, %6, %cst [1] : vector<256x128xf32> to vector<256xf32>
    %8 = vector.shape_cast %7 : vector<256xf32> to vector<256x1xf32>
    %cst_3 = arith.constant 1.000000e-24 : f32
    %9 = vector.broadcast %cst_3 : f32 to vector<256x1xf32>
    %10 = arith.maximumf %8, %9 : vector<256x1xf32>
    %11 = math.rsqrt %10 : vector<256x1xf32>
    %12 = vector.broadcast %11 : vector<256x1xf32> to vector<256x128xf32>
    %13 = arith.mulf %5, %12 : vector<256x128xf32>
    %c0_4 = arith.constant 0 : index
    %c0_5 = arith.constant 0 : index
    %14 = vector.load %arg3[%c0_4, %c0_5] : memref<256x128xf32, #tpu.memory_space<vmem>>, vector<256x128xf32>
    tpu.vector_store %arg3[%c0_4, %c0_5], %13 {strides = array<i32>} : memref<256x128xf32, #tpu.memory_space<vmem>>, vector<256x128xf32>,
    return
  }
  func.func @transform_0(%arg0: i32) -> (i32, i32) {
    %c0_i32 = arith.constant 0 : i32
    %c0_i32_0 = arith.constant 0 : i32
    %c0_i32_1 = arith.constant 0 : i32
    return %c0_i32, %c0_i32_0 : i32, i32
  }
  func.func @transform_1(%arg0: i32) -> (i32, i32) {
    %c0_i32 = arith.constant 0 : i32
    %c0_i32_0 = arith.constant 0 : i32
    return %arg0, %c0_i32 : i32, i32
  }
  func.func @transform_2(%arg0: i32) -> (i32, i32) {
    %c0_i32 = arith.constant 0 : i32
    %c0_i32_0 = arith.constant 0 : i32
    return %arg0, %c0_i32 : i32, i32
  }
}

</mosaic_0001>

<llo_original>
// kernel: gnn_forward.6
$region0: #{gnn_forward.6}
  #allocation0 [shape = 'u32[]', space=smem, size = 0x4, offset = 0x4, fixed_abs, tag = 'smem constant byte address 0x4 - core index']
  #allocation1 [shape = 'u32[144,128]{1,0:T(1,128)}', space=vmem, size = 0x12000, scoped, tag = 'internal scratch']
  %s0 = inlined_call_operand.vmem [shape: bf16[512,512], index: 0, kind: input, shape index: {}]
  %s1 = inlined_call_operand.vmem [shape: bf16[512,128], index: 1, kind: input, shape index: {}]
  %s2 = inlined_call_operand.vmem [shape: f32[1,128], index: 2, kind: input, shape index: {}]
  %s3 = inlined_call_operand.vmem [shape: f32[512,128], index: 3, kind: output, shape index: {}]
  %s4 = sld [smem:[#allocation0]]
  $region45: #{gnn_forward.6} parent=0
    _
  %s6 = ssub.s32 1, %s4
  %s7 = scalar_select 0, %s6, %s4
  loop: start=0, step=1, limit=4
  $region2: #{gnn_forward.6} parent=0 // loop_pre_header
    _
  $region3: #{gnn_forward.6} parent=0 // loop_header
    %s9 = sphi 0, %s13
    %p10 = scmp.ge.s32.totalorder %s9, 4
    %s19 = sphi 0, %s21
    %s22 = sphi 0, %s19
    %s23 = sphi 0, %s22
    %s39 = sphi 0, %s23
    %s43 = sphi 0, %s43
    %s45 = sphi 0, %s43
    %s46 = sphi 0, %s45
    %s60 = sphi 0, %s46
    %s64 = sphi 0, %s64
    %s66 = sphi 0, %s64
    %s67 = sphi 0, %s66
    %s81 = sphi 0, %s67
    %s87 = sphi 0, %s89
    %s90 = sphi 0, %s87
    %s91 = sphi 0, %s90
    %s107 = sphi 0, %s91
  $region4: #{gnn_forward.6} parent=0 // loop_header_branch
    %12 = sbr.rel (%p10) target = $region8
  $region5: #{gnn_forward.6} parent=0 // loop_body
    %s14 = ssub.s32 %s9, 1
    %s15 = ssub.s32 %s9, 2
    %s16 = sadd.s32 %s9, 1
    %s17 = ssub.s32 %s9, %s16
    %p18 = scmp.eq.s32.totalorder %s17, 0
    %s20 = sadd.s32 %s19, 1
    %s21 = scalar_select %p18, %s19, %s20
    %p24 = pneg %p18
    %p25 = scmp.eq.s32.totalorder %s9, 1
    %p26 = por %p24, %p25
    %p27 = scmp.ne.s32.totalorder %s19, %s22
    %p28 = scmp.eq.s32.totalorder %s9, 0
    %p29 = por %p27, %p28
    %p30 = scmp.ne.s32.totalorder %s19, %s22
    %p31 = scmp.eq.s32.totalorder %s14, 1
    %p32 = por %p30, %p31
    %p33 = scmp.ne.s32.totalorder %s22, %s23
    %p34 = scmp.eq.s32.totalorder %s14, 0
    %p35 = por %p33, %p34
    %p36 = scmp.ne.s32.totalorder %s22, %s23
    %p37 = scmp.eq.s32.totalorder %s15, 1
    %p38 = por %p36, %p37
    %p40 = scmp.ne.s32.totalorder %s23, %s39
    %p41 = scmp.eq.s32.totalorder %s15, 0
    %p42 = por %p40, %p41
    %s44 = sadd.s32 %s43, 1
    %p47 = scmp.eq.s32.totalorder %s9, 1
    %p48 = scmp.ne.s32.totalorder %s43, %s45
    %p49 = scmp.eq.s32.totalorder %s9, 0
    %p50 = por %p48, %p49
    %p51 = scmp.ne.s32.totalorder %s43, %s45
    %p52 = scmp.eq.s32.totalorder %s14, 1
    %p53 = por %p51, %p52
    %p54 = scmp.ne.s32.totalorder %s45, %s46
    %p55 = scmp.eq.s32.totalorder %s14, 0
    %p56 = por %p54, %p55
    %p57 = scmp.ne.s32.totalorder %s45, %s46
    %p58 = scmp.eq.s32.totalorder %s15, 1
    %p59 = por %p57, %p58
    %p61 = scmp.ne.s32.totalorder %s46, %s60
    %p62 = scmp.eq.s32.totalorder %s15, 0
    %p63 = por %p61, %p62
    %s65 = sadd.s32 %s64, 1
    %p68 = scmp.eq.s32.totalorder %s9, 1
    %p69 = scmp.ne.s32.totalorder %s64, %s66
    %p70 = scmp.eq.s32.totalorder %s9, 0
    %p71 = por %p69, %p70
    %p72 = scmp.ne.s32.totalorder %s64, %s66
    %p73 = scmp.eq.s32.totalorder %s14, 1
    %p74 = por %p72, %p73
    %p75 = scmp.ne.s32.totalorder %s66, %s67
    %p76 = scmp.eq.s32.totalorder %s14, 0
    %p77 = por %p75, %p76
    %p78 = scmp.ne.s32.totalorder %s66, %s67
    %p79 = scmp.eq.s32.totalorder %s15, 1
    %p80 = por %p78, %p79
    %p82 = scmp.ne.s32.totalorder %s67, %s81
    %p83 = scmp.eq.s32.totalorder %s15, 0
    %p84 = por %p82, %p83
    %s85 = ssub.s32 %s9, %s16
    %p86 = scmp.eq.s32.totalorder %s85, 0
    %s88 = sadd.s32 %s87, 1
    %s89 = scalar_select %p86, %s87, %s88
    %p92 = pneg %p86
    %p93 = scmp.eq.s32.totalorder %s9, 1
    %p94 = por %p92, %p93
    %p95 = scmp.ne.s32.totalorder %s87, %s90
    %p96 = scmp.eq.s32.totalorder %s9, 0
    %p97 = por %p95, %p96
    %p98 = scmp.ne.s32.totalorder %s87, %s90
    %p99 = scmp.eq.s32.totalorder %s14, 1
    %p100 = por %p98, %p99
    %p101 = scmp.ne.s32.totalorder %s90, %s91
    %p102 = scmp.eq.s32.totalorder %s14, 0
    %p103 = por %p101, %p102
    %p104 = scmp.ne.s32.totalorder %s90, %s91
    %p105 = scmp.eq.s32.totalorder %s15, 1
    %p106 = por %p104, %p105
    %p108 = scmp.ne.s32.totalorder %s91, %s107
    %p109 = scmp.eq.s32.totalorder %s15, 0
    %p110 = por %p108, %p109
    %p111 = scmp.le.s32.totalorder 1, %s9
    %p112 = scmp.lt.s32.totalorder %s9, 3
    %p113 = pnand %p111, %p112
    %p114 = pneg %p113
    // Predicated region
    $region9: #{gnn_forward.6} parent=5 // pred_check
      _
    $region10: #{gnn_forward.6} parent=5 // pred_check_branch
      %116 = sbr.rel (%p113) target = $region12
    $region11: #{gnn_forward.6} parent=5 // pred_region
      %s117 = ssub.s32 %s9, 1
      // Predicated region
      $region13: #{gnn_forward.6} parent=11 // pred_check
        %p118 = pneg %p56
      $region14: #{gnn_forward.6} parent=11 // pred_check_branch
        %120 = sbr.rel (%p118) target = $region16
      $region15: #{gnn_forward.6} parent=11 // pred_region
        _
      $region16: #{gnn_forward.6} parent=11 // pred_fallthru
        _
      // Predicated region
      $region17: #{gnn_forward.6} parent=11 // pred_check
        %p121 = pneg %p77
      $region18: #{gnn_forward.6} parent=11 // pred_check_branch
        %123 = sbr.rel (%p121) target = $region20
      $region19: #{gnn_forward.6} parent=11 // pred_region
        _
      $region20: #{gnn_forward.6} parent=11 // pred_fallthru
        _
    $region12: #{gnn_forward.6} parent=5 // pred_fallthru
      _
    %p124 = scmp.lt.s32.totalorder %s9, 2
    // Predicated region
    $region21: #{gnn_forward.6} parent=5 // pred_check
      %p125 = pneg %p124
    $region22: #{gnn_forward.6} parent=5 // pred_check_branch
      %127 = sbr.rel (%p125) target = $region24
    $region23: #{gnn_forward.6} parent=5 // pred_region
      // Predicated region
      $region25: #{gnn_forward.6} parent=23 // pred_check
        %p128 = pneg %p29
      $region26: #{gnn_forward.6} parent=23 // pred_check_branch
        %130 = sbr.rel (%p128) target = $region28
      $region27: #{gnn_forward.6} parent=23 // pred_region
        %s131 = smul.u32 32, %s9
        %p132 = scmp.lt.s32.totalorder %s131, 63
        %s133 = scalar_select %p132, %s131, 63
        %s134 = smul.addr %s133, 4
        %s135 = smul.addr %s134, 4
        %s136 = scalar_lea.vmem %s0, %s135
        %s137 = smul.u32 32, %s9
      $region28: #{gnn_forward.6} parent=23 // pred_fallthru
        _
    $region24: #{gnn_forward.6} parent=5 // pred_fallthru
      _
    %p138 = scmp.le.s32.totalorder 1, %s9
    %p139 = scmp.lt.s32.totalorder %s9, 3
    %p140 = pnand %p138, %p139
    %p141 = pneg %p140
    // Predicated region
    $region29: #{gnn_forward.6} parent=5 // pred_check
      _
    $region30: #{gnn_forward.6} parent=5 // pred_check_branch
      %143 = sbr.rel (%p140) target = $region32
    $region31: #{gnn_forward.6} parent=5 // pred_region
      %s144 = ssub.s32 %s9, 1
      %s145 = smul.u32 32, %s14
      %p146 = scmp.lt.s32.totalorder %s145, 63
      %s147 = scalar_select %p146, %s145, 63
      %s148 = smul.addr %s147, 4
      %s149 = smul.addr %s148, 4
      %s150 = scalar_lea.vmem %s0, %s149
      %p151 = pneg %p35
      %p152 = pneg %p32
      %p153 = pneg %p56
      %p154 = pneg %p53
      %p155 = pneg %p77
      %p156 = pneg %p74
      %p157 = pneg %p103
      %p158 = pneg %p100
      %s159 = smul.u32 32, %s14
      %p160 = scmp.lt.s32.totalorder %s159, 63
      %s161 = scalar_select %p160, %s159, 63
      %s162 = smul.addr %s161, 8
      %s163 = scalar_lea.vmem %s3, %s162
      %s164 = smul.u32 32, %s14
      %p165 = scmp.lt.s32.totalorder %s164, 63
      %s166 = scalar_select %p165, %s164, 63
      %s167 = smul.addr %s166, 4
      %s168 = smul.addr %s167, 4
      %s169 = scalar_lea.vmem %s0, %s168
      %s170 = smul.u32 32, %s14
      %s171 = smul.u32 32, %s14
      %p172 = scmp.lt.s32.totalorder %s171, 63
      %s173 = scalar_select %p172, %s171, 63
      %s174 = smul.addr %s173, 8
      %s175 = scalar_lea.vmem %s3, %s174
      %s176 = smul.u32 32, %s14
      %v178 = vld [vmem:[%s169] sm:$0xff]
      %v179 = vld [vmem:[%s169 + $0x8] sm:$0xff]
      %v180 = vld [vmem:[%s169 + $0x10] sm:$0xff]
      %v181 = vld [vmem:[%s169 + $0x18] sm:$0xff]
      %v182 = vld [vmem:[%s169 + $0x20] sm:$0xff]
      %v183 = vld [vmem:[%s169 + $0x28] sm:$0xff]
      %v184 = vld [vmem:[%s169 + $0x30] sm:$0xff]
      %v185 = vld [vmem:[%s169 + $0x38] sm:$0xff]
      %v186 = vld [vmem:[%s169 + $0x40] sm:$0xff]
      %v187 = vld [vmem:[%s169 + $0x48] sm:$0xff]
      %v188 = vld [vmem:[%s169 + $0x50] sm:$0xff]
      %v189 = vld [vmem:[%s169 + $0x58] sm:$0xff]
      %v190 = vld [vmem:[%s169 + $0x60] sm:$0xff]
      %v191 = vld [vmem:[%s169 + $0x68] sm:$0xff]
      %v192 = vld [vmem:[%s169 + $0x70] sm:$0xff]
      %v193 = vld [vmem:[%s169 + $0x78] sm:$0xff]
      %v194 = vld [vmem:[%s169 + $0x80] sm:$0xff]
      %v195 = vld [vmem:[%s169 + $0x88] sm:$0xff]
      %v196 = vld [vmem:[%s169 + $0x90] sm:$0xff]
      %v197 = vld [vmem:[%s169 + $0x98] sm:$0xff]
      %v198 = vld [vmem:[%s169 + $0xa0] sm:$0xff]
      %v199 = vld [vmem:[%s169 + $0xa8] sm:$0xff]
      %v200 = vld [vmem:[%s169 + $0xb0] sm:$0xff]
      %v201 = vld [vmem:[%s169 + $0xb8] sm:$0xff]
      %v202 = vld [vmem:[%s169 + $0xc0] sm:$0xff]
      %v203 = vld [vmem:[%s169 + $0xc8] sm:$0xff]
      %v204 = vld [vmem:[%s169 + $0xd0] sm:$0xff]
      %v205 = vld [vmem:[%s169 + $0xd8] sm:$0xff]
      %v206 = vld [vmem:[%s169 + $0xe0] sm:$0xff]
      %v207 = vld [vmem:[%s169 + $0xe8] sm:$0xff]
      %v208 = vld [vmem:[%s169 + $0xf0] sm:$0xff]
      %v209 = vld [vmem:[%s169 + $0xf8] sm:$0xff]
      %v210 = vld [vmem:[%s169 + $0x100] sm:$0xff]
      %v211 = vld [vmem:[%s169 + $0x108] sm:$0xff]
      %v212 = vld [vmem:[%s169 + $0x110] sm:$0xff]
      %v213 = vld [vmem:[%s169 + $0x118] sm:$0xff]
      %v214 = vld [vmem:[%s169 + $0x120] sm:$0xff]
      %v215 = vld [vmem:[%s169 + $0x128] sm:$0xff]
      %v216 = vld [vmem:[%s169 + $0x130] sm:$0xff]
      %v217 = vld [vmem:[%s169 + $0x138] sm:$0xff]
      %v218 = vld [vmem:[%s169 + $0x140] sm:$0xff]
      %v219 = vld [vmem:[%s169 + $0x148] sm:$0xff]
      %v220 = vld [vmem:[%s169 + $0x150] sm:$0xff]
      %v221 = vld [vmem:[%s169 + $0x158] sm:$0xff]
      %v222 = vld [vmem:[%s169 + $0x160] sm:$0xff]
      %v223 = vld [vmem:[%s169 + $0x168] sm:$0xff]
      %v224 = vld [vmem:[%s169 + $0x170] sm:$0xff]
      %v225 = vld [vmem:[%s169 + $0x178] sm:$0xff]
      %v226 = vld [vmem:[%s169 + $0x180] sm:$0xff]
      %v227 = vld [vmem:[%s169 + $0x188] sm:$0xff]
      %v228 = vld [vmem:[%s169 + $0x190] sm:$0xff]
      %v229 = vld [vmem:[%s169 + $0x198] sm:$0xff]
      %v230 = vld [vmem:[%s169 + $0x1a0] sm:$0xff]
      %v231 = vld [vmem:[%s169 + $0x1a8] sm:$0xff]
      %v232 = vld [vmem:[%s169 + $0x1b0] sm:$0xff]
      %v233 = vld [vmem:[%s169 + $0x1b8] sm:$0xff]
      %v234 = vld [vmem:[%s169 + $0x1c0] sm:$0xff]
      %v235 = vld [vmem:[%s169 + $0x1c8] sm:$0xff]
      %v236 = vld [vmem:[%s169 + $0x1d0] sm:$0xff]
      %v237 = vld [vmem:[%s169 + $0x1d8] sm:$0xff]
      %v238 = vld [vmem:[%s169 + $0x1e0] sm:$0xff]
      %v239 = vld [vmem:[%s169 + $0x1e8] sm:$0xff]
      %v240 = vld [vmem:[%s169 + $0x1f0] sm:$0xff]
      %v241 = vld [vmem:[%s169 + $0x1f8] sm:$0xff]
      %v242 = vld [vmem:[%s1] sm:$0xf]
      %v243 = vld [vmem:[%s1 + $0x4] sm:$0xf]
      %v244 = vld [vmem:[%s1 + $0x8] sm:$0xf]
      %v245 = vld [vmem:[%s1 + $0xc] sm:$0xf]
      %v246 = vld [vmem:[%s1 + $0x10] sm:$0xf]
      %v247 = vld [vmem:[%s1 + $0x14] sm:$0xf]
      %v248 = vld [vmem:[%s1 + $0x18] sm:$0xf]
      %v249 = vld [vmem:[%s1 + $0x1c] sm:$0xf]
      %v250 = vld [vmem:[%s1 + $0x20] sm:$0xf]
      %v251 = vld [vmem:[%s1 + $0x24] sm:$0xf]
      %v252 = vld [vmem:[%s1 + $0x28] sm:$0xf]
      %v253 = vld [vmem:[%s1 + $0x2c] sm:$0xf]
      %v254 = vld [vmem:[%s1 + $0x30] sm:$0xf]
      %v255 = vld [vmem:[%s1 + $0x34] sm:$0xf]
      %v256 = vld [vmem:[%s1 + $0x38] sm:$0xf]
      %v257 = vld [vmem:[%s1 + $0x3c] sm:$0xf]
      %v258 = vld [vmem:[%s1 + $0x40] sm:$0xf]
      %v259 = vld [vmem:[%s1 + $0x44] sm:$0xf]
      %v260 = vld [vmem:[%s1 + $0x48] sm:$0xf]
      %v261 = vld [vmem:[%s1 + $0x4c] sm:$0xf]
      %v262 = vld [vmem:[%s1 + $0x50] sm:$0xf]
      %v263 = vld [vmem:[%s1 + $0x54] sm:$0xf]
      %v264 = vld [vmem:[%s1 + $0x58] sm:$0xf]
      %v265 = vld [vmem:[%s1 + $0x5c] sm:$0xf]
      %v266 = vld [vmem:[%s1 + $0x60] sm:$0xf]
      %v267 = vld [vmem:[%s1 + $0x64] sm:$0xf]
      %v268 = vld [vmem:[%s1 + $0x68] sm:$0xf]
      %v269 = vld [vmem:[%s1 + $0x6c] sm:$0xf]
      %v270 = vld [vmem:[%s1 + $0x70] sm:$0xf]
      %v271 = vld [vmem:[%s1 + $0x74] sm:$0xf]
      %v272 = vld [vmem:[%s1 + $0x78] sm:$0xf]
      %v273 = vld [vmem:[%s1 + $0x7c] sm:$0xf]
      %v274 = vld [vmem:[%s1 + $0x80] sm:$0xf]
      %v275 = vld [vmem:[%s1 + $0x84] sm:$0xf]
      %v276 = vld [vmem:[%s1 + $0x88] sm:$0xf]
      %v277 = vld [vmem:[%s1 + $0x8c] sm:$0xf]
      %v278 = vld [vmem:[%s1 + $0x90] sm:$0xf]
      %v279 = vld [vmem:[%s1 + $0x94] sm:$0xf]
      %v280 = vld [vmem:[%s1 + $0x98] sm:$0xf]
      %v281 = vld [vmem:[%s1 + $0x9c] sm:$0xf]
      %v282 = vld [vmem:[%s1 + $0xa0] sm:$0xf]
      %v283 = vld [vmem:[%s1 + $0xa4] sm:$0xf]
      %v284 = vld [vmem:[%s1 + $0xa8] sm:$0xf]
      %v285 = vld [vmem:[%s1 + $0xac] sm:$0xf]
      %v286 = vld [vmem:[%s1 + $0xb0] sm:$0xf]
      %v287 = vld [vmem:[%s1 + $0xb4] sm:$0xf]
      %v288 = vld [vmem:[%s1 + $0xb8] sm:$0xf]
      %v289 = vld [vmem:[%s1 + $0xbc] sm:$0xf]
      %v290 = vld [vmem:[%s1 + $0xc0] sm:$0xf]
      %v291 = vld [vmem:[%s1 + $0xc4] sm:$0xf]
      %v292 = vld [vmem:[%s1 + $0xc8] sm:$0xf]
      %v293 = vld [vmem:[%s1 + $0xcc] sm:$0xf]
      %v294 = vld [vmem:[%s1 + $0xd0] sm:$0xf]
      %v295 = vld [vmem:[%s1 + $0xd4] sm:$0xf]
      %v296 = vld [vmem:[%s1 + $0xd8] sm:$0xf]
      %v297 = vld [vmem:[%s1 + $0xdc] sm:$0xf]
      %v298 = vld [vmem:[%s1 + $0xe0] sm:$0xf]
      %v299 = vld [vmem:[%s1 + $0xe4] sm:$0xf]
      %v300 = vld [vmem:[%s1 + $0xe8] sm:$0xf]
      %v301 = vld [vmem:[%s1 + $0xec] sm:$0xf]
      %v302 = vld [vmem:[%s1 + $0xf0] sm:$0xf]
      %v303 = vld [vmem:[%s1 + $0xf4] sm:$0xf]
      %v304 = vld [vmem:[%s1 + $0xf8] sm:$0xf]
      %v305 = vld [vmem:[%s1 + $0xfc] sm:$0xf]
      %v306 = vld [vmem:[%s2] sm:$0x1]
      %v308 = vlaneseq
      %v309 = vshrl.u32 %v308, 7
      %v310 = vsub.s32 0, %v309
      %v311 = vrot.slane %v306, %v310
      %v377 = vunpack.c.l.b16 %v178
      %v378 = vunpack.c.h.b16 %v178
      %v379 = vunpack.c.l.b16 %v179
      %v380 = vunpack.c.h.b16 %v179
      %v381 = vunpack.c.l.b16 %v180
      %v382 = vunpack.c.h.b16 %v180
      %v383 = vunpack.c.l.b16 %v181
      %v384 = vunpack.c.h.b16 %v181
      %v385 = vunpack.c.l.b16 %v182
      %v386 = vunpack.c.h.b16 %v182
      %v387 = vunpack.c.l.b16 %v183
      %v388 = vunpack.c.h.b16 %v183
      %v389 = vunpack.c.l.b16 %v184
      %v390 = vunpack.c.h.b16 %v184
      %v391 = vunpack.c.l.b16 %v185
      %v392 = vunpack.c.h.b16 %v185
      %v393 = vunpack.c.l.b16 %v186
      %v394 = vunpack.c.h.b16 %v186
      %v395 = vunpack.c.l.b16 %v187
      %v396 = vunpack.c.h.b16 %v187
      %v397 = vunpack.c.l.b16 %v188
      %v398 = vunpack.c.h.b16 %v188
      %v399 = vunpack.c.l.b16 %v189
      %v400 = vunpack.c.h.b16 %v189
      %v401 = vunpack.c.l.b16 %v190
      %v402 = vunpack.c.h.b16 %v190
      %v403 = vunpack.c.l.b16 %v191
      %v404 = vunpack.c.h.b16 %v191
      %v405 = vunpack.c.l.b16 %v192
      %v406 = vunpack.c.h.b16 %v192
      %v407 = vunpack.c.l.b16 %v193
      %v408 = vunpack.c.h.b16 %v193
      %v409 = vunpack.c.l.b16 %v194
      %v410 = vunpack.c.h.b16 %v194
      %v411 = vunpack.c.l.b16 %v195
      %v412 = vunpack.c.h.b16 %v195
      %v413 = vunpack.c.l.b16 %v196
      %v414 = vunpack.c.h.b16 %v196
      %v415 = vunpack.c.l.b16 %v197
      %v416 = vunpack.c.h.b16 %v197
      %v417 = vunpack.c.l.b16 %v198
      %v418 = vunpack.c.h.b16 %v198
      %v419 = vunpack.c.l.b16 %v199
      %v420 = vunpack.c.h.b16 %v199
      %v421 = vunpack.c.l.b16 %v200
      %v422 = vunpack.c.h.b16 %v200
      %v423 = vunpack.c.l.b16 %v201
      %v424 = vunpack.c.h.b16 %v201
      %v425 = vunpack.c.l.b16 %v202
      %v426 = vunpack.c.h.b16 %v202
      %v427 = vunpack.c.l.b16 %v203
      %v428 = vunpack.c.h.b16 %v203
      %v429 = vunpack.c.l.b16 %v204
      %v430 = vunpack.c.h.b16 %v204
      %v431 = vunpack.c.l.b16 %v205
      %v432 = vunpack.c.h.b16 %v205
      %v433 = vunpack.c.l.b16 %v206
      %v434 = vunpack.c.h.b16 %v206
      %v435 = vunpack.c.l.b16 %v207
      %v436 = vunpack.c.h.b16 %v207
      %v437 = vunpack.c.l.b16 %v208
      %v438 = vunpack.c.h.b16 %v208
      %v439 = vunpack.c.l.b16 %v209
      %v440 = vunpack.c.h.b16 %v209
      %v441 = vunpack.c.l.b16 %v210
      %v442 = vunpack.c.h.b16 %v210
      %v443 = vunpack.c.l.b16 %v211
      %v444 = vunpack.c.h.b16 %v211
      %v445 = vunpack.c.l.b16 %v212
      %v446 = vunpack.c.h.b16 %v212
      %v447 = vunpack.c.l.b16 %v213
      %v448 = vunpack.c.h.b16 %v213
      %v449 = vunpack.c.l.b16 %v214
      %v450 = vunpack.c.h.b16 %v214
      %v451 = vunpack.c.l.b16 %v215
      %v452 = vunpack.c.h.b16 %v215
      %v453 = vunpack.c.l.b16 %v216
      %v454 = vunpack.c.h.b16 %v216
      %v455 = vunpack.c.l.b16 %v217
      %v456 = vunpack.c.h.b16 %v217
      %v457 = vunpack.c.l.b16 %v218
      %v458 = vunpack.c.h.b16 %v218
      %v459 = vunpack.c.l.b16 %v219
      %v460 = vunpack.c.h.b16 %v219
      %v461 = vunpack.c.l.b16 %v220
      %v462 = vunpack.c.h.b16 %v220
      %v463 = vunpack.c.l.b16 %v221
      %v464 = vunpack.c.h.b16 %v221
      %v465 = vunpack.c.l.b16 %v222
      %v466 = vunpack.c.h.b16 %v222
      %v467 = vunpack.c.l.b16 %v223
      %v468 = vunpack.c.h.b16 %v223
      %v469 = vunpack.c.l.b16 %v224
      %v470 = vunpack.c.h.b16 %v224
      %v471 = vunpack.c.l.b16 %v225
      %v472 = vunpack.c.h.b16 %v225
      %v473 = vunpack.c.l.b16 %v226
      %v474 = vunpack.c.h.b16 %v226
      %v475 = vunpack.c.l.b16 %v227
      %v476 = vunpack.c.h.b16 %v227
      %v477 = vunpack.c.l.b16 %v228
      %v478 = vunpack.c.h.b16 %v228
      %v479 = vunpack.c.l.b16 %v229
      %v480 = vunpack.c.h.b16 %v229
      %v481 = vunpack.c.l.b16 %v230
      %v482 = vunpack.c.h.b16 %v230
      %v483 = vunpack.c.l.b16 %v231
      %v484 = vunpack.c.h.b16 %v231
      %v485 = vunpack.c.l.b16 %v232
      %v486 = vunpack.c.h.b16 %v232
      %v487 = vunpack.c.l.b16 %v233
      %v488 = vunpack.c.h.b16 %v233
      %v489 = vunpack.c.l.b16 %v234
      %v490 = vunpack.c.h.b16 %v234
      %v491 = vunpack.c.l.b16 %v235
      %v492 = vunpack.c.h.b16 %v235
      %v493 = vunpack.c.l.b16 %v236
      %v494 = vunpack.c.h.b16 %v236
      %v495 = vunpack.c.l.b16 %v237
      %v496 = vunpack.c.h.b16 %v237
      %v497 = vunpack.c.l.b16 %v238
      %v498 = vunpack.c.h.b16 %v238
      %v499 = vunpack.c.l.b16 %v239
      %v500 = vunpack.c.h.b16 %v239
      %v501 = vunpack.c.l.b16 %v240
      %v502 = vunpack.c.h.b16 %v240
      %v503 = vunpack.c.l.b16 %v241
      %v504 = vunpack.c.h.b16 %v241
      %v505 = vpack.c.b16 %v381, %v377
      %v506 = vpack.c.b16 %v382, %v378
      %v507 = vpack.c.b16 %v383, %v379
      %v508 = vpack.c.b16 %v384, %v380
      %v509 = vpack.c.b16 %v389, %v385
      %v510 = vpack.c.b16 %v390, %v386
      %v511 = vpack.c.b16 %v391, %v387
      %v512 = vpack.c.b16 %v392, %v388
      %v513 = vpack.c.b16 %v397, %v393
      %v514 = vpack.c.b16 %v398, %v394
      %v515 = vpack.c.b16 %v399, %v395
      %v516 = vpack.c.b16 %v400, %v396
      %v517 = vpack.c.b16 %v405, %v401
      %v518 = vpack.c.b16 %v406, %v402
      %v519 = vpack.c.b16 %v407, %v403
      %v520 = vpack.c.b16 %v408, %v404
      %v521 = vpack.c.b16 %v413, %v409
      %v522 = vpack.c.b16 %v414, %v410
      %v523 = vpack.c.b16 %v415, %v411
      %v524 = vpack.c.b16 %v416, %v412
      %v525 = vpack.c.b16 %v421, %v417
      %v526 = vpack.c.b16 %v422, %v418
      %v527 = vpack.c.b16 %v423, %v419
      %v528 = vpack.c.b16 %v424, %v420
      %v529 = vpack.c.b16 %v429, %v425
      %v530 = vpack.c.b16 %v430, %v426
      %v531 = vpack.c.b16 %v431, %v427
      %v532 = vpack.c.b16 %v432, %v428
      %v533 = vpack.c.b16 %v437, %v433
      %v534 = vpack.c.b16 %v438, %v434
      %v535 = vpack.c.b16 %v439, %v435
      %v536 = vpack.c.b16 %v440, %v436
      %v537 = vpack.c.b16 %v445, %v441
      %v538 = vpack.c.b16 %v446, %v442
      %v539 = vpack.c.b16 %v447, %v443
      %v540 = vpack.c.b16 %v448, %v444
      %v541 = vpack.c.b16 %v453, %v449
      %v542 = vpack.c.b16 %v454, %v450
      %v543 = vpack.c.b16 %v455, %v451
      %v544 = vpack.c.b16 %v456, %v452
      %v545 = vpack.c.b16 %v461, %v457
      %v546 = vpack.c.b16 %v462, %v458
      %v547 = vpack.c.b16 %v463, %v459
      %v548 = vpack.c.b16 %v464, %v460
      %v549 = vpack.c.b16 %v469, %v465
      %v550 = vpack.c.b16 %v470, %v466
      %v551 = vpack.c.b16 %v471, %v467
      %v552 = vpack.c.b16 %v472, %v468
      %v553 = vpack.c.b16 %v477, %v473
      %v554 = vpack.c.b16 %v478, %v474
      %v555 = vpack.c.b16 %v479, %v475
      %v556 = vpack.c.b16 %v480, %v476
      %v557 = vpack.c.b16 %v485, %v481
      %v558 = vpack.c.b16 %v486, %v482
      %v559 = vpack.c.b16 %v487, %v483
      %v560 = vpack.c.b16 %v488, %v484
      %v561 = vpack.c.b16 %v493, %v489
      %v562 = vpack.c.b16 %v494, %v490
      %v563 = vpack.c.b16 %v495, %v491
      %v564 = vpack.c.b16 %v496, %v492
      %v565 = vpack.c.b16 %v501, %v497
      %v566 = vpack.c.b16 %v502, %v498
      %v567 = vpack.c.b16 %v503, %v499
      %v568 = vpack.c.b16 %v504, %v500
      %v697 = vunpack.c.l.b16 %v242
      %v698 = vunpack.c.l.b16 %v243
      %v699 = vunpack.c.l.b16 %v244
      %v700 = vunpack.c.l.b16 %v245
      %v701 = vunpack.c.l.b16 %v246
      %v702 = vunpack.c.l.b16 %v247
      %v703 = vunpack.c.l.b16 %v248
      %v704 = vunpack.c.l.b16 %v249
      %v705 = vunpack.c.l.b16 %v250
      %v706 = vunpack.c.l.b16 %v251
      %v707 = vunpack.c.l.b16 %v252
      %v708 = vunpack.c.l.b16 %v253
      %v709 = vunpack.c.l.b16 %v254
      %v710 = vunpack.c.l.b16 %v255
      %v711 = vunpack.c.l.b16 %v256
      %v712 = vunpack.c.l.b16 %v257
      %v713 = vunpack.c.l.b16 %v258
      %v714 = vunpack.c.l.b16 %v259
      %v715 = vunpack.c.l.b16 %v260
      %v716 = vunpack.c.l.b16 %v261
      %v717 = vunpack.c.l.b16 %v262
      %v718 = vunpack.c.l.b16 %v263
      %v719 = vunpack.c.l.b16 %v264
      %v720 = vunpack.c.l.b16 %v265
      %v721 = vunpack.c.l.b16 %v266
      %v722 = vunpack.c.l.b16 %v267
      %v723 = vunpack.c.l.b16 %v268
      %v724 = vunpack.c.l.b16 %v269
      %v725 = vunpack.c.l.b16 %v270
      %v726 = vunpack.c.l.b16 %v271
      %v727 = vunpack.c.l.b16 %v272
      %v728 = vunpack.c.l.b16 %v273
      %v729 = vunpack.c.l.b16 %v274
      %v730 = vunpack.c.l.b16 %v275
      %v731 = vunpack.c.l.b16 %v276
      %v732 = vunpack.c.l.b16 %v277
      %v733 = vunpack.c.l.b16 %v278
      %v734 = vunpack.c.l.b16 %v279
      %v735 = vunpack.c.l.b16 %v280
      %v736 = vunpack.c.l.b16 %v281
      %v737 = vunpack.c.l.b16 %v282
      %v738 = vunpack.c.l.b16 %v283
      %v739 = vunpack.c.l.b16 %v284
      %v740 = vunpack.c.l.b16 %v285
      %v741 = vunpack.c.l.b16 %v286
      %v742 = vunpack.c.l.b16 %v287
      %v743 = vunpack.c.l.b16 %v288
      %v744 = vunpack.c.l.b16 %v289
      %v745 = vunpack.c.l.b16 %v290
      %v746 = vunpack.c.l.b16 %v291
      %v747 = vunpack.c.l.b16 %v292
      %v748 = vunpack.c.l.b16 %v293
      %v749 = vunpack.c.l.b16 %v294
      %v750 = vunpack.c.l.b16 %v295
      %v751 = vunpack.c.l.b16 %v296
      %v752 = vunpack.c.l.b16 %v297
      %v753 = vunpack.c.l.b16 %v298
      %v754 = vunpack.c.l.b16 %v299
      %v755 = vunpack.c.l.b16 %v300
      %v756 = vunpack.c.l.b16 %v301
      %v757 = vunpack.c.l.b16 %v302
      %v758 = vunpack.c.l.b16 %v303
      %v759 = vunpack.c.l.b16 %v304
      %v760 = vunpack.c.l.b16 %v305
      %v761 = vpack.c.b16 %v698, %v697
      %v762 = vpack.c.b16 %v700, %v699
      %v763 = vpack.c.b16 %v702, %v701
      %v764 = vpack.c.b16 %v704, %v703
      %v765 = vpack.c.b16 %v706, %v705
      %v766 = vpack.c.b16 %v708, %v707
      %v767 = vpack.c.b16 %v710, %v709
      %v768 = vpack.c.b16 %v712, %v711
      %v769 = vpack.c.b16 %v714, %v713
      %v770 = vpack.c.b16 %v716, %v715
      %v771 = vpack.c.b16 %v718, %v717
      %v772 = vpack.c.b16 %v720, %v719
      %v773 = vpack.c.b16 %v722, %v721
      %v774 = vpack.c.b16 %v724, %v723
      %v775 = vpack.c.b16 %v726, %v725
      %v776 = vpack.c.b16 %v728, %v727
      %v777 = vpack.c.b16 %v730, %v729
      %v778 = vpack.c.b16 %v732, %v731
      %v779 = vpack.c.b16 %v734, %v733
      %v780 = vpack.c.b16 %v736, %v735
      %v781 = vpack.c.b16 %v738, %v737
      %v782 = vpack.c.b16 %v740, %v739
      %v783 = vpack.c.b16 %v742, %v741
      %v784 = vpack.c.b16 %v744, %v743
      %v785 = vpack.c.b16 %v746, %v745
      %v786 = vpack.c.b16 %v748, %v747
      %v787 = vpack.c.b16 %v750, %v749
      %v788 = vpack.c.b16 %v752, %v751
      %v789 = vpack.c.b16 %v754, %v753
      %v790 = vpack.c.b16 %v756, %v755
      %v791 = vpack.c.b16 %v758, %v757
      %v792 = vpack.c.b16 %v760, %v759
      %825 = vmatprep.subr.bf16.mxu0 0
      %826 = vmatpush1.bf16.msra.mxu0 %v768
      %827 = vmatprep.subr.bf16.mxu0 0
      %828 = vmatpush1.bf16.msra.mxu0 %v767
      %829 = vmatprep.subr.bf16.mxu0 0
      %830 = vmatpush1.bf16.msra.mxu0 %v766
      %831 = vmatprep.subr.bf16.mxu0 0
      %832 = vmatpush1.bf16.msra.mxu0 %v765
      %833 = vmatprep.subr.bf16.mxu0 0
      %834 = vmatpush1.bf16.msra.mxu0 %v764
      %835 = vmatprep.subr.bf16.mxu0 0
      %836 = vmatpush1.bf16.msra.mxu0 %v763
      %837 = vmatprep.subr.bf16.mxu0 0
      %838 = vmatpush1.bf16.msra.mxu0 %v762
      %839 = vmatprep.subr.bf16.mxu0 0
      %840 = vmatpush1.bf16.msra.mxu0 %v761
      %841 = vmatprep.subr.bf16.mxu0 0
      %842 = vmatpush2.bf16.msra.mxu0 %v776
      %843 = vmatprep.subr.bf16.mxu0 0
      %844 = vmatpush2.bf16.msra.mxu0 %v775
      %845 = vmatprep.subr.bf16.mxu0 0
      %846 = vmatpush2.bf16.msra.mxu0 %v774
      %847 = vmatprep.subr.bf16.mxu0 0
      %848 = vmatpush2.bf16.msra.mxu0 %v773
      %849 = vmatprep.subr.bf16.mxu0 0
      %850 = vmatpush2.bf16.msra.mxu0 %v772
      %851 = vmatprep.subr.bf16.mxu0 0
      %852 = vmatpush2.bf16.msra.mxu0 %v771
      %853 = vmatprep.subr.bf16.mxu0 0
      %854 = vmatpush2.bf16.msra.mxu0 %v770
      %855 = vmatprep.subr.bf16.mxu0 0
      %856 = vmatpush2.bf16.msra.mxu0 %v769
      %857 = vmatprep.mubr.bf16.mxu0 %v506
      %858 = vmatmul.mubr.bf16.gmra.mxu0 %v505
      %v859 = vpop.f32.mrf.mxu0
      %v860 = vadd.f32 %v311, %v859
      %v861 = vpop.f32.mrf.mxu0
      %v862 = vpop.f32.mrf.mxu0
      %v863 = vadd.f32 %v311, %v862
      %v864 = vpop.f32.mrf.mxu0
      %865 = vmatprep.mubr.bf16.mxu0 %v510
      %866 = vmatmul.mubr.bf16.gmra.mxu0 %v509
      %v867 = vpop.f32.mrf.mxu0
      %v868 = vadd.f32 %v311, %v867
      %v869 = vpop.f32.mrf.mxu0
      %v870 = vpop.f32.mrf.mxu0
      %v871 = vadd.f32 %v311, %v870
      %v872 = vpop.f32.mrf.mxu0
      %873 = vmatprep.mubr.bf16.mxu0 %v514
      %874 = vmatmul.mubr.bf16.gmra.mxu0 %v513
      %v875 = vpop.f32.mrf.mxu0
      %v876 = vadd.f32 %v311, %v875
      %v877 = vpop.f32.mrf.mxu0
      %v878 = vpop.f32.mrf.mxu0
      %v879 = vadd.f32 %v311, %v878
      %v880 = vpop.f32.mrf.mxu0
      %881 = vmatprep.mubr.bf16.mxu0 %v518
      %882 = vmatmul.mubr.bf16.gmra.mxu0 %v517
      %v883 = vpop.f32.mrf.mxu0
      %v884 = vadd.f32 %v311, %v883
      %v885 = vpop.f32.mrf.mxu0
      %v886 = vpop.f32.mrf.mxu0
      %v887 = vadd.f32 %v311, %v886
      %v888 = vpop.f32.mrf.mxu0
      %889 = vmatprep.mubr.bf16.mxu0 %v522
      %890 = vmatmul.mubr.bf16.gmra.mxu0 %v521
      %v891 = vpop.f32.mrf.mxu0
      %v892 = vadd.f32 %v311, %v891
      %v893 = vpop.f32.mrf.mxu0
      %v894 = vpop.f32.mrf.mxu0
      %v895 = vadd.f32 %v311, %v894
      %v896 = vpop.f32.mrf.mxu0
      %897 = vmatprep.mubr.bf16.mxu0 %v526
      %898 = vmatmul.mubr.bf16.gmra.mxu0 %v525
      %v899 = vpop.f32.mrf.mxu0
      %v900 = vadd.f32 %v311, %v899
      %v901 = vpop.f32.mrf.mxu0
      %v902 = vpop.f32.mrf.mxu0
      %v903 = vadd.f32 %v311, %v902
      %v904 = vpop.f32.mrf.mxu0
      %905 = vmatprep.mubr.bf16.mxu0 %v530
      %906 = vmatmul.mubr.bf16.gmra.mxu0 %v529
      %v907 = vpop.f32.mrf.mxu0
      %v908 = vadd.f32 %v311, %v907
      %v909 = vpop.f32.mrf.mxu0
      %v910 = vpop.f32.mrf.mxu0
      %v911 = vadd.f32 %v311, %v910
      %v912 = vpop.f32.mrf.mxu0
      %913 = vmatprep.mubr.bf16.mxu0 %v534
      %914 = vmatmul.mubr.bf16.gmra.mxu0 %v533
      %v915 = vpop.f32.mrf.mxu0
      %v916 = vadd.f32 %v311, %v915
      %v917 = vpop.f32.mrf.mxu0
      %v918 = vpop.f32.mrf.mxu0
      %v919 = vadd.f32 %v311, %v918
      %v920 = vpop.f32.mrf.mxu0
      %921 = vmatprep.mubr.bf16.mxu0 %v538
      %922 = vmatmul.mubr.bf16.gmra.mxu0 %v537
      %v923 = vpop.f32.mrf.mxu0
      %v924 = vadd.f32 %v311, %v923
      %v925 = vpop.f32.mrf.mxu0
      %v926 = vpop.f32.mrf.mxu0
      %v927 = vadd.f32 %v311, %v926
      %v928 = vpop.f32.mrf.mxu0
      %929 = vmatprep.mubr.bf16.mxu0 %v542
      %930 = vmatmul.mubr.bf16.gmra.mxu0 %v541
      %v931 = vpop.f32.mrf.mxu0
      %v932 = vadd.f32 %v311, %v931
      %v933 = vpop.f32.mrf.mxu0
      %v934 = vpop.f32.mrf.mxu0
      %v935 = vadd.f32 %v311, %v934
      %v936 = vpop.f32.mrf.mxu0
      %937 = vmatprep.mubr.bf16.mxu0 %v546
      %938 = vmatmul.mubr.bf16.gmra.mxu0 %v545
      %v939 = vpop.f32.mrf.mxu0
      %v940 = vadd.f32 %v311, %v939
      %v941 = vpop.f32.mrf.mxu0
      %v942 = vpop.f32.mrf.mxu0
      %v943 = vadd.f32 %v311, %v942
      %v944 = vpop.f32.mrf.mxu0
      %945 = vmatprep.mubr.bf16.mxu0 %v550
      %946 = vmatmul.mubr.bf16.gmra.mxu0 %v549
      %v947 = vpop.f32.mrf.mxu0
      %v948 = vadd.f32 %v311, %v947
      %v949 = vpop.f32.mrf.mxu0
      %v950 = vpop.f32.mrf.mxu0
      %v951 = vadd.f32 %v311, %v950
      %v952 = vpop.f32.mrf.mxu0
      %953 = vmatprep.mubr.bf16.mxu0 %v554
      %954 = vmatmul.mubr.bf16.gmra.mxu0 %v553
      %v955 = vpop.f32.mrf.mxu0
      %v956 = vadd.f32 %v311, %v955
      %v957 = vpop.f32.mrf.mxu0
      %v958 = vpop.f32.mrf.mxu0
      %v959 = vadd.f32 %v311, %v958
      %v960 = vpop.f32.mrf.mxu0
      %961 = vmatprep.mubr.bf16.mxu0 %v558
      %962 = vmatmul.mubr.bf16.gmra.mxu0 %v557
      %v963 = vpop.f32.mrf.mxu0
      %v964 = vadd.f32 %v311, %v963
      %v965 = vpop.f32.mrf.mxu0
      %v966 = vpop.f32.mrf.mxu0
      %v967 = vadd.f32 %v311, %v966
      %v968 = vpop.f32.mrf.mxu0
      %969 = vmatprep.mubr.bf16.mxu0 %v562
      %970 = vmatmul.mubr.bf16.gmra.mxu0 %v561
      %v971 = vpop.f32.mrf.mxu0
      %v972 = vadd.f32 %v311, %v971
      %v973 = vpop.f32.mrf.mxu0
      %v974 = vpop.f32.mrf.mxu0
      %v975 = vadd.f32 %v311, %v974
      %v976 = vpop.f32.mrf.mxu0
      %977 = vmatprep.mubr.bf16.mxu0 %v566
      %978 = vmatmul.mubr.bf16.gmra.mxu0 %v565
      %v979 = vpop.f32.mrf.mxu0
      %v980 = vadd.f32 %v311, %v979
      %v981 = vpop.f32.mrf.mxu0
      %v982 = vpop.f32.mrf.mxu0
      %v983 = vadd.f32 %v311, %v982
      %v984 = vpop.f32.mrf.mxu0
      %985 = vdwg.mxu0
      %986 = vmatprep.subr.bf16.mxu0 0
      %987 = vmatpush1.bf16.msra.mxu0 %v784
      %988 = vmatprep.subr.bf16.mxu0 0
      %989 = vmatpush1.bf16.msra.mxu0 %v783
      %990 = vmatprep.subr.bf16.mxu0 0
      %991 = vmatpush1.bf16.msra.mxu0 %v782
      %992 = vmatprep.subr.bf16.mxu0 0
      %993 = vmatpush1.bf16.msra.mxu0 %v781
      %994 = vmatprep.subr.bf16.mxu0 0
      %995 = vmatpush1.bf16.msra.mxu0 %v780
      %996 = vmatprep.subr.bf16.mxu0 0
      %997 = vmatpush1.bf16.msra.mxu0 %v779
      %998 = vmatprep.subr.bf16.mxu0 0
      %999 = vmatpush1.bf16.msra.mxu0 %v778
      %1000 = vmatprep.subr.bf16.mxu0 0
      %1001 = vmatpush1.bf16.msra.mxu0 %v777
      %1002 = vmatprep.subr.bf16.mxu0 0
      %1003 = vmatpush2.bf16.msra.mxu0 %v792
      %1004 = vmatprep.subr.bf16.mxu0 0
      %1005 = vmatpush2.bf16.msra.mxu0 %v791
      %1006 = vmatprep.subr.bf16.mxu0 0
      %1007 = vmatpush2.bf16.msra.mxu0 %v790
      %1008 = vmatprep.subr.bf16.mxu0 0
      %1009 = vmatpush2.bf16.msra.mxu0 %v789
      %1010 = vmatprep.subr.bf16.mxu0 0
      %1011 = vmatpush2.bf16.msra.mxu0 %v788
      %1012 = vmatprep.subr.bf16.mxu0 0
      %1013 = vmatpush2.bf16.msra.mxu0 %v787
      %1014 = vmatprep.subr.bf16.mxu0 0
      %1015 = vmatpush2.bf16.msra.mxu0 %v786
      %1016 = vmatprep.subr.bf16.mxu0 0
      %1017 = vmatpush2.bf16.msra.mxu0 %v785
      %1018 = vmatprep.mubr.bf16.mxu0 %v508
      %1019 = vmatmul.mubr.bf16.gmra.mxu0 %v507
      %v1020 = vpop.f32.mrf.mxu0
      %v1021 = vadd.f32 %v860, %v1020
      %v1022 = vpop.f32.mrf.mxu0
      %v1023 = vpop.f32.mrf.mxu0
      %v1024 = vadd.f32 %v863, %v1023
      %v1025 = vpop.f32.mrf.mxu0
      %1026 = vmatprep.mubr.bf16.mxu0 %v512
      %1027 = vmatmul.mubr.bf16.gmra.mxu0 %v511
      %v1028 = vpop.f32.mrf.mxu0
      %v1029 = vadd.f32 %v868, %v1028
      %v1030 = vpop.f32.mrf.mxu0
      %v1031 = vpop.f32.mrf.mxu0
      %v1032 = vadd.f32 %v871, %v1031
      %v1033 = vpop.f32.mrf.mxu0
      %1034 = vmatprep.mubr.bf16.mxu0 %v516
      %1035 = vmatmul.mubr.bf16.gmra.mxu0 %v515
      %v1036 = vpop.f32.mrf.mxu0
      %v1037 = vadd.f32 %v876, %v1036
      %v1038 = vpop.f32.mrf.mxu0
      %v1039 = vpop.f32.mrf.mxu0
      %v1040 = vadd.f32 %v879, %v1039
      %v1041 = vpop.f32.mrf.mxu0
      %1042 = vmatprep.mubr.bf16.mxu0 %v520
      %1043 = vmatmul.mubr.bf16.gmra.mxu0 %v519
      %v1044 = vpop.f32.mrf.mxu0
      %v1045 = vadd.f32 %v884, %v1044
      %v1046 = vpop.f32.mrf.mxu0
      %v1047 = vpop.f32.mrf.mxu0
      %v1048 = vadd.f32 %v887, %v1047
      %v1049 = vpop.f32.mrf.mxu0
      %1050 = vmatprep.mubr.bf16.mxu0 %v524
      %1051 = vmatmul.mubr.bf16.gmra.mxu0 %v523
      %v1052 = vpop.f32.mrf.mxu0
      %v1053 = vadd.f32 %v892, %v1052
      %v1054 = vpop.f32.mrf.mxu0
      %v1055 = vpop.f32.mrf.mxu0
      %v1056 = vadd.f32 %v895, %v1055
      %v1057 = vpop.f32.mrf.mxu0
      %1058 = vmatprep.mubr.bf16.mxu0 %v528
      %1059 = vmatmul.mubr.bf16.gmra.mxu0 %v527
      %v1060 = vpop.f32.mrf.mxu0
      %v1061 = vadd.f32 %v900, %v1060
      %v1062 = vpop.f32.mrf.mxu0
      %v1063 = vpop.f32.mrf.mxu0
      %v1064 = vadd.f32 %v903, %v1063
      %v1065 = vpop.f32.mrf.mxu0
      %1066 = vmatprep.mubr.bf16.mxu0 %v532
      %1067 = vmatmul.mubr.bf16.gmra.mxu0 %v531
      %v1068 = vpop.f32.mrf.mxu0
      %v1069 = vadd.f32 %v908, %v1068
      %v1070 = vpop.f32.mrf.mxu0
      %v1071 = vpop.f32.mrf.mxu0
      %v1072 = vadd.f32 %v911, %v1071
      %v1073 = vpop.f32.mrf.mxu0
      %1074 = vmatprep.mubr.bf16.mxu0 %v536
      %1075 = vmatmul.mubr.bf16.gmra.mxu0 %v535
      %v1076 = vpop.f32.mrf.mxu0
      %v1077 = vadd.f32 %v916, %v1076
      %v1078 = vpop.f32.mrf.mxu0
      %v1079 = vpop.f32.mrf.mxu0
      %v1080 = vadd.f32 %v919, %v1079
      %v1081 = vpop.f32.mrf.mxu0
      %1082 = vmatprep.mubr.bf16.mxu0 %v540
      %1083 = vmatmul.mubr.bf16.gmra.mxu0 %v539
      %v1084 = vpop.f32.mrf.mxu0
      %v1085 = vadd.f32 %v924, %v1084
      %v1086 = vpop.f32.mrf.mxu0
      %v1087 = vpop.f32.mrf.mxu0
      %v1088 = vadd.f32 %v927, %v1087
      %v1089 = vpop.f32.mrf.mxu0
      %1090 = vmatprep.mubr.bf16.mxu0 %v544
      %1091 = vmatmul.mubr.bf16.gmra.mxu0 %v543
      %v1092 = vpop.f32.mrf.mxu0
      %v1093 = vadd.f32 %v932, %v1092
      %v1094 = vpop.f32.mrf.mxu0
      %v1095 = vpop.f32.mrf.mxu0
      %v1096 = vadd.f32 %v935, %v1095
      %v1097 = vpop.f32.mrf.mxu0
      %1098 = vmatprep.mubr.bf16.mxu0 %v548
      %1099 = vmatmul.mubr.bf16.gmra.mxu0 %v547
      %v1100 = vpop.f32.mrf.mxu0
      %v1101 = vadd.f32 %v940, %v1100
      %v1102 = vpop.f32.mrf.mxu0
      %v1103 = vpop.f32.mrf.mxu0
      %v1104 = vadd.f32 %v943, %v1103
      %v1105 = vpop.f32.mrf.mxu0
      %1106 = vmatprep.mubr.bf16.mxu0 %v552
      %1107 = vmatmul.mubr.bf16.gmra.mxu0 %v551
      %v1108 = vpop.f32.mrf.mxu0
      %v1109 = vadd.f32 %v948, %v1108
      %v1110 = vpop.f32.mrf.mxu0
      %v1111 = vpop.f32.mrf.mxu0
      %v1112 = vadd.f32 %v951, %v1111
      %v1113 = vpop.f32.mrf.mxu0
      %1114 = vmatprep.mubr.bf16.mxu0 %v556
      %1115 = vmatmul.mubr.bf16.gmra.mxu0 %v555
      %v1116 = vpop.f32.mrf.mxu0
      %v1117 = vadd.f32 %v956, %v1116
      %v1118 = vpop.f32.mrf.mxu0
      %v1119 = vpop.f32.mrf.mxu0
      %v1120 = vadd.f32 %v959, %v1119
      %v1121 = vpop.f32.mrf.mxu0
      %1122 = vmatprep.mubr.bf16.mxu0 %v560
      %1123 = vmatmul.mubr.bf16.gmra.mxu0 %v559
      %v1124 = vpop.f32.mrf.mxu0
      %v1125 = vadd.f32 %v964, %v1124
      %v1126 = vpop.f32.mrf.mxu0
      %v1127 = vpop.f32.mrf.mxu0
      %v1128 = vadd.f32 %v967, %v1127
      %v1129 = vpop.f32.mrf.mxu0
      %1130 = vmatprep.mubr.bf16.mxu0 %v564
      %1131 = vmatmul.mubr.bf16.gmra.mxu0 %v563
      %v1132 = vpop.f32.mrf.mxu0
      %v1133 = vadd.f32 %v972, %v1132
      %v1134 = vpop.f32.mrf.mxu0
      %v1135 = vpop.f32.mrf.mxu0
      %v1136 = vadd.f32 %v975, %v1135
      %v1137 = vpop.f32.mrf.mxu0
      %1138 = vmatprep.mubr.bf16.mxu0 %v568
      %1139 = vmatmul.mubr.bf16.gmra.mxu0 %v567
      %v1140 = vpop.f32.mrf.mxu0
      %v1141 = vadd.f32 %v980, %v1140
      %v1142 = vpop.f32.mrf.mxu0
      %v1143 = vpop.f32.mrf.mxu0
      %v1144 = vadd.f32 %v983, %v1143
      %v1145 = vpop.f32.mrf.mxu0
      %1146 = vdwg.mxu0
      %1147 = vst [vmem:[%s175] sm:$0xff] %v1021
      %1148 = vst [vmem:[%s175 + $0x8] sm:$0xff] %v1024
      %1149 = vst [vmem:[%s175 + $0x10] sm:$0xff] %v1029
      %1150 = vst [vmem:[%s175 + $0x18] sm:$0xff] %v1032
      %1151 = vst [vmem:[%s175 + $0x20] sm:$0xff] %v1037
      %1152 = vst [vmem:[%s175 + $0x28] sm:$0xff] %v1040
      %1153 = vst [vmem:[%s175 + $0x30] sm:$0xff] %v1045
      %1154 = vst [vmem:[%s175 + $0x38] sm:$0xff] %v1048
      %1155 = vst [vmem:[%s175 + $0x40] sm:$0xff] %v1053
      %1156 = vst [vmem:[%s175 + $0x48] sm:$0xff] %v1056
      %1157 = vst [vmem:[%s175 + $0x50] sm:$0xff] %v1061
      %1158 = vst [vmem:[%s175 + $0x58] sm:$0xff] %v1064
      %1159 = vst [vmem:[%s175 + $0x60] sm:$0xff] %v1069
      %1160 = vst [vmem:[%s175 + $0x68] sm:$0xff] %v1072
      %1161 = vst [vmem:[%s175 + $0x70] sm:$0xff] %v1077
      %1162 = vst [vmem:[%s175 + $0x78] sm:$0xff] %v1080
      %1163 = vst [vmem:[%s175 + $0x80] sm:$0xff] %v1085
      %1164 = vst [vmem:[%s175 + $0x88] sm:$0xff] %v1088
      %1165 = vst [vmem:[%s175 + $0x90] sm:$0xff] %v1093
      %1166 = vst [vmem:[%s175 + $0x98] sm:$0xff] %v1096
      %1167 = vst [vmem:[%s175 + $0xa0] sm:$0xff] %v1101
      %1168 = vst [vmem:[%s175 + $0xa8] sm:$0xff] %v1104
      %1169 = vst [vmem:[%s175 + $0xb0] sm:$0xff] %v1109
      %1170 = vst [vmem:[%s175 + $0xb8] sm:$0xff] %v1112
      %1171 = vst [vmem:[%s175 + $0xc0] sm:$0xff] %v1117
      %1172 = vst [vmem:[%s175 + $0xc8] sm:$0xff] %v1120
      %1173 = vst [vmem:[%s175 + $0xd0] sm:$0xff] %v1125
      %1174 = vst [vmem:[%s175 + $0xd8] sm:$0xff] %v1128
      %1175 = vst [vmem:[%s175 + $0xe0] sm:$0xff] %v1133
      %1176 = vst [vmem:[%s175 + $0xe8] sm:$0xff] %v1136
      %1177 = vst [vmem:[%s175 + $0xf0] sm:$0xff] %v1141
      %1178 = vst [vmem:[%s175 + $0xf8] sm:$0xff] %v1144
      %s1179 = smul.u32 32, %s14
      %p1180 = scmp.lt.s32.totalorder %s1179, 63
      %s1181 = scalar_select %p1180, %s1179, 63
      %s1182 = smul.addr %s1181, 8
      %s1183 = scalar_lea.vmem %s3, %s1182
      // Predicated region
      $region33: #{gnn_forward.6} parent=31 // pred_check
        %p1184 = pneg %p100
      $region34: #{gnn_forward.6} parent=31 // pred_check_branch
        %1186 = sbr.rel (%p1184) target = $region36
      $region35: #{gnn_forward.6} parent=31 // pred_region
        %s1187 = smul.u32 32, %s14
      $region36: #{gnn_forward.6} parent=31 // pred_fallthru
        _
    $region32: #{gnn_forward.6} parent=5 // pred_fallthru
      _
    %p1188 = scmp.le.s32.totalorder 2, %s9
    // Predicated region
    $region37: #{gnn_forward.6} parent=5 // pred_check
      %p1189 = pneg %p1188
    $region38: #{gnn_forward.6} parent=5 // pred_check_branch
      %1191 = sbr.rel (%p1189) target = $region40
    $region39: #{gnn_forward.6} parent=5 // pred_region
      %s1192 = ssub.s32 %s9, 2
      // Predicated region
      $region41: #{gnn_forward.6} parent=39 // pred_check
        %p1193 = pneg %p106
      $region42: #{gnn_forward.6} parent=39 // pred_check_branch
        %1195 = sbr.rel (%p1193) target = $region44
      $region43: #{gnn_forward.6} parent=39 // pred_region
        %s1196 = smul.u32 32, %s15
        %p1197 = scmp.lt.s32.totalorder %s1196, 63
        %s1198 = scalar_select %p1197, %s1196, 63
        %s1199 = smul.addr %s1198, 8
        %s1200 = scalar_lea.vmem %s3, %s1199
      $region44: #{gnn_forward.6} parent=39 // pred_fallthru
        _
    $region40: #{gnn_forward.6} parent=5 // pred_fallthru
      _
  $region6: #{gnn_forward.6} parent=0 // loop_footer
    %s13 = sadd.s32 1, %s9
  $region7: #{gnn_forward.6} parent=0 // loop_footer_branch
    %8 = sbr.rel target = $region3
  $region8: #{gnn_forward.6} parent=0 // loop_exit
    _

// kernel: gnn_forward.5
$region0: #{gnn_forward.5}
  #allocation0 [shape = 'u32[]', space=smem, size = 0x4, offset = 0x4, fixed_abs, tag = 'smem constant byte address 0x4 - core index']
  #allocation1 [shape = 'u32[144,128]{1,0:T(1,128)}', space=vmem, size = 0x12000, scoped, tag = 'internal scratch']
  %s0 = inlined_call_operand.vmem [shape: bf16[512,512], index: 0, kind: input, shape index: {}]
  %s1 = inlined_call_operand.vmem [shape: bf16[512,128], index: 1, kind: input, shape index: {}]
  %s2 = inlined_call_operand.vmem [shape: f32[128,128], index: 2, kind: input, shape index: {}]
  %s3 = inlined_call_operand.vmem [shape: f32[1,128], index: 3, kind: input, shape index: {}]
  %s4 = inlined_call_operand.vmem [shape: bf16[512,128], index: 4, kind: output, shape index: {}]
  %s5 = sld [smem:[#allocation0]]
  $region49: #{gnn_forward.5} parent=0
    _
  %s7 = ssub.s32 1, %s5
  %s8 = scalar_select 0, %s7, %s5
  loop: start=0, step=1, limit=4
  $region2: #{gnn_forward.5} parent=0 // loop_pre_header
    _
  $region3: #{gnn_forward.5} parent=0 // loop_header
    %s10 = sphi 0, %s14
    %p11 = scmp.ge.s32.totalorder %s10, 4
    %s20 = sphi 0, %s22
    %s23 = sphi 0, %s20
    %s24 = sphi 0, %s23
    %s40 = sphi 0, %s24
    %s44 = sphi 0, %s44
    %s46 = sphi 0, %s44
    %s47 = sphi 0, %s46
    %s61 = sphi 0, %s47
    %s65 = sphi 0, %s65
    %s67 = sphi 0, %s65
    %s68 = sphi 0, %s67
    %s82 = sphi 0, %s68
    %s86 = sphi 0, %s86
    %s88 = sphi 0, %s86
    %s89 = sphi 0, %s88
    %s103 = sphi 0, %s89
    %s109 = sphi 0, %s111
    %s112 = sphi 0, %s109
    %s113 = sphi 0, %s112
    %s129 = sphi 0, %s113
  $region4: #{gnn_forward.5} parent=0 // loop_header_branch
    %13 = sbr.rel (%p11) target = $region8
  $region5: #{gnn_forward.5} parent=0 // loop_body
    %s15 = ssub.s32 %s10, 1
    %s16 = ssub.s32 %s10, 2
    %s17 = sadd.s32 %s10, 1
    %s18 = ssub.s32 %s10, %s17
    %p19 = scmp.eq.s32.totalorder %s18, 0
    %s21 = sadd.s32 %s20, 1
    %s22 = scalar_select %p19, %s20, %s21
    %p25 = pneg %p19
    %p26 = scmp.eq.s32.totalorder %s10, 1
    %p27 = por %p25, %p26
    %p28 = scmp.ne.s32.totalorder %s20, %s23
    %p29 = scmp.eq.s32.totalorder %s10, 0
    %p30 = por %p28, %p29
    %p31 = scmp.ne.s32.totalorder %s20, %s23
    %p32 = scmp.eq.s32.totalorder %s15, 1
    %p33 = por %p31, %p32
    %p34 = scmp.ne.s32.totalorder %s23, %s24
    %p35 = scmp.eq.s32.totalorder %s15, 0
    %p36 = por %p34, %p35
    %p37 = scmp.ne.s32.totalorder %s23, %s24
    %p38 = scmp.eq.s32.totalorder %s16, 1
    %p39 = por %p37, %p38
    %p41 = scmp.ne.s32.totalorder %s24, %s40
    %p42 = scmp.eq.s32.totalorder %s16, 0
    %p43 = por %p41, %p42
    %s45 = sadd.s32 %s44, 1
    %p48 = scmp.eq.s32.totalorder %s10, 1
    %p49 = scmp.ne.s32.totalorder %s44, %s46
    %p50 = scmp.eq.s32.totalorder %s10, 0
    %p51 = por %p49, %p50
    %p52 = scmp.ne.s32.totalorder %s44, %s46
    %p53 = scmp.eq.s32.totalorder %s15, 1
    %p54 = por %p52, %p53
    %p55 = scmp.ne.s32.totalorder %s46, %s47
    %p56 = scmp.eq.s32.totalorder %s15, 0
    %p57 = por %p55, %p56
    %p58 = scmp.ne.s32.totalorder %s46, %s47
    %p59 = scmp.eq.s32.totalorder %s16, 1
    %p60 = por %p58, %p59
    %p62 = scmp.ne.s32.totalorder %s47, %s61
    %p63 = scmp.eq.s32.totalorder %s16, 0
    %p64 = por %p62, %p63
    %s66 = sadd.s32 %s65, 1
    %p69 = scmp.eq.s32.totalorder %s10, 1
    %p70 = scmp.ne.s32.totalorder %s65, %s67
    %p71 = scmp.eq.s32.totalorder %s10, 0
    %p72 = por %p70, %p71
    %p73 = scmp.ne.s32.totalorder %s65, %s67
    %p74 = scmp.eq.s32.totalorder %s15, 1
    %p75 = por %p73, %p74
    %p76 = scmp.ne.s32.totalorder %s67, %s68
    %p77 = scmp.eq.s32.totalorder %s15, 0
    %p78 = por %p76, %p77
    %p79 = scmp.ne.s32.totalorder %s67, %s68
    %p80 = scmp.eq.s32.totalorder %s16, 1
    %p81 = por %p79, %p80
    %p83 = scmp.ne.s32.totalorder %s68, %s82
    %p84 = scmp.eq.s32.totalorder %s16, 0
    %p85 = por %p83, %p84
    %s87 = sadd.s32 %s86, 1
    %p90 = scmp.eq.s32.totalorder %s10, 1
    %p91 = scmp.ne.s32.totalorder %s86, %s88
    %p92 = scmp.eq.s32.totalorder %s10, 0
    %p93 = por %p91, %p92
    %p94 = scmp.ne.s32.totalorder %s86, %s88
    %p95 = scmp.eq.s32.totalorder %s15, 1
    %p96 = por %p94, %p95
    %p97 = scmp.ne.s32.totalorder %s88, %s89
    %p98 = scmp.eq.s32.totalorder %s15, 0
    %p99 = por %p97, %p98
    %p100 = scmp.ne.s32.totalorder %s88, %s89
    %p101 = scmp.eq.s32.totalorder %s16, 1
    %p102 = por %p100, %p101
    %p104 = scmp.ne.s32.totalorder %s89, %s103
    %p105 = scmp.eq.s32.totalorder %s16, 0
    %p106 = por %p104, %p105
    %s107 = ssub.s32 %s10, %s17
    %p108 = scmp.eq.s32.totalorder %s107, 0
    %s110 = sadd.s32 %s109, 1
    %s111 = scalar_select %p108, %s109, %s110
    %p114 = pneg %p108
    %p115 = scmp.eq.s32.totalorder %s10, 1
    %p116 = por %p114, %p115
    %p117 = scmp.ne.s32.totalorder %s109, %s112
    %p118 = scmp.eq.s32.totalorder %s10, 0
    %p119 = por %p117, %p118
    %p120 = scmp.ne.s32.totalorder %s109, %s112
    %p121 = scmp.eq.s32.totalorder %s15, 1
    %p122 = por %p120, %p121
    %p123 = scmp.ne.s32.totalorder %s112, %s113
    %p124 = scmp.eq.s32.totalorder %s15, 0
    %p125 = por %p123, %p124
    %p126 = scmp.ne.s32.totalorder %s112, %s113
    %p127 = scmp.eq.s32.totalorder %s16, 1
    %p128 = por %p126, %p127
    %p130 = scmp.ne.s32.totalorder %s113, %s129
    %p131 = scmp.eq.s32.totalorder %s16, 0
    %p132 = por %p130, %p131
    %p133 = scmp.le.s32.totalorder 1, %s10
    %p134 = scmp.lt.s32.totalorder %s10, 3
    %p135 = pnand %p133, %p134
    %p136 = pneg %p135
    // Predicated region
    $region9: #{gnn_forward.5} parent=5 // pred_check
      _
    $region10: #{gnn_forward.5} parent=5 // pred_check_branch
      %138 = sbr.rel (%p135) target = $region12
    $region11: #{gnn_forward.5} parent=5 // pred_region
      %s139 = ssub.s32 %s10, 1
      // Predicated region
      $region13: #{gnn_forward.5} parent=11 // pred_check
        %p140 = pneg %p57
      $region14: #{gnn_forward.5} parent=11 // pred_check_branch
        %142 = sbr.rel (%p140) target = $region16
      $region15: #{gnn_forward.5} parent=11 // pred_region
        _
      $region16: #{gnn_forward.5} parent=11 // pred_fallthru
        _
      // Predicated region
      $region17: #{gnn_forward.5} parent=11 // pred_check
        %p143 = pneg %p78
      $region18: #{gnn_forward.5} parent=11 // pred_check_branch
        %145 = sbr.rel (%p143) target = $region20
      $region19: #{gnn_forward.5} parent=11 // pred_region
        _
      $region20: #{gnn_forward.5} parent=11 // pred_fallthru
        _
      // Predicated region
      $region21: #{gnn_forward.5} parent=11 // pred_check
        %p146 = pneg %p99
      $region22: #{gnn_forward.5} parent=11 // pred_check_branch
        %148 = sbr.rel (%p146) target = $region24
      $region23: #{gnn_forward.5} parent=11 // pred_region
        _
      $region24: #{gnn_forward.5} parent=11 // pred_fallthru
        _
    $region12: #{gnn_forward.5} parent=5 // pred_fallthru
      _
    %p149 = scmp.lt.s32.totalorder %s10, 2
    // Predicated region
    $region25: #{gnn_forward.5} parent=5 // pred_check
      %p150 = pneg %p149
    $region26: #{gnn_forward.5} parent=5 // pred_check_branch
      %152 = sbr.rel (%p150) target = $region28
    $region27: #{gnn_forward.5} parent=5 // pred_region
      // Predicated region
      $region29: #{gnn_forward.5} parent=27 // pred_check
        %p153 = pneg %p30
      $region30: #{gnn_forward.5} parent=27 // pred_check_branch
        %155 = sbr.rel (%p153) target = $region32
      $region31: #{gnn_forward.5} parent=27 // pred_region
        %s156 = smul.u32 32, %s10
        %p157 = scmp.lt.s32.totalorder %s156, 63
        %s158 = scalar_select %p157, %s156, 63
        %s159 = smul.addr %s158, 4
        %s160 = smul.addr %s159, 4
        %s161 = scalar_lea.vmem %s0, %s160
        %s162 = smul.u32 32, %s10
      $region32: #{gnn_forward.5} parent=27 // pred_fallthru
        _
    $region28: #{gnn_forward.5} parent=5 // pred_fallthru
      _
    %p163 = scmp.le.s32.totalorder 1, %s10
    %p164 = scmp.lt.s32.totalorder %s10, 3
    %p165 = pnand %p163, %p164
    %p166 = pneg %p165
    // Predicated region
    $region33: #{gnn_forward.5} parent=5 // pred_check
      _
    $region34: #{gnn_forward.5} parent=5 // pred_check_branch
      %168 = sbr.rel (%p165) target = $region36
    $region35: #{gnn_forward.5} parent=5 // pred_region
      %s169 = ssub.s32 %s10, 1
      %s170 = smul.u32 32, %s15
      %p171 = scmp.lt.s32.totalorder %s170, 63
      %s172 = scalar_select %p171, %s170, 63
      %s173 = smul.addr %s172, 4
      %s174 = smul.addr %s173, 4
      %s175 = scalar_lea.vmem %s0, %s174
      %p176 = pneg %p36
      %p177 = pneg %p33
      %p178 = pneg %p57
      %p179 = pneg %p54
      %p180 = pneg %p78
      %p181 = pneg %p75
      %p182 = pneg %p99
      %p183 = pneg %p96
      %p184 = pneg %p125
      %p185 = pneg %p122
      %s186 = smul.u32 32, %s15
      %p187 = scmp.lt.s32.totalorder %s186, 63
      %s188 = scalar_select %p187, %s186, 63
      %s189 = smul.addr %s188, 4
      %s190 = scalar_lea.vmem %s4, %s189
      %s191 = smul.u32 32, %s15
      %p192 = scmp.lt.s32.totalorder %s191, 63
      %s193 = scalar_select %p192, %s191, 63
      %s194 = smul.addr %s193, 4
      %s195 = smul.addr %s194, 4
      %s196 = scalar_lea.vmem %s0, %s195
      %s197 = smul.u32 32, %s15
      %s198 = smul.u32 32, %s15
      %p199 = scmp.lt.s32.totalorder %s198, 63
      %s200 = scalar_select %p199, %s198, 63
      %s201 = smul.addr %s200, 4
      %s202 = scalar_lea.vmem %s4, %s201
      %s203 = smul.u32 32, %s15
      %v205 = vld [vmem:[%s196] sm:$0xff]
      %v206 = vld [vmem:[%s196 + $0x8] sm:$0xff]
      %v207 = vld [vmem:[%s196 + $0x10] sm:$0xff]
      %v208 = vld [vmem:[%s196 + $0x18] sm:$0xff]
      %v209 = vld [vmem:[%s196 + $0x20] sm:$0xff]
      %v210 = vld [vmem:[%s196 + $0x28] sm:$0xff]
      %v211 = vld [vmem:[%s196 + $0x30] sm:$0xff]
      %v212 = vld [vmem:[%s196 + $0x38] sm:$0xff]
      %v213 = vld [vmem:[%s196 + $0x40] sm:$0xff]
      %v214 = vld [vmem:[%s196 + $0x48] sm:$0xff]
      %v215 = vld [vmem:[%s196 + $0x50] sm:$0xff]
      %v216 = vld [vmem:[%s196 + $0x58] sm:$0xff]
      %v217 = vld [vmem:[%s196 + $0x60] sm:$0xff]
      %v218 = vld [vmem:[%s196 + $0x68] sm:$0xff]
      %v219 = vld [vmem:[%s196 + $0x70] sm:$0xff]
      %v220 = vld [vmem:[%s196 + $0x78] sm:$0xff]
      %v221 = vld [vmem:[%s196 + $0x80] sm:$0xff]
      %v222 = vld [vmem:[%s196 + $0x88] sm:$0xff]
      %v223 = vld [vmem:[%s196 + $0x90] sm:$0xff]
      %v224 = vld [vmem:[%s196 + $0x98] sm:$0xff]
      %v225 = vld [vmem:[%s196 + $0xa0] sm:$0xff]
      %v226 = vld [vmem:[%s196 + $0xa8] sm:$0xff]
      %v227 = vld [vmem:[%s196 + $0xb0] sm:$0xff]
      %v228 = vld [vmem:[%s196 + $0xb8] sm:$0xff]
      %v229 = vld [vmem:[%s196 + $0xc0] sm:$0xff]
      %v230 = vld [vmem:[%s196 + $0xc8] sm:$0xff]
      %v231 = vld [vmem:[%s196 + $0xd0] sm:$0xff]
      %v232 = vld [vmem:[%s196 + $0xd8] sm:$0xff]
      %v233 = vld [vmem:[%s196 + $0xe0] sm:$0xff]
      %v234 = vld [vmem:[%s196 + $0xe8] sm:$0xff]
      %v235 = vld [vmem:[%s196 + $0xf0] sm:$0xff]
      %v236 = vld [vmem:[%s196 + $0xf8] sm:$0xff]
      %v237 = vld [vmem:[%s196 + $0x100] sm:$0xff]
      %v238 = vld [vmem:[%s196 + $0x108] sm:$0xff]
      %v239 = vld [vmem:[%s196 + $0x110] sm:$0xff]
      %v240 = vld [vmem:[%s196 + $0x118] sm:$0xff]
      %v241 = vld [vmem:[%s196 + $0x120] sm:$0xff]
      %v242 = vld [vmem:[%s196 + $0x128] sm:$0xff]
      %v243 = vld [vmem:[%s196 + $0x130] sm:$0xff]
      %v244 = vld [vmem:[%s196 + $0x138] sm:$0xff]
      %v245 = vld [vmem:[%s196 + $0x140] sm:$0xff]
      %v246 = vld [vmem:[%s196 + $0x148] sm:$0xff]
      %v247 = vld [vmem:[%s196 + $0x150] sm:$0xff]
      %v248 = vld [vmem:[%s196 + $0x158] sm:$0xff]
      %v249 = vld [vmem:[%s196 + $0x160] sm:$0xff]
      %v250 = vld [vmem:[%s196 + $0x168] sm:$0xff]
      %v251 = vld [vmem:[%s196 + $0x170] sm:$0xff]
      %v252 = vld [vmem:[%s196 + $0x178] sm:$0xff]
      %v253 = vld [vmem:[%s196 + $0x180] sm:$0xff]
      %v254 = vld [vmem:[%s196 + $0x188] sm:$0xff]
      %v255 = vld [vmem:[%s196 + $0x190] sm:$0xff]
      %v256 = vld [vmem:[%s196 + $0x198] sm:$0xff]
      %v257 = vld [vmem:[%s196 + $0x1a0] sm:$0xff]
      %v258 = vld [vmem:[%s196 + $0x1a8] sm:$0xff]
      %v259 = vld [vmem:[%s196 + $0x1b0] sm:$0xff]
      %v260 = vld [vmem:[%s196 + $0x1b8] sm:$0xff]
      %v261 = vld [vmem:[%s196 + $0x1c0] sm:$0xff]
      %v262 = vld [vmem:[%s196 + $0x1c8] sm:$0xff]
      %v263 = vld [vmem:[%s196 + $0x1d0] sm:$0xff]
      %v264 = vld [vmem:[%s196 + $0x1d8] sm:$0xff]
      %v265 = vld [vmem:[%s196 + $0x1e0] sm:$0xff]
      %v266 = vld [vmem:[%s196 + $0x1e8] sm:$0xff]
      %v267 = vld [vmem:[%s196 + $0x1f0] sm:$0xff]
      %v268 = vld [vmem:[%s196 + $0x1f8] sm:$0xff]
      %v269 = vld [vmem:[%s1] sm:$0xf]
      %v270 = vld [vmem:[%s1 + $0x4] sm:$0xf]
      %v271 = vld [vmem:[%s1 + $0x8] sm:$0xf]
      %v272 = vld [vmem:[%s1 + $0xc] sm:$0xf]
      %v273 = vld [vmem:[%s1 + $0x10] sm:$0xf]
      %v274 = vld [vmem:[%s1 + $0x14] sm:$0xf]
      %v275 = vld [vmem:[%s1 + $0x18] sm:$0xf]
      %v276 = vld [vmem:[%s1 + $0x1c] sm:$0xf]
      %v277 = vld [vmem:[%s1 + $0x20] sm:$0xf]
      %v278 = vld [vmem:[%s1 + $0x24] sm:$0xf]
      %v279 = vld [vmem:[%s1 + $0x28] sm:$0xf]
      %v280 = vld [vmem:[%s1 + $0x2c] sm:$0xf]
      %v281 = vld [vmem:[%s1 + $0x30] sm:$0xf]
      %v282 = vld [vmem:[%s1 + $0x34] sm:$0xf]
      %v283 = vld [vmem:[%s1 + $0x38] sm:$0xf]
      %v284 = vld [vmem:[%s1 + $0x3c] sm:$0xf]
      %v285 = vld [vmem:[%s1 + $0x40] sm:$0xf]
      %v286 = vld [vmem:[%s1 + $0x44] sm:$0xf]
      %v287 = vld [vmem:[%s1 + $0x48] sm:$0xf]
      %v288 = vld [vmem:[%s1 + $0x4c] sm:$0xf]
      %v289 = vld [vmem:[%s1 + $0x50] sm:$0xf]
      %v290 = vld [vmem:[%s1 + $0x54] sm:$0xf]
      %v291 = vld [vmem:[%s1 + $0x58] sm:$0xf]
      %v292 = vld [vmem:[%s1 + $0x5c] sm:$0xf]
      %v293 = vld [vmem:[%s1 + $0x60] sm:$0xf]
      %v294 = vld [vmem:[%s1 + $0x64] sm:$0xf]
      %v295 = vld [vmem:[%s1 + $0x68] sm:$0xf]
      %v296 = vld [vmem:[%s1 + $0x6c] sm:$0xf]
      %v297 = vld [vmem:[%s1 + $0x70] sm:$0xf]
      %v298 = vld [vmem:[%s1 + $0x74] sm:$0xf]
      %v299 = vld [vmem:[%s1 + $0x78] sm:$0xf]
      %v300 = vld [vmem:[%s1 + $0x7c] sm:$0xf]
      %v301 = vld [vmem:[%s1 + $0x80] sm:$0xf]
      %v302 = vld [vmem:[%s1 + $0x84] sm:$0xf]
      %v303 = vld [vmem:[%s1 + $0x88] sm:$0xf]
      %v304 = vld [vmem:[%s1 + $0x8c] sm:$0xf]
      %v305 = vld [vmem:[%s1 + $0x90] sm:$0xf]
      %v306 = vld [vmem:[%s1 + $0x94] sm:$0xf]
      %v307 = vld [vmem:[%s1 + $0x98] sm:$0xf]
      %v308 = vld [vmem:[%s1 + $0x9c] sm:$0xf]
      %v309 = vld [vmem:[%s1 + $0xa0] sm:$0xf]
      %v310 = vld [vmem:[%s1 + $0xa4] sm:$0xf]
      %v311 = vld [vmem:[%s1 + $0xa8] sm:$0xf]
      %v312 = vld [vmem:[%s1 + $0xac] sm:$0xf]
      %v313 = vld [vmem:[%s1 + $0xb0] sm:$0xf]
      %v314 = vld [vmem:[%s1 + $0xb4] sm:$0xf]
      %v315 = vld [vmem:[%s1 + $0xb8] sm:$0xf]
      %v316 = vld [vmem:[%s1 + $0xbc] sm:$0xf]
      %v317 = vld [vmem:[%s1 + $0xc0] sm:$0xf]
      %v318 = vld [vmem:[%s1 + $0xc4] sm:$0xf]
      %v319 = vld [vmem:[%s1 + $0xc8] sm:$0xf]
      %v320 = vld [vmem:[%s1 + $0xcc] sm:$0xf]
      %v321 = vld [vmem:[%s1 + $0xd0] sm:$0xf]
      %v322 = vld [vmem:[%s1 + $0xd4] sm:$0xf]
      %v323 = vld [vmem:[%s1 + $0xd8] sm:$0xf]
      %v324 = vld [vmem:[%s1 + $0xdc] sm:$0xf]
      %v325 = vld [vmem:[%s1 + $0xe0] sm:$0xf]
      %v326 = vld [vmem:[%s1 + $0xe4] sm:$0xf]
      %v327 = vld [vmem:[%s1 + $0xe8] sm:$0xf]
      %v328 = vld [vmem:[%s1 + $0xec] sm:$0xf]
      %v329 = vld [vmem:[%s1 + $0xf0] sm:$0xf]
      %v330 = vld [vmem:[%s1 + $0xf4] sm:$0xf]
      %v331 = vld [vmem:[%s1 + $0xf8] sm:$0xf]
      %v332 = vld [vmem:[%s1 + $0xfc] sm:$0xf]
      %v333 = vld [vmem:[%s3] sm:$0x1]
      %v335 = vlaneseq
      %v336 = vshrl.u32 %v335, 7
      %v337 = vsub.s32 0, %v336
      %v338 = vrot.slane %v333, %v337
      %v404 = vunpack.c.l.b16 %v205
      %v405 = vunpack.c.h.b16 %v205
      %v406 = vunpack.c.l.b16 %v206
      %v407 = vunpack.c.h.b16 %v206
      %v408 = vunpack.c.l.b16 %v207
      %v409 = vunpack.c.h.b16 %v207
      %v410 = vunpack.c.l.b16 %v208
      %v411 = vunpack.c.h.b16 %v208
      %v412 = vunpack.c.l.b16 %v209
      %v413 = vunpack.c.h.b16 %v209
      %v414 = vunpack.c.l.b16 %v210
      %v415 = vunpack.c.h.b16 %v210
      %v416 = vunpack.c.l.b16 %v211
      %v417 = vunpack.c.h.b16 %v211
      %v418 = vunpack.c.l.b16 %v212
      %v419 = vunpack.c.h.b16 %v212
      %v420 = vunpack.c.l.b16 %v213
      %v421 = vunpack.c.h.b16 %v213
      %v422 = vunpack.c.l.b16 %v214
      %v423 = vunpack.c.h.b16 %v214
      %v424 = vunpack.c.l.b16 %v215
      %v425 = vunpack.c.h.b16 %v215
      %v426 = vunpack.c.l.b16 %v216
      %v427 = vunpack.c.h.b16 %v216
      %v428 = vunpack.c.l.b16 %v217
      %v429 = vunpack.c.h.b16 %v217
      %v430 = vunpack.c.l.b16 %v218
      %v431 = vunpack.c.h.b16 %v218
      %v432 = vunpack.c.l.b16 %v219
      %v433 = vunpack.c.h.b16 %v219
      %v434 = vunpack.c.l.b16 %v220
      %v435 = vunpack.c.h.b16 %v220
      %v436 = vunpack.c.l.b16 %v221
      %v437 = vunpack.c.h.b16 %v221
      %v438 = vunpack.c.l.b16 %v222
      %v439 = vunpack.c.h.b16 %v222
      %v440 = vunpack.c.l.b16 %v223
      %v441 = vunpack.c.h.b16 %v223
      %v442 = vunpack.c.l.b16 %v224
      %v443 = vunpack.c.h.b16 %v224
      %v444 = vunpack.c.l.b16 %v225
      %v445 = vunpack.c.h.b16 %v225
      %v446 = vunpack.c.l.b16 %v226
      %v447 = vunpack.c.h.b16 %v226
      %v448 = vunpack.c.l.b16 %v227
      %v449 = vunpack.c.h.b16 %v227
      %v450 = vunpack.c.l.b16 %v228
      %v451 = vunpack.c.h.b16 %v228
      %v452 = vunpack.c.l.b16 %v229
      %v453 = vunpack.c.h.b16 %v229
      %v454 = vunpack.c.l.b16 %v230
      %v455 = vunpack.c.h.b16 %v230
      %v456 = vunpack.c.l.b16 %v231
      %v457 = vunpack.c.h.b16 %v231
      %v458 = vunpack.c.l.b16 %v232
      %v459 = vunpack.c.h.b16 %v232
      %v460 = vunpack.c.l.b16 %v233
      %v461 = vunpack.c.h.b16 %v233
      %v462 = vunpack.c.l.b16 %v234
      %v463 = vunpack.c.h.b16 %v234
      %v464 = vunpack.c.l.b16 %v235
      %v465 = vunpack.c.h.b16 %v235
      %v466 = vunpack.c.l.b16 %v236
      %v467 = vunpack.c.h.b16 %v236
      %v468 = vunpack.c.l.b16 %v237
      %v469 = vunpack.c.h.b16 %v237
      %v470 = vunpack.c.l.b16 %v238
      %v471 = vunpack.c.h.b16 %v238
      %v472 = vunpack.c.l.b16 %v239
      %v473 = vunpack.c.h.b16 %v239
      %v474 = vunpack.c.l.b16 %v240
      %v475 = vunpack.c.h.b16 %v240
      %v476 = vunpack.c.l.b16 %v241
      %v477 = vunpack.c.h.b16 %v241
      %v478 = vunpack.c.l.b16 %v242
      %v479 = vunpack.c.h.b16 %v242
      %v480 = vunpack.c.l.b16 %v243
      %v481 = vunpack.c.h.b16 %v243
      %v482 = vunpack.c.l.b16 %v244
      %v483 = vunpack.c.h.b16 %v244
      %v484 = vunpack.c.l.b16 %v245
      %v485 = vunpack.c.h.b16 %v245
      %v486 = vunpack.c.l.b16 %v246
      %v487 = vunpack.c.h.b16 %v246
      %v488 = vunpack.c.l.b16 %v247
      %v489 = vunpack.c.h.b16 %v247
      %v490 = vunpack.c.l.b16 %v248
      %v491 = vunpack.c.h.b16 %v248
      %v492 = vunpack.c.l.b16 %v249
      %v493 = vunpack.c.h.b16 %v249
      %v494 = vunpack.c.l.b16 %v250
      %v495 = vunpack.c.h.b16 %v250
      %v496 = vunpack.c.l.b16 %v251
      %v497 = vunpack.c.h.b16 %v251
      %v498 = vunpack.c.l.b16 %v252
      %v499 = vunpack.c.h.b16 %v252
      %v500 = vunpack.c.l.b16 %v253
      %v501 = vunpack.c.h.b16 %v253
      %v502 = vunpack.c.l.b16 %v254
      %v503 = vunpack.c.h.b16 %v254
      %v504 = vunpack.c.l.b16 %v255
      %v505 = vunpack.c.h.b16 %v255
      %v506 = vunpack.c.l.b16 %v256
      %v507 = vunpack.c.h.b16 %v256
      %v508 = vunpack.c.l.b16 %v257
      %v509 = vunpack.c.h.b16 %v257
      %v510 = vunpack.c.l.b16 %v258
      %v511 = vunpack.c.h.b16 %v258
      %v512 = vunpack.c.l.b16 %v259
      %v513 = vunpack.c.h.b16 %v259
      %v514 = vunpack.c.l.b16 %v260
      %v515 = vunpack.c.h.b16 %v260
      %v516 = vunpack.c.l.b16 %v261
      %v517 = vunpack.c.h.b16 %v261
      %v518 = vunpack.c.l.b16 %v262
      %v519 = vunpack.c.h.b16 %v262
      %v520 = vunpack.c.l.b16 %v263
      %v521 = vunpack.c.h.b16 %v263
      %v522 = vunpack.c.l.b16 %v264
      %v523 = vunpack.c.h.b16 %v264
      %v524 = vunpack.c.l.b16 %v265
      %v525 = vunpack.c.h.b16 %v265
      %v526 = vunpack.c.l.b16 %v266
      %v527 = vunpack.c.h.b16 %v266
      %v528 = vunpack.c.l.b16 %v267
      %v529 = vunpack.c.h.b16 %v267
      %v530 = vunpack.c.l.b16 %v268
      %v531 = vunpack.c.h.b16 %v268
      %v532 = vpack.c.b16 %v408, %v404
      %v533 = vpack.c.b16 %v409, %v405
      %v534 = vpack.c.b16 %v410, %v406
      %v535 = vpack.c.b16 %v411, %v407
      %v536 = vpack.c.b16 %v416, %v412
      %v537 = vpack.c.b16 %v417, %v413
      %v538 = vpack.c.b16 %v418, %v414
      %v539 = vpack.c.b16 %v419, %v415
      %v540 = vpack.c.b16 %v424, %v420
      %v541 = vpack.c.b16 %v425, %v421
      %v542 = vpack.c.b16 %v426, %v422
      %v543 = vpack.c.b16 %v427, %v423
      %v544 = vpack.c.b16 %v432, %v428
      %v545 = vpack.c.b16 %v433, %v429
      %v546 = vpack.c.b16 %v434, %v430
      %v547 = vpack.c.b16 %v435, %v431
      %v548 = vpack.c.b16 %v440, %v436
      %v549 = vpack.c.b16 %v441, %v437
      %v550 = vpack.c.b16 %v442, %v438
      %v551 = vpack.c.b16 %v443, %v439
      %v552 = vpack.c.b16 %v448, %v444
      %v553 = vpack.c.b16 %v449, %v445
      %v554 = vpack.c.b16 %v450, %v446
      %v555 = vpack.c.b16 %v451, %v447
      %v556 = vpack.c.b16 %v456, %v452
      %v557 = vpack.c.b16 %v457, %v453
      %v558 = vpack.c.b16 %v458, %v454
      %v559 = vpack.c.b16 %v459, %v455
      %v560 = vpack.c.b16 %v464, %v460
      %v561 = vpack.c.b16 %v465, %v461
      %v562 = vpack.c.b16 %v466, %v462
      %v563 = vpack.c.b16 %v467, %v463
      %v564 = vpack.c.b16 %v472, %v468
      %v565 = vpack.c.b16 %v473, %v469
      %v566 = vpack.c.b16 %v474, %v470
      %v567 = vpack.c.b16 %v475, %v471
      %v568 = vpack.c.b16 %v480, %v476
      %v569 = vpack.c.b16 %v481, %v477
      %v570 = vpack.c.b16 %v482, %v478
      %v571 = vpack.c.b16 %v483, %v479
      %v572 = vpack.c.b16 %v488, %v484
      %v573 = vpack.c.b16 %v489, %v485
      %v574 = vpack.c.b16 %v490, %v486
      %v575 = vpack.c.b16 %v491, %v487
      %v576 = vpack.c.b16 %v496, %v492
      %v577 = vpack.c.b16 %v497, %v493
      %v578 = vpack.c.b16 %v498, %v494
      %v579 = vpack.c.b16 %v499, %v495
      %v580 = vpack.c.b16 %v504, %v500
      %v581 = vpack.c.b16 %v505, %v501
      %v582 = vpack.c.b16 %v506, %v502
      %v583 = vpack.c.b16 %v507, %v503
      %v584 = vpack.c.b16 %v512, %v508
      %v585 = vpack.c.b16 %v513, %v509
      %v586 = vpack.c.b16 %v514, %v510
      %v587 = vpack.c.b16 %v515, %v511
      %v588 = vpack.c.b16 %v520, %v516
      %v589 = vpack.c.b16 %v521, %v517
      %v590 = vpack.c.b16 %v522, %v518
      %v591 = vpack.c.b16 %v523, %v519
      %v592 = vpack.c.b16 %v528, %v524
      %v593 = vpack.c.b16 %v529, %v525
      %v594 = vpack.c.b16 %v530, %v526
      %v595 = vpack.c.b16 %v531, %v527
      %v724 = vunpack.c.l.b16 %v269
      %v725 = vunpack.c.l.b16 %v270
      %v726 = vunpack.c.l.b16 %v271
      %v727 = vunpack.c.l.b16 %v272
      %v728 = vunpack.c.l.b16 %v273
      %v729 = vunpack.c.l.b16 %v274
      %v730 = vunpack.c.l.b16 %v275
      %v731 = vunpack.c.l.b16 %v276
      %v732 = vunpack.c.l.b16 %v277
      %v733 = vunpack.c.l.b16 %v278
      %v734 = vunpack.c.l.b16 %v279
      %v735 = vunpack.c.l.b16 %v280
      %v736 = vunpack.c.l.b16 %v281
      %v737 = vunpack.c.l.b16 %v282
      %v738 = vunpack.c.l.b16 %v283
      %v739 = vunpack.c.l.b16 %v284
      %v740 = vunpack.c.l.b16 %v285
      %v741 = vunpack.c.l.b16 %v286
      %v742 = vunpack.c.l.b16 %v287
      %v743 = vunpack.c.l.b16 %v288
      %v744 = vunpack.c.l.b16 %v289
      %v745 = vunpack.c.l.b16 %v290
      %v746 = vunpack.c.l.b16 %v291
      %v747 = vunpack.c.l.b16 %v292
      %v748 = vunpack.c.l.b16 %v293
      %v749 = vunpack.c.l.b16 %v294
      %v750 = vunpack.c.l.b16 %v295
      %v751 = vunpack.c.l.b16 %v296
      %v752 = vunpack.c.l.b16 %v297
      %v753 = vunpack.c.l.b16 %v298
      %v754 = vunpack.c.l.b16 %v299
      %v755 = vunpack.c.l.b16 %v300
      %v756 = vunpack.c.l.b16 %v301
      %v757 = vunpack.c.l.b16 %v302
      %v758 = vunpack.c.l.b16 %v303
      %v759 = vunpack.c.l.b16 %v304
      %v760 = vunpack.c.l.b16 %v305
      %v761 = vunpack.c.l.b16 %v306
      %v762 = vunpack.c.l.b16 %v307
      %v763 = vunpack.c.l.b16 %v308
      %v764 = vunpack.c.l.b16 %v309
      %v765 = vunpack.c.l.b16 %v310
      %v766 = vunpack.c.l.b16 %v311
      %v767 = vunpack.c.l.b16 %v312
      %v768 = vunpack.c.l.b16 %v313
      %v769 = vunpack.c.l.b16 %v314
      %v770 = vunpack.c.l.b16 %v315
      %v771 = vunpack.c.l.b16 %v316
      %v772 = vunpack.c.l.b16 %v317
      %v773 = vunpack.c.l.b16 %v318
      %v774 = vunpack.c.l.b16 %v319
      %v775 = vunpack.c.l.b16 %v320
      %v776 = vunpack.c.l.b16 %v321
      %v777 = vunpack.c.l.b16 %v322
      %v778 = vunpack.c.l.b16 %v323
      %v779 = vunpack.c.l.b16 %v324
      %v780 = vunpack.c.l.b16 %v325
      %v781 = vunpack.c.l.b16 %v326
      %v782 = vunpack.c.l.b16 %v327
      %v783 = vunpack.c.l.b16 %v328
      %v784 = vunpack.c.l.b16 %v329
      %v785 = vunpack.c.l.b16 %v330
      %v786 = vunpack.c.l.b16 %v331
      %v787 = vunpack.c.l.b16 %v332
      %v788 = vpack.c.b16 %v725, %v724
      %v789 = vpack.c.b16 %v727, %v726
      %v790 = vpack.c.b16 %v729, %v728
      %v791 = vpack.c.b16 %v731, %v730
      %v792 = vpack.c.b16 %v733, %v732
      %v793 = vpack.c.b16 %v735, %v734
      %v794 = vpack.c.b16 %v737, %v736
      %v795 = vpack.c.b16 %v739, %v738
      %v796 = vpack.c.b16 %v741, %v740
      %v797 = vpack.c.b16 %v743, %v742
      %v798 = vpack.c.b16 %v745, %v744
      %v799 = vpack.c.b16 %v747, %v746
      %v800 = vpack.c.b16 %v749, %v748
      %v801 = vpack.c.b16 %v751, %v750
      %v802 = vpack.c.b16 %v753, %v752
      %v803 = vpack.c.b16 %v755, %v754
      %v804 = vpack.c.b16 %v757, %v756
      %v805 = vpack.c.b16 %v759, %v758
      %v806 = vpack.c.b16 %v761, %v760
      %v807 = vpack.c.b16 %v763, %v762
      %v808 = vpack.c.b16 %v765, %v764
      %v809 = vpack.c.b16 %v767, %v766
      %v810 = vpack.c.b16 %v769, %v768
      %v811 = vpack.c.b16 %v771, %v770
      %v812 = vpack.c.b16 %v773, %v772
      %v813 = vpack.c.b16 %v775, %v774
      %v814 = vpack.c.b16 %v777, %v776
      %v815 = vpack.c.b16 %v779, %v778
      %v816 = vpack.c.b16 %v781, %v780
      %v817 = vpack.c.b16 %v783, %v782
      %v818 = vpack.c.b16 %v785, %v784
      %v819 = vpack.c.b16 %v787, %v786
      %852 = vmatprep.subr.bf16.mxu0 0
      %853 = vmatpush1.bf16.msra.mxu0 %v795
      %854 = vmatprep.subr.bf16.mxu0 0
      %855 = vmatpush1.bf16.msra.mxu0 %v794
      %856 = vmatprep.subr.bf16.mxu0 0
      %857 = vmatpush1.bf16.msra.mxu0 %v793
      %858 = vmatprep.subr.bf16.mxu0 0
      %859 = vmatpush1.bf16.msra.mxu0 %v792
      %860 = vmatprep.subr.bf16.mxu0 0
      %861 = vmatpush1.bf16.msra.mxu0 %v791
      %862 = vmatprep.subr.bf16.mxu0 0
      %863 = vmatpush1.bf16.msra.mxu0 %v790
      %864 = vmatprep.subr.bf16.mxu0 0
      %865 = vmatpush1.bf16.msra.mxu0 %v789
      %866 = vmatprep.subr.bf16.mxu0 0
      %867 = vmatpush1.bf16.msra.mxu0 %v788
      %868 = vmatprep.subr.bf16.mxu0 0
      %869 = vmatpush2.bf16.msra.mxu0 %v803
      %870 = vmatprep.subr.bf16.mxu0 0
      %871 = vmatpush2.bf16.msra.mxu0 %v802
      %872 = vmatprep.subr.bf16.mxu0 0
      %873 = vmatpush2.bf16.msra.mxu0 %v801
      %874 = vmatprep.subr.bf16.mxu0 0
      %875 = vmatpush2.bf16.msra.mxu0 %v800
      %876 = vmatprep.subr.bf16.mxu0 0
      %877 = vmatpush2.bf16.msra.mxu0 %v799
      %878 = vmatprep.subr.bf16.mxu0 0
      %879 = vmatpush2.bf16.msra.mxu0 %v798
      %880 = vmatprep.subr.bf16.mxu0 0
      %881 = vmatpush2.bf16.msra.mxu0 %v797
      %882 = vmatprep.subr.bf16.mxu0 0
      %883 = vmatpush2.bf16.msra.mxu0 %v796
      %884 = vmatprep.mubr.bf16.mxu0 %v533
      %885 = vmatmul.mubr.bf16.gmra.mxu0 %v532
      %v886 = vpop.f32.mrf.mxu0
      %v887 = vadd.f32 %v338, %v886
      %v888 = vpop.f32.mrf.mxu0
      %v889 = vpop.f32.mrf.mxu0
      %v890 = vadd.f32 %v338, %v889
      %v891 = vpop.f32.mrf.mxu0
      %892 = vmatprep.mubr.bf16.mxu0 %v537
      %893 = vmatmul.mubr.bf16.gmra.mxu0 %v536
      %v894 = vpop.f32.mrf.mxu0
      %v895 = vadd.f32 %v338, %v894
      %v896 = vpop.f32.mrf.mxu0
      %v897 = vpop.f32.mrf.mxu0
      %v898 = vadd.f32 %v338, %v897
      %v899 = vpop.f32.mrf.mxu0
      %900 = vmatprep.mubr.bf16.mxu0 %v541
      %901 = vmatmul.mubr.bf16.gmra.mxu0 %v540
      %v902 = vpop.f32.mrf.mxu0
      %v903 = vadd.f32 %v338, %v902
      %v904 = vpop.f32.mrf.mxu0
      %v905 = vpop.f32.mrf.mxu0
      %v906 = vadd.f32 %v338, %v905
      %v907 = vpop.f32.mrf.mxu0
      %908 = vmatprep.mubr.bf16.mxu0 %v545
      %909 = vmatmul.mubr.bf16.gmra.mxu0 %v544
      %v910 = vpop.f32.mrf.mxu0
      %v911 = vadd.f32 %v338, %v910
      %v912 = vpop.f32.mrf.mxu0
      %v913 = vpop.f32.mrf.mxu0
      %v914 = vadd.f32 %v338, %v913
      %v915 = vpop.f32.mrf.mxu0
      %916 = vmatprep.mubr.bf16.mxu0 %v549
      %917 = vmatmul.mubr.bf16.gmra.mxu0 %v548
      %v918 = vpop.f32.mrf.mxu0
      %v919 = vadd.f32 %v338, %v918
      %v920 = vpop.f32.mrf.mxu0
      %v921 = vpop.f32.mrf.mxu0
      %v922 = vadd.f32 %v338, %v921
      %v923 = vpop.f32.mrf.mxu0
      %924 = vmatprep.mubr.bf16.mxu0 %v553
      %925 = vmatmul.mubr.bf16.gmra.mxu0 %v552
      %v926 = vpop.f32.mrf.mxu0
      %v927 = vadd.f32 %v338, %v926
      %v928 = vpop.f32.mrf.mxu0
      %v929 = vpop.f32.mrf.mxu0
      %v930 = vadd.f32 %v338, %v929
      %v931 = vpop.f32.mrf.mxu0
      %932 = vmatprep.mubr.bf16.mxu0 %v557
      %933 = vmatmul.mubr.bf16.gmra.mxu0 %v556
      %v934 = vpop.f32.mrf.mxu0
      %v935 = vadd.f32 %v338, %v934
      %v936 = vpop.f32.mrf.mxu0
      %v937 = vpop.f32.mrf.mxu0
      %v938 = vadd.f32 %v338, %v937
      %v939 = vpop.f32.mrf.mxu0
      %940 = vmatprep.mubr.bf16.mxu0 %v561
      %941 = vmatmul.mubr.bf16.gmra.mxu0 %v560
      %v942 = vpop.f32.mrf.mxu0
      %v943 = vadd.f32 %v338, %v942
      %v944 = vpop.f32.mrf.mxu0
      %v945 = vpop.f32.mrf.mxu0
      %v946 = vadd.f32 %v338, %v945
      %v947 = vpop.f32.mrf.mxu0
      %948 = vmatprep.mubr.bf16.mxu0 %v565
      %949 = vmatmul.mubr.bf16.gmra.mxu0 %v564
      %v950 = vpop.f32.mrf.mxu0
      %v951 = vadd.f32 %v338, %v950
      %v952 = vpop.f32.mrf.mxu0
      %v953 = vpop.f32.mrf.mxu0
      %v954 = vadd.f32 %v338, %v953
      %v955 = vpop.f32.mrf.mxu0
      %956 = vmatprep.mubr.bf16.mxu0 %v569
      %957 = vmatmul.mubr.bf16.gmra.mxu0 %v568
      %v958 = vpop.f32.mrf.mxu0
      %v959 = vadd.f32 %v338, %v958
      %v960 = vpop.f32.mrf.mxu0
      %v961 = vpop.f32.mrf.mxu0
      %v962 = vadd.f32 %v338, %v961
      %v963 = vpop.f32.mrf.mxu0
      %964 = vmatprep.mubr.bf16.mxu0 %v573
      %965 = vmatmul.mubr.bf16.gmra.mxu0 %v572
      %v966 = vpop.f32.mrf.mxu0
      %v967 = vadd.f32 %v338, %v966
      %v968 = vpop.f32.mrf.mxu0
      %v969 = vpop.f32.mrf.mxu0
      %v970 = vadd.f32 %v338, %v969
      %v971 = vpop.f32.mrf.mxu0
      %972 = vmatprep.mubr.bf16.mxu0 %v577
      %973 = vmatmul.mubr.bf16.gmra.mxu0 %v576
      %v974 = vpop.f32.mrf.mxu0
      %v975 = vadd.f32 %v338, %v974
      %v976 = vpop.f32.mrf.mxu0
      %v977 = vpop.f32.mrf.mxu0
      %v978 = vadd.f32 %v338, %v977
      %v979 = vpop.f32.mrf.mxu0
      %980 = vmatprep.mubr.bf16.mxu0 %v581
      %981 = vmatmul.mubr.bf16.gmra.mxu0 %v580
      %v982 = vpop.f32.mrf.mxu0
      %v983 = vadd.f32 %v338, %v982
      %v984 = vpop.f32.mrf.mxu0
      %v985 = vpop.f32.mrf.mxu0
      %v986 = vadd.f32 %v338, %v985
      %v987 = vpop.f32.mrf.mxu0
      %988 = vmatprep.mubr.bf16.mxu0 %v585
      %989 = vmatmul.mubr.bf16.gmra.mxu0 %v584
      %v990 = vpop.f32.mrf.mxu0
      %v991 = vadd.f32 %v338, %v990
      %v992 = vpop.f32.mrf.mxu0
      %v993 = vpop.f32.mrf.mxu0
      %v994 = vadd.f32 %v338, %v993
      %v995 = vpop.f32.mrf.mxu0
      %996 = vmatprep.mubr.bf16.mxu0 %v589
      %997 = vmatmul.mubr.bf16.gmra.mxu0 %v588
      %v998 = vpop.f32.mrf.mxu0
      %v999 = vadd.f32 %v338, %v998
      %v1000 = vpop.f32.mrf.mxu0
      %v1001 = vpop.f32.mrf.mxu0
      %v1002 = vadd.f32 %v338, %v1001
      %v1003 = vpop.f32.mrf.mxu0
      %1004 = vmatprep.mubr.bf16.mxu0 %v593
      %1005 = vmatmul.mubr.bf16.gmra.mxu0 %v592
      %v1006 = vpop.f32.mrf.mxu0
      %v1007 = vadd.f32 %v338, %v1006
      %v1008 = vpop.f32.mrf.mxu0
      %v1009 = vpop.f32.mrf.mxu0
      %v1010 = vadd.f32 %v338, %v1009
      %v1011 = vpop.f32.mrf.mxu0
      %1012 = vdwg.mxu0
      %1013 = vmatprep.subr.bf16.mxu0 0
      %1014 = vmatpush1.bf16.msra.mxu0 %v811
      %1015 = vmatprep.subr.bf16.mxu0 0
      %1016 = vmatpush1.bf16.msra.mxu0 %v810
      %1017 = vmatprep.subr.bf16.mxu0 0
      %1018 = vmatpush1.bf16.msra.mxu0 %v809
      %1019 = vmatprep.subr.bf16.mxu0 0
      %1020 = vmatpush1.bf16.msra.mxu0 %v808
      %1021 = vmatprep.subr.bf16.mxu0 0
      %1022 = vmatpush1.bf16.msra.mxu0 %v807
      %1023 = vmatprep.subr.bf16.mxu0 0
      %1024 = vmatpush1.bf16.msra.mxu0 %v806
      %1025 = vmatprep.subr.bf16.mxu0 0
      %1026 = vmatpush1.bf16.msra.mxu0 %v805
      %1027 = vmatprep.subr.bf16.mxu0 0
      %1028 = vmatpush1.bf16.msra.mxu0 %v804
      %1029 = vmatprep.subr.bf16.mxu0 0
      %1030 = vmatpush2.bf16.msra.mxu0 %v819
      %1031 = vmatprep.subr.bf16.mxu0 0
      %1032 = vmatpush2.bf16.msra.mxu0 %v818
      %1033 = vmatprep.subr.bf16.mxu0 0
      %1034 = vmatpush2.bf16.msra.mxu0 %v817
      %1035 = vmatprep.subr.bf16.mxu0 0
      %1036 = vmatpush2.bf16.msra.mxu0 %v816
      %1037 = vmatprep.subr.bf16.mxu0 0
      %1038 = vmatpush2.bf16.msra.mxu0 %v815
      %1039 = vmatprep.subr.bf16.mxu0 0
      %1040 = vmatpush2.bf16.msra.mxu0 %v814
      %1041 = vmatprep.subr.bf16.mxu0 0
      %1042 = vmatpush2.bf16.msra.mxu0 %v813
      %1043 = vmatprep.subr.bf16.mxu0 0
      %1044 = vmatpush2.bf16.msra.mxu0 %v812
      %1045 = vmatprep.mubr.bf16.mxu0 %v535
      %1046 = vmatmul.mubr.bf16.gmra.mxu0 %v534
      %v1047 = vpop.f32.mrf.mxu0
      %v1048 = vadd.f32 %v887, %v1047
      %v1049 = vpop.f32.mrf.mxu0
      %v1050 = vpop.f32.mrf.mxu0
      %v1051 = vadd.f32 %v890, %v1050
      %v1052 = vpop.f32.mrf.mxu0
      %1053 = vmatprep.mubr.bf16.mxu0 %v539
      %1054 = vmatmul.mubr.bf16.gmra.mxu0 %v538
      %v1055 = vpop.f32.mrf.mxu0
      %v1056 = vadd.f32 %v895, %v1055
      %v1057 = vpop.f32.mrf.mxu0
      %v1058 = vpop.f32.mrf.mxu0
      %v1059 = vadd.f32 %v898, %v1058
      %v1060 = vpop.f32.mrf.mxu0
      %1061 = vmatprep.mubr.bf16.mxu0 %v543
      %1062 = vmatmul.mubr.bf16.gmra.mxu0 %v542
      %v1063 = vpop.f32.mrf.mxu0
      %v1064 = vadd.f32 %v903, %v1063
      %v1065 = vpop.f32.mrf.mxu0
      %v1066 = vpop.f32.mrf.mxu0
      %v1067 = vadd.f32 %v906, %v1066
      %v1068 = vpop.f32.mrf.mxu0
      %1069 = vmatprep.mubr.bf16.mxu0 %v547
      %1070 = vmatmul.mubr.bf16.gmra.mxu0 %v546
      %v1071 = vpop.f32.mrf.mxu0
      %v1072 = vadd.f32 %v911, %v1071
      %v1073 = vpop.f32.mrf.mxu0
      %v1074 = vpop.f32.mrf.mxu0
      %v1075 = vadd.f32 %v914, %v1074
      %v1076 = vpop.f32.mrf.mxu0
      %1077 = vmatprep.mubr.bf16.mxu0 %v551
      %1078 = vmatmul.mubr.bf16.gmra.mxu0 %v550
      %v1079 = vpop.f32.mrf.mxu0
      %v1080 = vadd.f32 %v919, %v1079
      %v1081 = vpop.f32.mrf.mxu0
      %v1082 = vpop.f32.mrf.mxu0
      %v1083 = vadd.f32 %v922, %v1082
      %v1084 = vpop.f32.mrf.mxu0
      %1085 = vmatprep.mubr.bf16.mxu0 %v555
      %1086 = vmatmul.mubr.bf16.gmra.mxu0 %v554
      %v1087 = vpop.f32.mrf.mxu0
      %v1088 = vadd.f32 %v927, %v1087
      %v1089 = vpop.f32.mrf.mxu0
      %v1090 = vpop.f32.mrf.mxu0
      %v1091 = vadd.f32 %v930, %v1090
      %v1092 = vpop.f32.mrf.mxu0
      %1093 = vmatprep.mubr.bf16.mxu0 %v559
      %1094 = vmatmul.mubr.bf16.gmra.mxu0 %v558
      %v1095 = vpop.f32.mrf.mxu0
      %v1096 = vadd.f32 %v935, %v1095
      %v1097 = vpop.f32.mrf.mxu0
      %v1098 = vpop.f32.mrf.mxu0
      %v1099 = vadd.f32 %v938, %v1098
      %v1100 = vpop.f32.mrf.mxu0
      %1101 = vmatprep.mubr.bf16.mxu0 %v563
      %1102 = vmatmul.mubr.bf16.gmra.mxu0 %v562
      %v1103 = vpop.f32.mrf.mxu0
      %v1104 = vadd.f32 %v943, %v1103
      %v1105 = vpop.f32.mrf.mxu0
      %v1106 = vpop.f32.mrf.mxu0
      %v1107 = vadd.f32 %v946, %v1106
      %v1108 = vpop.f32.mrf.mxu0
      %1109 = vmatprep.mubr.bf16.mxu0 %v567
      %1110 = vmatmul.mubr.bf16.gmra.mxu0 %v566
      %v1111 = vpop.f32.mrf.mxu0
      %v1112 = vadd.f32 %v951, %v1111
      %v1113 = vpop.f32.mrf.mxu0
      %v1114 = vpop.f32.mrf.mxu0
      %v1115 = vadd.f32 %v954, %v1114
      %v1116 = vpop.f32.mrf.mxu0
      %1117 = vmatprep.mubr.bf16.mxu0 %v571
      %1118 = vmatmul.mubr.bf16.gmra.mxu0 %v570
      %v1119 = vpop.f32.mrf.mxu0
      %v1120 = vadd.f32 %v959, %v1119
      %v1121 = vpop.f32.mrf.mxu0
      %v1122 = vpop.f32.mrf.mxu0
      %v1123 = vadd.f32 %v962, %v1122
      %v1124 = vpop.f32.mrf.mxu0
      %1125 = vmatprep.mubr.bf16.mxu0 %v575
      %1126 = vmatmul.mubr.bf16.gmra.mxu0 %v574
      %v1127 = vpop.f32.mrf.mxu0
      %v1128 = vadd.f32 %v967, %v1127
      %v1129 = vpop.f32.mrf.mxu0
      %v1130 = vpop.f32.mrf.mxu0
      %v1131 = vadd.f32 %v970, %v1130
      %v1132 = vpop.f32.mrf.mxu0
      %1133 = vmatprep.mubr.bf16.mxu0 %v579
      %1134 = vmatmul.mubr.bf16.gmra.mxu0 %v578
      %v1135 = vpop.f32.mrf.mxu0
      %v1136 = vadd.f32 %v975, %v1135
      %v1137 = vpop.f32.mrf.mxu0
      %v1138 = vpop.f32.mrf.mxu0
      %v1139 = vadd.f32 %v978, %v1138
      %v1140 = vpop.f32.mrf.mxu0
      %1141 = vmatprep.mubr.bf16.mxu0 %v583
      %1142 = vmatmul.mubr.bf16.gmra.mxu0 %v582
      %v1143 = vpop.f32.mrf.mxu0
      %v1144 = vadd.f32 %v983, %v1143
      %v1145 = vpop.f32.mrf.mxu0
      %v1146 = vpop.f32.mrf.mxu0
      %v1147 = vadd.f32 %v986, %v1146
      %v1148 = vpop.f32.mrf.mxu0
      %1149 = vmatprep.mubr.bf16.mxu0 %v587
      %1150 = vmatmul.mubr.bf16.gmra.mxu0 %v586
      %v1151 = vpop.f32.mrf.mxu0
      %v1152 = vadd.f32 %v991, %v1151
      %v1153 = vpop.f32.mrf.mxu0
      %v1154 = vpop.f32.mrf.mxu0
      %v1155 = vadd.f32 %v994, %v1154
      %v1156 = vpop.f32.mrf.mxu0
      %1157 = vmatprep.mubr.bf16.mxu0 %v591
      %1158 = vmatmul.mubr.bf16.gmra.mxu0 %v590
      %v1159 = vpop.f32.mrf.mxu0
      %v1160 = vadd.f32 %v999, %v1159
      %v1161 = vpop.f32.mrf.mxu0
      %v1162 = vpop.f32.mrf.mxu0
      %v1163 = vadd.f32 %v1002, %v1162
      %v1164 = vpop.f32.mrf.mxu0
      %1165 = vmatprep.mubr.bf16.mxu0 %v595
      %1166 = vmatmul.mubr.bf16.gmra.mxu0 %v594
      %v1167 = vpop.f32.mrf.mxu0
      %v1168 = vadd.f32 %v1007, %v1167
      %v1169 = vpop.f32.mrf.mxu0
      %v1170 = vpop.f32.mrf.mxu0
      %v1171 = vadd.f32 %v1010, %v1170
      %v1172 = vpop.f32.mrf.mxu0
      %1173 = vdwg.mxu0
      %vm1174 = vcmp.gt.f32.partialorder %v1048, 0.0
      %vm1175 = vcmp.gt.f32.partialorder %v1051, 0.0
      %vm1176 = vcmp.gt.f32.partialorder %v1056, 0.0
      %vm1177 = vcmp.gt.f32.partialorder %v1059, 0.0
      %vm1178 = vcmp.gt.f32.partialorder %v1064, 0.0
      %vm1179 = vcmp.gt.f32.partialorder %v1067, 0.0
      %vm1180 = vcmp.gt.f32.partialorder %v1072, 0.0
      %vm1181 = vcmp.gt.f32.partialorder %v1075, 0.0
      %vm1182 = vcmp.gt.f32.partialorder %v1080, 0.0
      %vm1183 = vcmp.gt.f32.partialorder %v1083, 0.0
      %vm1184 = vcmp.gt.f32.partialorder %v1088, 0.0
      %vm1185 = vcmp.gt.f32.partialorder %v1091, 0.0
      %vm1186 = vcmp.gt.f32.partialorder %v1096, 0.0
      %vm1187 = vcmp.gt.f32.partialorder %v1099, 0.0
      %vm1188 = vcmp.gt.f32.partialorder %v1104, 0.0
      %vm1189 = vcmp.gt.f32.partialorder %v1107, 0.0
      %vm1190 = vcmp.gt.f32.partialorder %v1112, 0.0
      %vm1191 = vcmp.gt.f32.partialorder %v1115, 0.0
      %vm1192 = vcmp.gt.f32.partialorder %v1120, 0.0
      %vm1193 = vcmp.gt.f32.partialorder %v1123, 0.0
      %vm1194 = vcmp.gt.f32.partialorder %v1128, 0.0
      %vm1195 = vcmp.gt.f32.partialorder %v1131, 0.0
      %vm1196 = vcmp.gt.f32.partialorder %v1136, 0.0
      %vm1197 = vcmp.gt.f32.partialorder %v1139, 0.0
      %vm1198 = vcmp.gt.f32.partialorder %v1144, 0.0
      %vm1199 = vcmp.gt.f32.partialorder %v1147, 0.0
      %vm1200 = vcmp.gt.f32.partialorder %v1152, 0.0
      %vm1201 = vcmp.gt.f32.partialorder %v1155, 0.0
      %vm1202 = vcmp.gt.f32.partialorder %v1160, 0.0
      %vm1203 = vcmp.gt.f32.partialorder %v1163, 0.0
      %vm1204 = vcmp.gt.f32.partialorder %v1168, 0.0
      %vm1205 = vcmp.gt.f32.partialorder %v1171, 0.0
      %v1206 = vmul.f32 %v1048, 1.442695
      %v1207 = vpow.pop %v1206
      %v1208 = vmul.f32 %v1051, 1.442695
      %v1209 = vpow.pop %v1208
      %v1210 = vmul.f32 %v1056, 1.442695
      %v1211 = vpow.pop %v1210
      %v1212 = vmul.f32 %v1059, 1.442695
      %v1213 = vpow.pop %v1212
      %v1214 = vmul.f32 %v1064, 1.442695
      %v1215 = vpow.pop %v1214
      %v1216 = vmul.f32 %v1067, 1.442695
      %v1217 = vpow.pop %v1216
      %v1218 = vmul.f32 %v1072, 1.442695
      %v1219 = vpow.pop %v1218
      %v1220 = vmul.f32 %v1075, 1.442695
      %v1221 = vpow.pop %v1220
      %v1222 = vmul.f32 %v1080, 1.442695
      %v1223 = vpow.pop %v1222
      %v1224 = vmul.f32 %v1083, 1.442695
      %v1225 = vpow.pop %v1224
      %v1226 = vmul.f32 %v1088, 1.442695
      %v1227 = vpow.pop %v1226
      %v1228 = vmul.f32 %v1091, 1.442695
      %v1229 = vpow.pop %v1228
      %v1230 = vmul.f32 %v1096, 1.442695
      %v1231 = vpow.pop %v1230
      %v1232 = vmul.f32 %v1099, 1.442695
      %v1233 = vpow.pop %v1232
      %v1234 = vmul.f32 %v1104, 1.442695
      %v1235 = vpow.pop %v1234
      %v1236 = vmul.f32 %v1107, 1.442695
      %v1237 = vpow.pop %v1236
      %v1238 = vmul.f32 %v1112, 1.442695
      %v1239 = vpow.pop %v1238
      %v1240 = vmul.f32 %v1115, 1.442695
      %v1241 = vpow.pop %v1240
      %v1242 = vmul.f32 %v1120, 1.442695
      %v1243 = vpow.pop %v1242
      %v1244 = vmul.f32 %v1123, 1.442695
      %v1245 = vpow.pop %v1244
      %v1246 = vmul.f32 %v1128, 1.442695
      %v1247 = vpow.pop %v1246
      %v1248 = vmul.f32 %v1131, 1.442695
      %v1249 = vpow.pop %v1248
      %v1250 = vmul.f32 %v1136, 1.442695
      %v1251 = vpow.pop %v1250
      %v1252 = vmul.f32 %v1139, 1.442695
      %v1253 = vpow.pop %v1252
      %v1254 = vmul.f32 %v1144, 1.442695
      %v1255 = vpow.pop %v1254
      %v1256 = vmul.f32 %v1147, 1.442695
      %v1257 = vpow.pop %v1256
      %v1258 = vmul.f32 %v1152, 1.442695
      %v1259 = vpow.pop %v1258
      %v1260 = vmul.f32 %v1155, 1.442695
      %v1261 = vpow.pop %v1260
      %v1262 = vmul.f32 %v1160, 1.442695
      %v1263 = vpow.pop %v1262
      %v1264 = vmul.f32 %v1163, 1.442695
      %v1265 = vpow.pop %v1264
      %v1266 = vmul.f32 %v1168, 1.442695
      %v1267 = vpow.pop %v1266
      %v1268 = vmul.f32 %v1171, 1.442695
      %v1269 = vpow.pop %v1268
      %v1270 = vsub.f32 %v1207, 1.0
      %v1271 = vsub.f32 %v1209, 1.0
      %v1272 = vsub.f32 %v1211, 1.0
      %v1273 = vsub.f32 %v1213, 1.0
      %v1274 = vsub.f32 %v1215, 1.0
      %v1275 = vsub.f32 %v1217, 1.0
      %v1276 = vsub.f32 %v1219, 1.0
      %v1277 = vsub.f32 %v1221, 1.0
      %v1278 = vsub.f32 %v1223, 1.0
      %v1279 = vsub.f32 %v1225, 1.0
      %v1280 = vsub.f32 %v1227, 1.0
      %v1281 = vsub.f32 %v1229, 1.0
      %v1282 = vsub.f32 %v1231, 1.0
      %v1283 = vsub.f32 %v1233, 1.0
      %v1284 = vsub.f32 %v1235, 1.0
      %v1285 = vsub.f32 %v1237, 1.0
      %v1286 = vsub.f32 %v1239, 1.0
      %v1287 = vsub.f32 %v1241, 1.0
      %v1288 = vsub.f32 %v1243, 1.0
      %v1289 = vsub.f32 %v1245, 1.0
      %v1290 = vsub.f32 %v1247, 1.0
      %v1291 = vsub.f32 %v1249, 1.0
      %v1292 = vsub.f32 %v1251, 1.0
      %v1293 = vsub.f32 %v1253, 1.0
      %v1294 = vsub.f32 %v1255, 1.0
      %v1295 = vsub.f32 %v1257, 1.0
      %v1296 = vsub.f32 %v1259, 1.0
      %v1297 = vsub.f32 %v1261, 1.0
      %v1298 = vsub.f32 %v1263, 1.0
      %v1299 = vsub.f32 %v1265, 1.0
      %v1300 = vsub.f32 %v1267, 1.0
      %v1301 = vsub.f32 %v1269, 1.0
      %v1302 = vmul.f32 %v1270, 1.6732632
      %v1303 = vmul.f32 %v1271, 1.6732632
      %v1304 = vmul.f32 %v1272, 1.6732632
      %v1305 = vmul.f32 %v1273, 1.6732632
      %v1306 = vmul.f32 %v1274, 1.6732632
      %v1307 = vmul.f32 %v1275, 1.6732632
      %v1308 = vmul.f32 %v1276, 1.6732632
      %v1309 = vmul.f32 %v1277, 1.6732632
      %v1310 = vmul.f32 %v1278, 1.6732632
      %v1311 = vmul.f32 %v1279, 1.6732632
      %v1312 = vmul.f32 %v1280, 1.6732632
      %v1313 = vmul.f32 %v1281, 1.6732632
      %v1314 = vmul.f32 %v1282, 1.6732632
      %v1315 = vmul.f32 %v1283, 1.6732632
      %v1316 = vmul.f32 %v1284, 1.6732632
      %v1317 = vmul.f32 %v1285, 1.6732632
      %v1318 = vmul.f32 %v1286, 1.6732632
      %v1319 = vmul.f32 %v1287, 1.6732632
      %v1320 = vmul.f32 %v1288, 1.6732632
      %v1321 = vmul.f32 %v1289, 1.6732632
      %v1322 = vmul.f32 %v1290, 1.6732632
      %v1323 = vmul.f32 %v1291, 1.6732632
      %v1324 = vmul.f32 %v1292, 1.6732632
      %v1325 = vmul.f32 %v1293, 1.6732632
      %v1326 = vmul.f32 %v1294, 1.6732632
      %v1327 = vmul.f32 %v1295, 1.6732632
      %v1328 = vmul.f32 %v1296, 1.6732632
      %v1329 = vmul.f32 %v1297, 1.6732632
      %v1330 = vmul.f32 %v1298, 1.6732632
      %v1331 = vmul.f32 %v1299, 1.6732632
      %v1332 = vmul.f32 %v1300, 1.6732632
      %v1333 = vmul.f32 %v1301, 1.6732632
      %v1334 = vsel %vm1174, %v1048, %v1302
      %v1335 = vsel %vm1175, %v1051, %v1303
      %v1336 = vsel %vm1176, %v1056, %v1304
      %v1337 = vsel %vm1177, %v1059, %v1305
      %v1338 = vsel %vm1178, %v1064, %v1306
      %v1339 = vsel %vm1179, %v1067, %v1307
      %v1340 = vsel %vm1180, %v1072, %v1308
      %v1341 = vsel %vm1181, %v1075, %v1309
      %v1342 = vsel %vm1182, %v1080, %v1310
      %v1343 = vsel %vm1183, %v1083, %v1311
      %v1344 = vsel %vm1184, %v1088, %v1312
      %v1345 = vsel %vm1185, %v1091, %v1313
      %v1346 = vsel %vm1186, %v1096, %v1314
      %v1347 = vsel %vm1187, %v1099, %v1315
      %v1348 = vsel %vm1188, %v1104, %v1316
      %v1349 = vsel %vm1189, %v1107, %v1317
      %v1350 = vsel %vm1190, %v1112, %v1318
      %v1351 = vsel %vm1191, %v1115, %v1319
      %v1352 = vsel %vm1192, %v1120, %v1320
      %v1353 = vsel %vm1193, %v1123, %v1321
      %v1354 = vsel %vm1194, %v1128, %v1322
      %v1355 = vsel %vm1195, %v1131, %v1323
      %v1356 = vsel %vm1196, %v1136, %v1324
      %v1357 = vsel %vm1197, %v1139, %v1325
      %v1358 = vsel %vm1198, %v1144, %v1326
      %v1359 = vsel %vm1199, %v1147, %v1327
      %v1360 = vsel %vm1200, %v1152, %v1328
      %v1361 = vsel %vm1201, %v1155, %v1329
      %v1362 = vsel %vm1202, %v1160, %v1330
      %v1363 = vsel %vm1203, %v1163, %v1331
      %v1364 = vsel %vm1204, %v1168, %v1332
      %v1365 = vsel %vm1205, %v1171, %v1333
      %v1366 = vmul.f32 %v1334, 1.050701
      %v1367 = vmul.f32 %v1335, 1.050701
      %v1368 = vmul.f32 %v1336, 1.050701
      %v1369 = vmul.f32 %v1337, 1.050701
      %v1370 = vmul.f32 %v1338, 1.050701
      %v1371 = vmul.f32 %v1339, 1.050701
      %v1372 = vmul.f32 %v1340, 1.050701
      %v1373 = vmul.f32 %v1341, 1.050701
      %v1374 = vmul.f32 %v1342, 1.050701
      %v1375 = vmul.f32 %v1343, 1.050701
      %v1376 = vmul.f32 %v1344, 1.050701
      %v1377 = vmul.f32 %v1345, 1.050701
      %v1378 = vmul.f32 %v1346, 1.050701
      %v1379 = vmul.f32 %v1347, 1.050701
      %v1380 = vmul.f32 %v1348, 1.050701
      %v1381 = vmul.f32 %v1349, 1.050701
      %v1382 = vmul.f32 %v1350, 1.050701
      %v1383 = vmul.f32 %v1351, 1.050701
      %v1384 = vmul.f32 %v1352, 1.050701
      %v1385 = vmul.f32 %v1353, 1.050701
      %v1386 = vmul.f32 %v1354, 1.050701
      %v1387 = vmul.f32 %v1355, 1.050701
      %v1388 = vmul.f32 %v1356, 1.050701
      %v1389 = vmul.f32 %v1357, 1.050701
      %v1390 = vmul.f32 %v1358, 1.050701
      %v1391 = vmul.f32 %v1359, 1.050701
      %v1392 = vmul.f32 %v1360, 1.050701
      %v1393 = vmul.f32 %v1361, 1.050701
      %v1394 = vmul.f32 %v1362, 1.050701
      %v1395 = vmul.f32 %v1363, 1.050701
      %v1396 = vmul.f32 %v1364, 1.050701
      %v1397 = vmul.f32 %v1365, 1.050701
      %v1398 = vld [vmem:[%s2] sm:$0xff]
      %v1399 = vld [vmem:[%s2 + $0x8] sm:$0xff]
      %v1400 = vld [vmem:[%s2 + $0x10] sm:$0xff]
      %v1401 = vld [vmem:[%s2 + $0x18] sm:$0xff]
      %v1402 = vld [vmem:[%s2 + $0x20] sm:$0xff]
      %v1403 = vld [vmem:[%s2 + $0x28] sm:$0xff]
      %v1404 = vld [vmem:[%s2 + $0x30] sm:$0xff]
      %v1405 = vld [vmem:[%s2 + $0x38] sm:$0xff]
      %v1406 = vld [vmem:[%s2 + $0x40] sm:$0xff]
      %v1407 = vld [vmem:[%s2 + $0x48] sm:$0xff]
      %v1408 = vld [vmem:[%s2 + $0x50] sm:$0xff]
      %v1409 = vld [vmem:[%s2 + $0x58] sm:$0xff]
      %v1410 = vld [vmem:[%s2 + $0x60] sm:$0xff]
      %v1411 = vld [vmem:[%s2 + $0x68] sm:$0xff]
      %v1412 = vld [vmem:[%s2 + $0x70] sm:$0xff]
      %v1413 = vld [vmem:[%s2 + $0x78] sm:$0xff]
      %1414 = vmatprep.subr.mxu0 0.0
      %1415 = vmatpush1.msra.mxu0 %v1413
      %1416 = vmatprep.subr.mxu0 0.0
      %1417 = vmatpush1.msra.mxu0 %v1412
      %1418 = vmatprep.subr.mxu0 0.0
      %1419 = vmatpush1.msra.mxu0 %v1411
      %1420 = vmatprep.subr.mxu0 0.0
      %1421 = vmatpush1.msra.mxu0 %v1410
      %1422 = vmatprep.subr.mxu0 0.0
      %1423 = vmatpush1.msra.mxu0 %v1409
      %1424 = vmatprep.subr.mxu0 0.0
      %1425 = vmatpush1.msra.mxu0 %v1408
      %1426 = vmatprep.subr.mxu0 0.0
      %1427 = vmatpush1.msra.mxu0 %v1407
      %1428 = vmatprep.subr.mxu0 0.0
      %1429 = vmatpush1.msra.mxu0 %v1406
      %1430 = vmatprep.subr.mxu0 0.0
      %1431 = vmatpush1.msra.mxu0 %v1405
      %1432 = vmatprep.subr.mxu0 0.0
      %1433 = vmatpush1.msra.mxu0 %v1404
      %1434 = vmatprep.subr.mxu0 0.0
      %1435 = vmatpush1.msra.mxu0 %v1403
      %1436 = vmatprep.subr.mxu0 0.0
      %1437 = vmatpush1.msra.mxu0 %v1402
      %1438 = vmatprep.subr.mxu0 0.0
      %1439 = vmatpush1.msra.mxu0 %v1401
      %1440 = vmatprep.subr.mxu0 0.0
      %1441 = vmatpush1.msra.mxu0 %v1400
      %1442 = vmatprep.subr.mxu0 0.0
      %1443 = vmatpush1.msra.mxu0 %v1399
      %1444 = vmatprep.subr.mxu0 0.0
      %1445 = vmatpush1.msra.mxu0 %v1398
      %1446 = vmatprep.subr.mxu0 0.0
      %1447 = vmatpush2.msra.mxu0 0.0
      %1448 = vmatprep.subr.mxu0 0.0
      %1449 = vmatpush2.msra.mxu0 0.0
      %1450 = vmatprep.subr.mxu0 0.0
      %1451 = vmatpush2.msra.mxu0 0.0
      %1452 = vmatprep.subr.mxu0 0.0
      %1453 = vmatpush2.msra.mxu0 0.0
      %1454 = vmatprep.subr.mxu0 0.0
      %1455 = vmatpush2.msra.mxu0 0.0
      %1456 = vmatprep.subr.mxu0 0.0
      %1457 = vmatpush2.msra.mxu0 0.0
      %1458 = vmatprep.subr.mxu0 0.0
      %1459 = vmatpush2.msra.mxu0 0.0
      %1460 = vmatprep.subr.mxu0 0.0
      %1461 = vmatpush2.msra.mxu0 0.0
      %1462 = vmatprep.subr.mxu0 0.0
      %1463 = vmatpush2.msra.mxu0 0.0
      %1464 = vmatprep.subr.mxu0 0.0
      %1465 = vmatpush2.msra.mxu0 0.0
      %1466 = vmatprep.subr.mxu0 0.0
      %1467 = vmatpush2.msra.mxu0 0.0
      %1468 = vmatprep.subr.mxu0 0.0
      %1469 = vmatpush2.msra.mxu0 0.0
      %1470 = vmatprep.subr.mxu0 0.0
      %1471 = vmatpush2.msra.mxu0 0.0
      %1472 = vmatprep.subr.mxu0 0.0
      %1473 = vmatpush2.msra.mxu0 0.0
      %1474 = vmatprep.subr.mxu0 0.0
      %1475 = vmatpush2.msra.mxu0 0.0
      %1476 = vmatprep.subr.mxu0 0.0
      %1477 = vmatpush2.msra.mxu0 0.0
      %1478 = vmatprep.mubr.f32.mxu0 0.0
      %1479 = vmatmul.mubr.f32.gmra.mxu0 %v1366
      %v1480 = vpop.f32.mrf.mxu0
      %v1481 = vadd.f32 0.0, %v1480
      %v1482 = vpop.f32.mrf.mxu0
      %1483 = vmatprep.mubr.f32.mxu0 0.0
      %1484 = vmatmul.mubr.f32.gmra.mxu0 %v1367
      %v1485 = vpop.f32.mrf.mxu0
      %v1486 = vadd.f32 0.0, %v1485
      %v1487 = vpop.f32.mrf.mxu0
      %1488 = vmatprep.mubr.f32.mxu0 0.0
      %1489 = vmatmul.mubr.f32.gmra.mxu0 %v1368
      %v1490 = vpop.f32.mrf.mxu0
      %v1491 = vadd.f32 0.0, %v1490
      %v1492 = vpop.f32.mrf.mxu0
      %1493 = vmatprep.mubr.f32.mxu0 0.0
      %1494 = vmatmul.mubr.f32.gmra.mxu0 %v1369
      %v1495 = vpop.f32.mrf.mxu0
      %v1496 = vadd.f32 0.0, %v1495
      %v1497 = vpop.f32.mrf.mxu0
      %1498 = vmatprep.mubr.f32.mxu0 0.0
      %1499 = vmatmul.mubr.f32.gmra.mxu0 %v1370
      %v1500 = vpop.f32.mrf.mxu0
      %v1501 = vadd.f32 0.0, %v1500
      %v1502 = vpop.f32.mrf.mxu0
      %1503 = vmatprep.mubr.f32.mxu0 0.0
      %1504 = vmatmul.mubr.f32.gmra.mxu0 %v1371
      %v1505 = vpop.f32.mrf.mxu0
      %v1506 = vadd.f32 0.0, %v1505
      %v1507 = vpop.f32.mrf.mxu0
      %1508 = vmatprep.mubr.f32.mxu0 0.0
      %1509 = vmatmul.mubr.f32.gmra.mxu0 %v1372
      %v1510 = vpop.f32.mrf.mxu0
      %v1511 = vadd.f32 0.0, %v1510
      %v1512 = vpop.f32.mrf.mxu0
      %1513 = vmatprep.mubr.f32.mxu0 0.0
      %1514 = vmatmul.mubr.f32.gmra.mxu0 %v1373
      %v1515 = vpop.f32.mrf.mxu0
      %v1516 = vadd.f32 0.0, %v1515
      %v1517 = vpop.f32.mrf.mxu0
      %1518 = vmatprep.mubr.f32.mxu0 0.0
      %1519 = vmatmul.mubr.f32.gmra.mxu0 %v1374
      %v1520 = vpop.f32.mrf.mxu0
      %v1521 = vadd.f32 0.0, %v1520
      %v1522 = vpop.f32.mrf.mxu0
      %1523 = vmatprep.mubr.f32.mxu0 0.0
      %1524 = vmatmul.mubr.f32.gmra.mxu0 %v1375
      %v1525 = vpop.f32.mrf.mxu0
      %v1526 = vadd.f32 0.0, %v1525
      %v1527 = vpop.f32.mrf.mxu0
      %1528 = vmatprep.mubr.f32.mxu0 0.0
      %1529 = vmatmul.mubr.f32.gmra.mxu0 %v1376
      %v1530 = vpop.f32.mrf.mxu0
      %v1531 = vadd.f32 0.0, %v1530
      %v1532 = vpop.f32.mrf.mxu0
      %1533 = vmatprep.mubr.f32.mxu0 0.0
      %1534 = vmatmul.mubr.f32.gmra.mxu0 %v1377
      %v1535 = vpop.f32.mrf.mxu0
      %v1536 = vadd.f32 0.0, %v1535
      %v1537 = vpop.f32.mrf.mxu0
      %1538 = vmatprep.mubr.f32.mxu0 0.0
      %1539 = vmatmul.mubr.f32.gmra.mxu0 %v1378
      %v1540 = vpop.f32.mrf.mxu0
      %v1541 = vadd.f32 0.0, %v1540
      %v1542 = vpop.f32.mrf.mxu0
      %1543 = vmatprep.mubr.f32.mxu0 0.0
      %1544 = vmatmul.mubr.f32.gmra.mxu0 %v1379
      %v1545 = vpop.f32.mrf.mxu0
      %v1546 = vadd.f32 0.0, %v1545
      %v1547 = vpop.f32.mrf.mxu0
      %1548 = vmatprep.mubr.f32.mxu0 0.0
      %1549 = vmatmul.mubr.f32.gmra.mxu0 %v1380
      %v1550 = vpop.f32.mrf.mxu0
      %v1551 = vadd.f32 0.0, %v1550
      %v1552 = vpop.f32.mrf.mxu0
      %1553 = vmatprep.mubr.f32.mxu0 0.0
      %1554 = vmatmul.mubr.f32.gmra.mxu0 %v1381
      %v1555 = vpop.f32.mrf.mxu0
      %v1556 = vadd.f32 0.0, %v1555
      %v1557 = vpop.f32.mrf.mxu0
      %1558 = vmatprep.mubr.f32.mxu0 0.0
      %1559 = vmatmul.mubr.f32.gmra.mxu0 %v1382
      %v1560 = vpop.f32.mrf.mxu0
      %v1561 = vadd.f32 0.0, %v1560
      %v1562 = vpop.f32.mrf.mxu0
      %1563 = vmatprep.mubr.f32.mxu0 0.0
      %1564 = vmatmul.mubr.f32.gmra.mxu0 %v1383
      %v1565 = vpop.f32.mrf.mxu0
      %v1566 = vadd.f32 0.0, %v1565
      %v1567 = vpop.f32.mrf.mxu0
      %1568 = vmatprep.mubr.f32.mxu0 0.0
      %1569 = vmatmul.mubr.f32.gmra.mxu0 %v1384
      %v1570 = vpop.f32.mrf.mxu0
      %v1571 = vadd.f32 0.0, %v1570
      %v1572 = vpop.f32.mrf.mxu0
      %1573 = vmatprep.mubr.f32.mxu0 0.0
      %1574 = vmatmul.mubr.f32.gmra.mxu0 %v1385
      %v1575 = vpop.f32.mrf.mxu0
      %v1576 = vadd.f32 0.0, %v1575
      %v1577 = vpop.f32.mrf.mxu0
      %1578 = vmatprep.mubr.f32.mxu0 0.0
      %1579 = vmatmul.mubr.f32.gmra.mxu0 %v1386
      %v1580 = vpop.f32.mrf.mxu0
      %v1581 = vadd.f32 0.0, %v1580
      %v1582 = vpop.f32.mrf.mxu0
      %1583 = vmatprep.mubr.f32.mxu0 0.0
      %1584 = vmatmul.mubr.f32.gmra.mxu0 %v1387
      %v1585 = vpop.f32.mrf.mxu0
      %v1586 = vadd.f32 0.0, %v1585
      %v1587 = vpop.f32.mrf.mxu0
      %1588 = vmatprep.mubr.f32.mxu0 0.0
      %1589 = vmatmul.mubr.f32.gmra.mxu0 %v1388
      %v1590 = vpop.f32.mrf.mxu0
      %v1591 = vadd.f32 0.0, %v1590
      %v1592 = vpop.f32.mrf.mxu0
      %1593 = vmatprep.mubr.f32.mxu0 0.0
      %1594 = vmatmul.mubr.f32.gmra.mxu0 %v1389
      %v1595 = vpop.f32.mrf.mxu0
      %v1596 = vadd.f32 0.0, %v1595
      %v1597 = vpop.f32.mrf.mxu0
      %1598 = vmatprep.mubr.f32.mxu0 0.0
      %1599 = vmatmul.mubr.f32.gmra.mxu0 %v1390
      %v1600 = vpop.f32.mrf.mxu0
      %v1601 = vadd.f32 0.0, %v1600
      %v1602 = vpop.f32.mrf.mxu0
      %1603 = vmatprep.mubr.f32.mxu0 0.0
      %1604 = vmatmul.mubr.f32.gmra.mxu0 %v1391
      %v1605 = vpop.f32.mrf.mxu0
      %v1606 = vadd.f32 0.0, %v1605
      %v1607 = vpop.f32.mrf.mxu0
      %1608 = vmatprep.mubr.f32.mxu0 0.0
      %1609 = vmatmul.mubr.f32.gmra.mxu0 %v1392
      %v1610 = vpop.f32.mrf.mxu0
      %v1611 = vadd.f32 0.0, %v1610
      %v1612 = vpop.f32.mrf.mxu0
      %1613 = vmatprep.mubr.f32.mxu0 0.0
      %1614 = vmatmul.mubr.f32.gmra.mxu0 %v1393
      %v1615 = vpop.f32.mrf.mxu0
      %v1616 = vadd.f32 0.0, %v1615
      %v1617 = vpop.f32.mrf.mxu0
      %1618 = vmatprep.mubr.f32.mxu0 0.0
      %1619 = vmatmul.mubr.f32.gmra.mxu0 %v1394
      %v1620 = vpop.f32.mrf.mxu0
      %v1621 = vadd.f32 0.0, %v1620
      %v1622 = vpop.f32.mrf.mxu0
      %1623 = vmatprep.mubr.f32.mxu0 0.0
      %1624 = vmatmul.mubr.f32.gmra.mxu0 %v1395
      %v1625 = vpop.f32.mrf.mxu0
      %v1626 = vadd.f32 0.0, %v1625
      %v1627 = vpop.f32.mrf.mxu0
      %1628 = vmatprep.mubr.f32.mxu0 0.0
      %1629 = vmatmul.mubr.f32.gmra.mxu0 %v1396
      %v1630 = vpop.f32.mrf.mxu0
      %v1631 = vadd.f32 0.0, %v1630
      %v1632 = vpop.f32.mrf.mxu0
      %1633 = vmatprep.mubr.f32.mxu0 0.0
      %1634 = vmatmul.mubr.f32.gmra.mxu0 %v1397
      %v1635 = vpop.f32.mrf.mxu0
      %v1636 = vadd.f32 0.0, %v1635
      %v1637 = vpop.f32.mrf.mxu0
      %1638 = vdwg.mxu0
      %v1639 = vpack.c.bf16 %v1486, %v1481
      %v1640 = vpack.c.bf16 %v1496, %v1491
      %v1641 = vpack.c.bf16 %v1506, %v1501
      %v1642 = vpack.c.bf16 %v1516, %v1511
      %v1643 = vpack.c.bf16 %v1526, %v1521
      %v1644 = vpack.c.bf16 %v1536, %v1531
      %v1645 = vpack.c.bf16 %v1546, %v1541
      %v1646 = vpack.c.bf16 %v1556, %v1551
      %v1647 = vpack.c.bf16 %v1566, %v1561
      %v1648 = vpack.c.bf16 %v1576, %v1571
      %v1649 = vpack.c.bf16 %v1586, %v1581
      %v1650 = vpack.c.bf16 %v1596, %v1591
      %v1651 = vpack.c.bf16 %v1606, %v1601
      %v1652 = vpack.c.bf16 %v1616, %v1611
      %v1653 = vpack.c.bf16 %v1626, %v1621
      %v1654 = vpack.c.bf16 %v1636, %v1631
      %v1671 = vunpack.c.l.b16 %v1639
      %v1672 = vunpack.c.h.b16 %v1639
      %v1673 = vunpack.c.l.b16 %v1640
      %v1674 = vunpack.c.h.b16 %v1640
      %v1675 = vunpack.c.l.b16 %v1641
      %v1676 = vunpack.c.h.b16 %v1641
      %v1677 = vunpack.c.l.b16 %v1642
      %v1678 = vunpack.c.h.b16 %v1642
      %v1679 = vunpack.c.l.b16 %v1643
      %v1680 = vunpack.c.h.b16 %v1643
      %v1681 = vunpack.c.l.b16 %v1644
      %v1682 = vunpack.c.h.b16 %v1644
      %v1683 = vunpack.c.l.b16 %v1645
      %v1684 = vunpack.c.h.b16 %v1645
      %v1685 = vunpack.c.l.b16 %v1646
      %v1686 = vunpack.c.h.b16 %v1646
      %v1687 = vunpack.c.l.b16 %v1647
      %v1688 = vunpack.c.h.b16 %v1647
      %v1689 = vunpack.c.l.b16 %v1648
      %v1690 = vunpack.c.h.b16 %v1648
      %v1691 = vunpack.c.l.b16 %v1649
      %v1692 = vunpack.c.h.b16 %v1649
      %v1693 = vunpack.c.l.b16 %v1650
      %v1694 = vunpack.c.h.b16 %v1650
      %v1695 = vunpack.c.l.b16 %v1651
      %v1696 = vunpack.c.h.b16 %v1651
      %v1697 = vunpack.c.l.b16 %v1652
      %v1698 = vunpack.c.h.b16 %v1652
      %v1699 = vunpack.c.l.b16 %v1653
      %v1700 = vunpack.c.h.b16 %v1653
      %v1701 = vunpack.c.l.b16 %v1654
      %v1702 = vunpack.c.h.b16 %v1654
      %v1703 = vpack.c.b16 %v1671, %v1671
      %v1704 = vpack.c.b16 %v1672, %v1672
      %v1705 = vpack.c.b16 %v1673, %v1673
      %v1706 = vpack.c.b16 %v1674, %v1674
      %v1707 = vpack.c.b16 %v1675, %v1675
      %v1708 = vpack.c.b16 %v1676, %v1676
      %v1709 = vpack.c.b16 %v1677, %v1677
      %v1710 = vpack.c.b16 %v1678, %v1678
      %v1711 = vpack.c.b16 %v1679, %v1679
      %v1712 = vpack.c.b16 %v1680, %v1680
      %v1713 = vpack.c.b16 %v1681, %v1681
      %v1714 = vpack.c.b16 %v1682, %v1682
      %v1715 = vpack.c.b16 %v1683, %v1683
      %v1716 = vpack.c.b16 %v1684, %v1684
      %v1717 = vpack.c.b16 %v1685, %v1685
      %v1718 = vpack.c.b16 %v1686, %v1686
      %v1719 = vpack.c.b16 %v1687, %v1687
      %v1720 = vpack.c.b16 %v1688, %v1688
      %v1721 = vpack.c.b16 %v1689, %v1689
      %v1722 = vpack.c.b16 %v1690, %v1690
      %v1723 = vpack.c.b16 %v1691, %v1691
      %v1724 = vpack.c.b16 %v1692, %v1692
      %v1725 = vpack.c.b16 %v1693, %v1693
      %v1726 = vpack.c.b16 %v1694, %v1694
      %v1727 = vpack.c.b16 %v1695, %v1695
      %v1728 = vpack.c.b16 %v1696, %v1696
      %v1729 = vpack.c.b16 %v1697, %v1697
      %v1730 = vpack.c.b16 %v1698, %v1698
      %v1731 = vpack.c.b16 %v1699, %v1699
      %v1732 = vpack.c.b16 %v1700, %v1700
      %v1733 = vpack.c.b16 %v1701, %v1701
      %v1734 = vpack.c.b16 %v1702, %v1702
      %1767 = vst [vmem:[%s202] sm:$0xf] %v1703
      %1768 = vst [vmem:[%s202 + $0x4] sm:$0xf] %v1704
      %1769 = vst [vmem:[%s202 + $0x8] sm:$0xf] %v1705
      %1770 = vst [vmem:[%s202 + $0xc] sm:$0xf] %v1706
      %1771 = vst [vmem:[%s202 + $0x10] sm:$0xf] %v1707
      %1772 = vst [vmem:[%s202 + $0x14] sm:$0xf] %v1708
      %1773 = vst [vmem:[%s202 + $0x18] sm:$0xf] %v1709
      %1774 = vst [vmem:[%s202 + $0x1c] sm:$0xf] %v1710
      %1775 = vst [vmem:[%s202 + $0x20] sm:$0xf] %v1711
      %1776 = vst [vmem:[%s202 + $0x24] sm:$0xf] %v1712
      %1777 = vst [vmem:[%s202 + $0x28] sm:$0xf] %v1713
      %1778 = vst [vmem:[%s202 + $0x2c] sm:$0xf] %v1714
      %1779 = vst [vmem:[%s202 + $0x30] sm:$0xf] %v1715
      %1780 = vst [vmem:[%s202 + $0x34] sm:$0xf] %v1716
      %1781 = vst [vmem:[%s202 + $0x38] sm:$0xf] %v1717
      %1782 = vst [vmem:[%s202 + $0x3c] sm:$0xf] %v1718
      %1783 = vst [vmem:[%s202 + $0x40] sm:$0xf] %v1719
      %1784 = vst [vmem:[%s202 + $0x44] sm:$0xf] %v1720
      %1785 = vst [vmem:[%s202 + $0x48] sm:$0xf] %v1721
      %1786 = vst [vmem:[%s202 + $0x4c] sm:$0xf] %v1722
      %1787 = vst [vmem:[%s202 + $0x50] sm:$0xf] %v1723
      %1788 = vst [vmem:[%s202 + $0x54] sm:$0xf] %v1724
      %1789 = vst [vmem:[%s202 + $0x58] sm:$0xf] %v1725
      %1790 = vst [vmem:[%s202 + $0x5c] sm:$0xf] %v1726
      %1791 = vst [vmem:[%s202 + $0x60] sm:$0xf] %v1727
      %1792 = vst [vmem:[%s202 + $0x64] sm:$0xf] %v1728
      %1793 = vst [vmem:[%s202 + $0x68] sm:$0xf] %v1729
      %1794 = vst [vmem:[%s202 + $0x6c] sm:$0xf] %v1730
      %1795 = vst [vmem:[%s202 + $0x70] sm:$0xf] %v1731
      %1796 = vst [vmem:[%s202 + $0x74] sm:$0xf] %v1732
      %1797 = vst [vmem:[%s202 + $0x78] sm:$0xf] %v1733
      %1798 = vst [vmem:[%s202 + $0x7c] sm:$0xf] %v1734
      %s1799 = smul.u32 32, %s15
      %p1800 = scmp.lt.s32.totalorder %s1799, 63
      %s1801 = scalar_select %p1800, %s1799, 63
      %s1802 = smul.addr %s1801, 4
      %s1803 = scalar_lea.vmem %s4, %s1802
      // Predicated region
      $region37: #{gnn_forward.5} parent=35 // pred_check
        %p1804 = pneg %p122
      $region38: #{gnn_forward.5} parent=35 // pred_check_branch
        %1806 = sbr.rel (%p1804) target = $region40
      $region39: #{gnn_forward.5} parent=35 // pred_region
        %s1807 = smul.u32 32, %s15
      $region40: #{gnn_forward.5} parent=35 // pred_fallthru
        _
    $region36: #{gnn_forward.5} parent=5 // pred_fallthru
      _
    %p1808 = scmp.le.s32.totalorder 2, %s10
    // Predicated region
    $region41: #{gnn_forward.5} parent=5 // pred_check
      %p1809 = pneg %p1808
    $region42: #{gnn_forward.5} parent=5 // pred_check_branch
      %1811 = sbr.rel (%p1809) target = $region44
    $region43: #{gnn_forward.5} parent=5 // pred_region
      %s1812 = ssub.s32 %s10, 2
      // Predicated region
      $region45: #{gnn_forward.5} parent=43 // pred_check
        %p1813 = pneg %p128
      $region46: #{gnn_forward.5} parent=43 // pred_check_branch
        %1815 = sbr.rel (%p1813) target = $region48
      $region47: #{gnn_forward.5} parent=43 // pred_region
        %s1816 = smul.u32 32, %s16
        %p1817 = scmp.lt.s32.totalorder %s1816, 63
        %s1818 = scalar_select %p1817, %s1816, 63
        %s1819 = smul.addr %s1818, 4
        %s1820 = scalar_lea.vmem %s4, %s1819
      $region48: #{gnn_forward.5} parent=43 // pred_fallthru
        _
    $region44: #{gnn_forward.5} parent=5 // pred_fallthru
      _
  $region6: #{gnn_forward.5} parent=0 // loop_footer
    %s14 = sadd.s32 1, %s10
  $region7: #{gnn_forward.5} parent=0 // loop_footer_branch
    %9 = sbr.rel target = $region3
  $region8: #{gnn_forward.5} parent=0 // loop_exit
    _

// kernel: gnn_forward.4
$region0: #{gnn_forward.4}
  #allocation0 [shape = 'u32[]', space=smem, size = 0x4, offset = 0x4, fixed_abs, tag = 'smem constant byte address 0x4 - core index']
  #allocation1 [shape = 'u32[144,128]{1,0:T(1,128)}', space=vmem, size = 0x12000, scoped, tag = 'internal scratch']
  %s0 = inlined_call_operand.vmem [shape: bf16[512,512], index: 0, kind: input, shape index: {}]
  %s1 = inlined_call_operand.vmem [shape: bf16[512,32], index: 1, kind: input, shape index: {}]
  %s2 = inlined_call_operand.vmem [shape: f32[32,256], index: 2, kind: input, shape index: {}]
  %s3 = inlined_call_operand.vmem [shape: f32[1,256], index: 3, kind: input, shape index: {}]
  %s4 = inlined_call_operand.vmem [shape: f32[256,128], index: 4, kind: input, shape index: {}]
  %s5 = inlined_call_operand.vmem [shape: bf16[512,128], index: 5, kind: output, shape index: {}]
  %s6 = sld [smem:[#allocation0]]
  $region53: #{gnn_forward.4} parent=0
    _
  %s8 = ssub.s32 1, %s6
  %s9 = scalar_select 0, %s8, %s6
  loop: start=0, step=1, limit=4
  $region2: #{gnn_forward.4} parent=0 // loop_pre_header
    _
  $region3: #{gnn_forward.4} parent=0 // loop_header
    %s11 = sphi 0, %s15
    %p12 = scmp.ge.s32.totalorder %s11, 4
    %s21 = sphi 0, %s23
    %s24 = sphi 0, %s21
    %s25 = sphi 0, %s24
    %s41 = sphi 0, %s25
    %s45 = sphi 0, %s45
    %s47 = sphi 0, %s45
    %s48 = sphi 0, %s47
    %s62 = sphi 0, %s48
    %s66 = sphi 0, %s66
    %s68 = sphi 0, %s66
    %s69 = sphi 0, %s68
    %s83 = sphi 0, %s69
    %s87 = sphi 0, %s87
    %s89 = sphi 0, %s87
    %s90 = sphi 0, %s89
    %s104 = sphi 0, %s90
    %s108 = sphi 0, %s108
    %s110 = sphi 0, %s108
    %s111 = sphi 0, %s110
    %s125 = sphi 0, %s111
    %s131 = sphi 0, %s133
    %s134 = sphi 0, %s131
    %s135 = sphi 0, %s134
    %s151 = sphi 0, %s135
  $region4: #{gnn_forward.4} parent=0 // loop_header_branch
    %14 = sbr.rel (%p12) target = $region8
  $region5: #{gnn_forward.4} parent=0 // loop_body
    %s16 = ssub.s32 %s11, 1
    %s17 = ssub.s32 %s11, 2
    %s18 = sadd.s32 %s11, 1
    %s19 = ssub.s32 %s11, %s18
    %p20 = scmp.eq.s32.totalorder %s19, 0
    %s22 = sadd.s32 %s21, 1
    %s23 = scalar_select %p20, %s21, %s22
    %p26 = pneg %p20
    %p27 = scmp.eq.s32.totalorder %s11, 1
    %p28 = por %p26, %p27
    %p29 = scmp.ne.s32.totalorder %s21, %s24
    %p30 = scmp.eq.s32.totalorder %s11, 0
    %p31 = por %p29, %p30
    %p32 = scmp.ne.s32.totalorder %s21, %s24
    %p33 = scmp.eq.s32.totalorder %s16, 1
    %p34 = por %p32, %p33
    %p35 = scmp.ne.s32.totalorder %s24, %s25
    %p36 = scmp.eq.s32.totalorder %s16, 0
    %p37 = por %p35, %p36
    %p38 = scmp.ne.s32.totalorder %s24, %s25
    %p39 = scmp.eq.s32.totalorder %s17, 1
    %p40 = por %p38, %p39
    %p42 = scmp.ne.s32.totalorder %s25, %s41
    %p43 = scmp.eq.s32.totalorder %s17, 0
    %p44 = por %p42, %p43
    %s46 = sadd.s32 %s45, 1
    %p49 = scmp.eq.s32.totalorder %s11, 1
    %p50 = scmp.ne.s32.totalorder %s45, %s47
    %p51 = scmp.eq.s32.totalorder %s11, 0
    %p52 = por %p50, %p51
    %p53 = scmp.ne.s32.totalorder %s45, %s47
    %p54 = scmp.eq.s32.totalorder %s16, 1
    %p55 = por %p53, %p54
    %p56 = scmp.ne.s32.totalorder %s47, %s48
    %p57 = scmp.eq.s32.totalorder %s16, 0
    %p58 = por %p56, %p57
    %p59 = scmp.ne.s32.totalorder %s47, %s48
    %p60 = scmp.eq.s32.totalorder %s17, 1
    %p61 = por %p59, %p60
    %p63 = scmp.ne.s32.totalorder %s48, %s62
    %p64 = scmp.eq.s32.totalorder %s17, 0
    %p65 = por %p63, %p64
    %s67 = sadd.s32 %s66, 1
    %p70 = scmp.eq.s32.totalorder %s11, 1
    %p71 = scmp.ne.s32.totalorder %s66, %s68
    %p72 = scmp.eq.s32.totalorder %s11, 0
    %p73 = por %p71, %p72
    %p74 = scmp.ne.s32.totalorder %s66, %s68
    %p75 = scmp.eq.s32.totalorder %s16, 1
    %p76 = por %p74, %p75
    %p77 = scmp.ne.s32.totalorder %s68, %s69
    %p78 = scmp.eq.s32.totalorder %s16, 0
    %p79 = por %p77, %p78
    %p80 = scmp.ne.s32.totalorder %s68, %s69
    %p81 = scmp.eq.s32.totalorder %s17, 1
    %p82 = por %p80, %p81
    %p84 = scmp.ne.s32.totalorder %s69, %s83
    %p85 = scmp.eq.s32.totalorder %s17, 0
    %p86 = por %p84, %p85
    %s88 = sadd.s32 %s87, 1
    %p91 = scmp.eq.s32.totalorder %s11, 1
    %p92 = scmp.ne.s32.totalorder %s87, %s89
    %p93 = scmp.eq.s32.totalorder %s11, 0
    %p94 = por %p92, %p93
    %p95 = scmp.ne.s32.totalorder %s87, %s89
    %p96 = scmp.eq.s32.totalorder %s16, 1
    %p97 = por %p95, %p96
    %p98 = scmp.ne.s32.totalorder %s89, %s90
    %p99 = scmp.eq.s32.totalorder %s16, 0
    %p100 = por %p98, %p99
    %p101 = scmp.ne.s32.totalorder %s89, %s90
    %p102 = scmp.eq.s32.totalorder %s17, 1
    %p103 = por %p101, %p102
    %p105 = scmp.ne.s32.totalorder %s90, %s104
    %p106 = scmp.eq.s32.totalorder %s17, 0
    %p107 = por %p105, %p106
    %s109 = sadd.s32 %s108, 1
    %p112 = scmp.eq.s32.totalorder %s11, 1
    %p113 = scmp.ne.s32.totalorder %s108, %s110
    %p114 = scmp.eq.s32.totalorder %s11, 0
    %p115 = por %p113, %p114
    %p116 = scmp.ne.s32.totalorder %s108, %s110
    %p117 = scmp.eq.s32.totalorder %s16, 1
    %p118 = por %p116, %p117
    %p119 = scmp.ne.s32.totalorder %s110, %s111
    %p120 = scmp.eq.s32.totalorder %s16, 0
    %p121 = por %p119, %p120
    %p122 = scmp.ne.s32.totalorder %s110, %s111
    %p123 = scmp.eq.s32.totalorder %s17, 1
    %p124 = por %p122, %p123
    %p126 = scmp.ne.s32.totalorder %s111, %s125
    %p127 = scmp.eq.s32.totalorder %s17, 0
    %p128 = por %p126, %p127
    %s129 = ssub.s32 %s11, %s18
    %p130 = scmp.eq.s32.totalorder %s129, 0
    %s132 = sadd.s32 %s131, 1
    %s133 = scalar_select %p130, %s131, %s132
    %p136 = pneg %p130
    %p137 = scmp.eq.s32.totalorder %s11, 1
    %p138 = por %p136, %p137
    %p139 = scmp.ne.s32.totalorder %s131, %s134
    %p140 = scmp.eq.s32.totalorder %s11, 0
    %p141 = por %p139, %p140
    %p142 = scmp.ne.s32.totalorder %s131, %s134
    %p143 = scmp.eq.s32.totalorder %s16, 1
    %p144 = por %p142, %p143
    %p145 = scmp.ne.s32.totalorder %s134, %s135
    %p146 = scmp.eq.s32.totalorder %s16, 0
    %p147 = por %p145, %p146
    %p148 = scmp.ne.s32.totalorder %s134, %s135
    %p149 = scmp.eq.s32.totalorder %s17, 1
    %p150 = por %p148, %p149
    %p152 = scmp.ne.s32.totalorder %s135, %s151
    %p153 = scmp.eq.s32.totalorder %s17, 0
    %p154 = por %p152, %p153
    %p155 = scmp.le.s32.totalorder 1, %s11
    %p156 = scmp.lt.s32.totalorder %s11, 3
    %p157 = pnand %p155, %p156
    %p158 = pneg %p157
    // Predicated region
    $region9: #{gnn_forward.4} parent=5 // pred_check
      _
    $region10: #{gnn_forward.4} parent=5 // pred_check_branch
      %160 = sbr.rel (%p157) target = $region12
    $region11: #{gnn_forward.4} parent=5 // pred_region
      %s161 = ssub.s32 %s11, 1
      // Predicated region
      $region13: #{gnn_forward.4} parent=11 // pred_check
        %p162 = pneg %p58
      $region14: #{gnn_forward.4} parent=11 // pred_check_branch
        %164 = sbr.rel (%p162) target = $region16
      $region15: #{gnn_forward.4} parent=11 // pred_region
        _
      $region16: #{gnn_forward.4} parent=11 // pred_fallthru
        _
      // Predicated region
      $region17: #{gnn_forward.4} parent=11 // pred_check
        %p165 = pneg %p79
      $region18: #{gnn_forward.4} parent=11 // pred_check_branch
        %167 = sbr.rel (%p165) target = $region20
      $region19: #{gnn_forward.4} parent=11 // pred_region
        _
      $region20: #{gnn_forward.4} parent=11 // pred_fallthru
        _
      // Predicated region
      $region21: #{gnn_forward.4} parent=11 // pred_check
        %p168 = pneg %p100
      $region22: #{gnn_forward.4} parent=11 // pred_check_branch
        %170 = sbr.rel (%p168) target = $region24
      $region23: #{gnn_forward.4} parent=11 // pred_region
        _
      $region24: #{gnn_forward.4} parent=11 // pred_fallthru
        _
      // Predicated region
      $region25: #{gnn_forward.4} parent=11 // pred_check
        %p171 = pneg %p121
      $region26: #{gnn_forward.4} parent=11 // pred_check_branch
        %173 = sbr.rel (%p171) target = $region28
      $region27: #{gnn_forward.4} parent=11 // pred_region
        _
      $region28: #{gnn_forward.4} parent=11 // pred_fallthru
        _
    $region12: #{gnn_forward.4} parent=5 // pred_fallthru
      _
    %p174 = scmp.lt.s32.totalorder %s11, 2
    // Predicated region
    $region29: #{gnn_forward.4} parent=5 // pred_check
      %p175 = pneg %p174
    $region30: #{gnn_forward.4} parent=5 // pred_check_branch
      %177 = sbr.rel (%p175) target = $region32
    $region31: #{gnn_forward.4} parent=5 // pred_region
      // Predicated region
      $region33: #{gnn_forward.4} parent=31 // pred_check
        %p178 = pneg %p31
      $region34: #{gnn_forward.4} parent=31 // pred_check_branch
        %180 = sbr.rel (%p178) target = $region36
      $region35: #{gnn_forward.4} parent=31 // pred_region
        %s181 = smul.u32 32, %s11
        %p182 = scmp.lt.s32.totalorder %s181, 63
        %s183 = scalar_select %p182, %s181, 63
        %s184 = smul.addr %s183, 4
        %s185 = smul.addr %s184, 4
        %s186 = scalar_lea.vmem %s0, %s185
        %s187 = smul.u32 32, %s11
      $region36: #{gnn_forward.4} parent=31 // pred_fallthru
        _
    $region32: #{gnn_forward.4} parent=5 // pred_fallthru
      _
    %p188 = scmp.le.s32.totalorder 1, %s11
    %p189 = scmp.lt.s32.totalorder %s11, 3
    %p190 = pnand %p188, %p189
    %p191 = pneg %p190
    // Predicated region
    $region37: #{gnn_forward.4} parent=5 // pred_check
      _
    $region38: #{gnn_forward.4} parent=5 // pred_check_branch
      %193 = sbr.rel (%p190) target = $region40
    $region39: #{gnn_forward.4} parent=5 // pred_region
      %s194 = ssub.s32 %s11, 1
      %s195 = smul.u32 32, %s16
      %p196 = scmp.lt.s32.totalorder %s195, 63
      %s197 = scalar_select %p196, %s195, 63
      %s198 = smul.addr %s197, 4
      %s199 = smul.addr %s198, 4
      %s200 = scalar_lea.vmem %s0, %s199
      %p201 = pneg %p37
      %p202 = pneg %p34
      %p203 = pneg %p58
      %p204 = pneg %p55
      %p205 = pneg %p79
      %p206 = pneg %p76
      %p207 = pneg %p100
      %p208 = pneg %p97
      %p209 = pneg %p121
      %p210 = pneg %p118
      %p211 = pneg %p147
      %p212 = pneg %p144
      %s213 = smul.u32 32, %s16
      %p214 = scmp.lt.s32.totalorder %s213, 63
      %s215 = scalar_select %p214, %s213, 63
      %s216 = smul.addr %s215, 4
      %s217 = scalar_lea.vmem %s5, %s216
      %s218 = smul.u32 32, %s16
      %p219 = scmp.lt.s32.totalorder %s218, 63
      %s220 = scalar_select %p219, %s218, 63
      %s221 = smul.addr %s220, 4
      %s222 = smul.addr %s221, 4
      %s223 = scalar_lea.vmem %s0, %s222
      %s224 = smul.u32 32, %s16
      %s225 = smul.u32 32, %s16
      %p226 = scmp.lt.s32.totalorder %s225, 63
      %s227 = scalar_select %p226, %s225, 63
      %s228 = smul.addr %s227, 4
      %s229 = scalar_lea.vmem %s5, %s228
      %s230 = smul.u32 32, %s16
      %v232 = vld [vmem:[%s223] sm:$0xff]
      %v233 = vld [vmem:[%s223 + $0x8] sm:$0xff]
      %v234 = vld [vmem:[%s223 + $0x10] sm:$0xff]
      %v235 = vld [vmem:[%s223 + $0x18] sm:$0xff]
      %v236 = vld [vmem:[%s223 + $0x20] sm:$0xff]
      %v237 = vld [vmem:[%s223 + $0x28] sm:$0xff]
      %v238 = vld [vmem:[%s223 + $0x30] sm:$0xff]
      %v239 = vld [vmem:[%s223 + $0x38] sm:$0xff]
      %v240 = vld [vmem:[%s223 + $0x40] sm:$0xff]
      %v241 = vld [vmem:[%s223 + $0x48] sm:$0xff]
      %v242 = vld [vmem:[%s223 + $0x50] sm:$0xff]
      %v243 = vld [vmem:[%s223 + $0x58] sm:$0xff]
      %v244 = vld [vmem:[%s223 + $0x60] sm:$0xff]
      %v245 = vld [vmem:[%s223 + $0x68] sm:$0xff]
      %v246 = vld [vmem:[%s223 + $0x70] sm:$0xff]
      %v247 = vld [vmem:[%s223 + $0x78] sm:$0xff]
      %v248 = vld [vmem:[%s223 + $0x80] sm:$0xff]
      %v249 = vld [vmem:[%s223 + $0x88] sm:$0xff]
      %v250 = vld [vmem:[%s223 + $0x90] sm:$0xff]
      %v251 = vld [vmem:[%s223 + $0x98] sm:$0xff]
      %v252 = vld [vmem:[%s223 + $0xa0] sm:$0xff]
      %v253 = vld [vmem:[%s223 + $0xa8] sm:$0xff]
      %v254 = vld [vmem:[%s223 + $0xb0] sm:$0xff]
      %v255 = vld [vmem:[%s223 + $0xb8] sm:$0xff]
      %v256 = vld [vmem:[%s223 + $0xc0] sm:$0xff]
      %v257 = vld [vmem:[%s223 + $0xc8] sm:$0xff]
      %v258 = vld [vmem:[%s223 + $0xd0] sm:$0xff]
      %v259 = vld [vmem:[%s223 + $0xd8] sm:$0xff]
      %v260 = vld [vmem:[%s223 + $0xe0] sm:$0xff]
      %v261 = vld [vmem:[%s223 + $0xe8] sm:$0xff]
      %v262 = vld [vmem:[%s223 + $0xf0] sm:$0xff]
      %v263 = vld [vmem:[%s223 + $0xf8] sm:$0xff]
      %v264 = vld [vmem:[%s223 + $0x100] sm:$0xff]
      %v265 = vld [vmem:[%s223 + $0x108] sm:$0xff]
      %v266 = vld [vmem:[%s223 + $0x110] sm:$0xff]
      %v267 = vld [vmem:[%s223 + $0x118] sm:$0xff]
      %v268 = vld [vmem:[%s223 + $0x120] sm:$0xff]
      %v269 = vld [vmem:[%s223 + $0x128] sm:$0xff]
      %v270 = vld [vmem:[%s223 + $0x130] sm:$0xff]
      %v271 = vld [vmem:[%s223 + $0x138] sm:$0xff]
      %v272 = vld [vmem:[%s223 + $0x140] sm:$0xff]
      %v273 = vld [vmem:[%s223 + $0x148] sm:$0xff]
      %v274 = vld [vmem:[%s223 + $0x150] sm:$0xff]
      %v275 = vld [vmem:[%s223 + $0x158] sm:$0xff]
      %v276 = vld [vmem:[%s223 + $0x160] sm:$0xff]
      %v277 = vld [vmem:[%s223 + $0x168] sm:$0xff]
      %v278 = vld [vmem:[%s223 + $0x170] sm:$0xff]
      %v279 = vld [vmem:[%s223 + $0x178] sm:$0xff]
      %v280 = vld [vmem:[%s223 + $0x180] sm:$0xff]
      %v281 = vld [vmem:[%s223 + $0x188] sm:$0xff]
      %v282 = vld [vmem:[%s223 + $0x190] sm:$0xff]
      %v283 = vld [vmem:[%s223 + $0x198] sm:$0xff]
      %v284 = vld [vmem:[%s223 + $0x1a0] sm:$0xff]
      %v285 = vld [vmem:[%s223 + $0x1a8] sm:$0xff]
      %v286 = vld [vmem:[%s223 + $0x1b0] sm:$0xff]
      %v287 = vld [vmem:[%s223 + $0x1b8] sm:$0xff]
      %v288 = vld [vmem:[%s223 + $0x1c0] sm:$0xff]
      %v289 = vld [vmem:[%s223 + $0x1c8] sm:$0xff]
      %v290 = vld [vmem:[%s223 + $0x1d0] sm:$0xff]
      %v291 = vld [vmem:[%s223 + $0x1d8] sm:$0xff]
      %v292 = vld [vmem:[%s223 + $0x1e0] sm:$0xff]
      %v293 = vld [vmem:[%s223 + $0x1e8] sm:$0xff]
      %v294 = vld [vmem:[%s223 + $0x1f0] sm:$0xff]
      %v295 = vld [vmem:[%s223 + $0x1f8] sm:$0xff]
      %v296 = vld [vmem:[%s1] sm:$0xf]
      %v297 = vld [vmem:[%s1 + $0x4] sm:$0xf]
      %v298 = vld [vmem:[%s1 + $0x8] sm:$0xf]
      %v299 = vld [vmem:[%s1 + $0xc] sm:$0xf]
      %v300 = vld [vmem:[%s1 + $0x10] sm:$0xf]
      %v301 = vld [vmem:[%s1 + $0x14] sm:$0xf]
      %v302 = vld [vmem:[%s1 + $0x18] sm:$0xf]
      %v303 = vld [vmem:[%s1 + $0x1c] sm:$0xf]
      %v304 = vld [vmem:[%s1 + $0x20] sm:$0xf]
      %v305 = vld [vmem:[%s1 + $0x24] sm:$0xf]
      %v306 = vld [vmem:[%s1 + $0x28] sm:$0xf]
      %v307 = vld [vmem:[%s1 + $0x2c] sm:$0xf]
      %v308 = vld [vmem:[%s1 + $0x30] sm:$0xf]
      %v309 = vld [vmem:[%s1 + $0x34] sm:$0xf]
      %v310 = vld [vmem:[%s1 + $0x38] sm:$0xf]
      %v311 = vld [vmem:[%s1 + $0x3c] sm:$0xf]
      %v312 = vld [vmem:[%s1 + $0x40] sm:$0xf]
      %v313 = vld [vmem:[%s1 + $0x44] sm:$0xf]
      %v314 = vld [vmem:[%s1 + $0x48] sm:$0xf]
      %v315 = vld [vmem:[%s1 + $0x4c] sm:$0xf]
      %v316 = vld [vmem:[%s1 + $0x50] sm:$0xf]
      %v317 = vld [vmem:[%s1 + $0x54] sm:$0xf]
      %v318 = vld [vmem:[%s1 + $0x58] sm:$0xf]
      %v319 = vld [vmem:[%s1 + $0x5c] sm:$0xf]
      %v320 = vld [vmem:[%s1 + $0x60] sm:$0xf]
      %v321 = vld [vmem:[%s1 + $0x64] sm:$0xf]
      %v322 = vld [vmem:[%s1 + $0x68] sm:$0xf]
      %v323 = vld [vmem:[%s1 + $0x6c] sm:$0xf]
      %v324 = vld [vmem:[%s1 + $0x70] sm:$0xf]
      %v325 = vld [vmem:[%s1 + $0x74] sm:$0xf]
      %v326 = vld [vmem:[%s1 + $0x78] sm:$0xf]
      %v327 = vld [vmem:[%s1 + $0x7c] sm:$0xf]
      %v328 = vld [vmem:[%s1 + $0x80] sm:$0xf]
      %v329 = vld [vmem:[%s1 + $0x84] sm:$0xf]
      %v330 = vld [vmem:[%s1 + $0x88] sm:$0xf]
      %v331 = vld [vmem:[%s1 + $0x8c] sm:$0xf]
      %v332 = vld [vmem:[%s1 + $0x90] sm:$0xf]
      %v333 = vld [vmem:[%s1 + $0x94] sm:$0xf]
      %v334 = vld [vmem:[%s1 + $0x98] sm:$0xf]
      %v335 = vld [vmem:[%s1 + $0x9c] sm:$0xf]
      %v336 = vld [vmem:[%s1 + $0xa0] sm:$0xf]
      %v337 = vld [vmem:[%s1 + $0xa4] sm:$0xf]
      %v338 = vld [vmem:[%s1 + $0xa8] sm:$0xf]
      %v339 = vld [vmem:[%s1 + $0xac] sm:$0xf]
      %v340 = vld [vmem:[%s1 + $0xb0] sm:$0xf]
      %v341 = vld [vmem:[%s1 + $0xb4] sm:$0xf]
      %v342 = vld [vmem:[%s1 + $0xb8] sm:$0xf]
      %v343 = vld [vmem:[%s1 + $0xbc] sm:$0xf]
      %v344 = vld [vmem:[%s1 + $0xc0] sm:$0xf]
      %v345 = vld [vmem:[%s1 + $0xc4] sm:$0xf]
      %v346 = vld [vmem:[%s1 + $0xc8] sm:$0xf]
      %v347 = vld [vmem:[%s1 + $0xcc] sm:$0xf]
      %v348 = vld [vmem:[%s1 + $0xd0] sm:$0xf]
      %v349 = vld [vmem:[%s1 + $0xd4] sm:$0xf]
      %v350 = vld [vmem:[%s1 + $0xd8] sm:$0xf]
      %v351 = vld [vmem:[%s1 + $0xdc] sm:$0xf]
      %v352 = vld [vmem:[%s1 + $0xe0] sm:$0xf]
      %v353 = vld [vmem:[%s1 + $0xe4] sm:$0xf]
      %v354 = vld [vmem:[%s1 + $0xe8] sm:$0xf]
      %v355 = vld [vmem:[%s1 + $0xec] sm:$0xf]
      %v356 = vld [vmem:[%s1 + $0xf0] sm:$0xf]
      %v357 = vld [vmem:[%s1 + $0xf4] sm:$0xf]
      %v358 = vld [vmem:[%s1 + $0xf8] sm:$0xf]
      %v359 = vld [vmem:[%s1 + $0xfc] sm:$0xf]
      %v424 = vunpack.c.l.b16 %v232
      %v425 = vunpack.c.h.b16 %v232
      %v426 = vunpack.c.l.b16 %v233
      %v427 = vunpack.c.h.b16 %v233
      %v428 = vunpack.c.l.b16 %v234
      %v429 = vunpack.c.h.b16 %v234
      %v430 = vunpack.c.l.b16 %v235
      %v431 = vunpack.c.h.b16 %v235
      %v432 = vunpack.c.l.b16 %v236
      %v433 = vunpack.c.h.b16 %v236
      %v434 = vunpack.c.l.b16 %v237
      %v435 = vunpack.c.h.b16 %v237
      %v436 = vunpack.c.l.b16 %v238
      %v437 = vunpack.c.h.b16 %v238
      %v438 = vunpack.c.l.b16 %v239
      %v439 = vunpack.c.h.b16 %v239
      %v440 = vunpack.c.l.b16 %v240
      %v441 = vunpack.c.h.b16 %v240
      %v442 = vunpack.c.l.b16 %v241
      %v443 = vunpack.c.h.b16 %v241
      %v444 = vunpack.c.l.b16 %v242
      %v445 = vunpack.c.h.b16 %v242
      %v446 = vunpack.c.l.b16 %v243
      %v447 = vunpack.c.h.b16 %v243
      %v448 = vunpack.c.l.b16 %v244
      %v449 = vunpack.c.h.b16 %v244
      %v450 = vunpack.c.l.b16 %v245
      %v451 = vunpack.c.h.b16 %v245
      %v452 = vunpack.c.l.b16 %v246
      %v453 = vunpack.c.h.b16 %v246
      %v454 = vunpack.c.l.b16 %v247
      %v455 = vunpack.c.h.b16 %v247
      %v456 = vunpack.c.l.b16 %v248
      %v457 = vunpack.c.h.b16 %v248
      %v458 = vunpack.c.l.b16 %v249
      %v459 = vunpack.c.h.b16 %v249
      %v460 = vunpack.c.l.b16 %v250
      %v461 = vunpack.c.h.b16 %v250
      %v462 = vunpack.c.l.b16 %v251
      %v463 = vunpack.c.h.b16 %v251
      %v464 = vunpack.c.l.b16 %v252
      %v465 = vunpack.c.h.b16 %v252
      %v466 = vunpack.c.l.b16 %v253
      %v467 = vunpack.c.h.b16 %v253
      %v468 = vunpack.c.l.b16 %v254
      %v469 = vunpack.c.h.b16 %v254
      %v470 = vunpack.c.l.b16 %v255
      %v471 = vunpack.c.h.b16 %v255
      %v472 = vunpack.c.l.b16 %v256
      %v473 = vunpack.c.h.b16 %v256
      %v474 = vunpack.c.l.b16 %v257
      %v475 = vunpack.c.h.b16 %v257
      %v476 = vunpack.c.l.b16 %v258
      %v477 = vunpack.c.h.b16 %v258
      %v478 = vunpack.c.l.b16 %v259
      %v479 = vunpack.c.h.b16 %v259
      %v480 = vunpack.c.l.b16 %v260
      %v481 = vunpack.c.h.b16 %v260
      %v482 = vunpack.c.l.b16 %v261
      %v483 = vunpack.c.h.b16 %v261
      %v484 = vunpack.c.l.b16 %v262
      %v485 = vunpack.c.h.b16 %v262
      %v486 = vunpack.c.l.b16 %v263
      %v487 = vunpack.c.h.b16 %v263
      %v488 = vunpack.c.l.b16 %v264
      %v489 = vunpack.c.h.b16 %v264
      %v490 = vunpack.c.l.b16 %v265
      %v491 = vunpack.c.h.b16 %v265
      %v492 = vunpack.c.l.b16 %v266
      %v493 = vunpack.c.h.b16 %v266
      %v494 = vunpack.c.l.b16 %v267
      %v495 = vunpack.c.h.b16 %v267
      %v496 = vunpack.c.l.b16 %v268
      %v497 = vunpack.c.h.b16 %v268
      %v498 = vunpack.c.l.b16 %v269
      %v499 = vunpack.c.h.b16 %v269
      %v500 = vunpack.c.l.b16 %v270
      %v501 = vunpack.c.h.b16 %v270
      %v502 = vunpack.c.l.b16 %v271
      %v503 = vunpack.c.h.b16 %v271
      %v504 = vunpack.c.l.b16 %v272
      %v505 = vunpack.c.h.b16 %v272
      %v506 = vunpack.c.l.b16 %v273
      %v507 = vunpack.c.h.b16 %v273
      %v508 = vunpack.c.l.b16 %v274
      %v509 = vunpack.c.h.b16 %v274
      %v510 = vunpack.c.l.b16 %v275
      %v511 = vunpack.c.h.b16 %v275
      %v512 = vunpack.c.l.b16 %v276
      %v513 = vunpack.c.h.b16 %v276
      %v514 = vunpack.c.l.b16 %v277
      %v515 = vunpack.c.h.b16 %v277
      %v516 = vunpack.c.l.b16 %v278
      %v517 = vunpack.c.h.b16 %v278
      %v518 = vunpack.c.l.b16 %v279
      %v519 = vunpack.c.h.b16 %v279
      %v520 = vunpack.c.l.b16 %v280
      %v521 = vunpack.c.h.b16 %v280
      %v522 = vunpack.c.l.b16 %v281
      %v523 = vunpack.c.h.b16 %v281
      %v524 = vunpack.c.l.b16 %v282
      %v525 = vunpack.c.h.b16 %v282
      %v526 = vunpack.c.l.b16 %v283
      %v527 = vunpack.c.h.b16 %v283
      %v528 = vunpack.c.l.b16 %v284
      %v529 = vunpack.c.h.b16 %v284
      %v530 = vunpack.c.l.b16 %v285
      %v531 = vunpack.c.h.b16 %v285
      %v532 = vunpack.c.l.b16 %v286
      %v533 = vunpack.c.h.b16 %v286
      %v534 = vunpack.c.l.b16 %v287
      %v535 = vunpack.c.h.b16 %v287
      %v536 = vunpack.c.l.b16 %v288
      %v537 = vunpack.c.h.b16 %v288
      %v538 = vunpack.c.l.b16 %v289
      %v539 = vunpack.c.h.b16 %v289
      %v540 = vunpack.c.l.b16 %v290
      %v541 = vunpack.c.h.b16 %v290
      %v542 = vunpack.c.l.b16 %v291
      %v543 = vunpack.c.h.b16 %v291
      %v544 = vunpack.c.l.b16 %v292
      %v545 = vunpack.c.h.b16 %v292
      %v546 = vunpack.c.l.b16 %v293
      %v547 = vunpack.c.h.b16 %v293
      %v548 = vunpack.c.l.b16 %v294
      %v549 = vunpack.c.h.b16 %v294
      %v550 = vunpack.c.l.b16 %v295
      %v551 = vunpack.c.h.b16 %v295
      %v552 = vpack.c.b16 %v428, %v424
      %v553 = vpack.c.b16 %v429, %v425
      %v554 = vpack.c.b16 %v430, %v426
      %v555 = vpack.c.b16 %v431, %v427
      %v556 = vpack.c.b16 %v436, %v432
      %v557 = vpack.c.b16 %v437, %v433
      %v558 = vpack.c.b16 %v438, %v434
      %v559 = vpack.c.b16 %v439, %v435
      %v560 = vpack.c.b16 %v444, %v440
      %v561 = vpack.c.b16 %v445, %v441
      %v562 = vpack.c.b16 %v446, %v442
      %v563 = vpack.c.b16 %v447, %v443
      %v564 = vpack.c.b16 %v452, %v448
      %v565 = vpack.c.b16 %v453, %v449
      %v566 = vpack.c.b16 %v454, %v450
      %v567 = vpack.c.b16 %v455, %v451
      %v568 = vpack.c.b16 %v460, %v456
      %v569 = vpack.c.b16 %v461, %v457
      %v570 = vpack.c.b16 %v462, %v458
      %v571 = vpack.c.b16 %v463, %v459
      %v572 = vpack.c.b16 %v468, %v464
      %v573 = vpack.c.b16 %v469, %v465
      %v574 = vpack.c.b16 %v470, %v466
      %v575 = vpack.c.b16 %v471, %v467
      %v576 = vpack.c.b16 %v476, %v472
      %v577 = vpack.c.b16 %v477, %v473
      %v578 = vpack.c.b16 %v478, %v474
      %v579 = vpack.c.b16 %v479, %v475
      %v580 = vpack.c.b16 %v484, %v480
      %v581 = vpack.c.b16 %v485, %v481
      %v582 = vpack.c.b16 %v486, %v482
      %v583 = vpack.c.b16 %v487, %v483
      %v584 = vpack.c.b16 %v492, %v488
      %v585 = vpack.c.b16 %v493, %v489
      %v586 = vpack.c.b16 %v494, %v490
      %v587 = vpack.c.b16 %v495, %v491
      %v588 = vpack.c.b16 %v500, %v496
      %v589 = vpack.c.b16 %v501, %v497
      %v590 = vpack.c.b16 %v502, %v498
      %v591 = vpack.c.b16 %v503, %v499
      %v592 = vpack.c.b16 %v508, %v504
      %v593 = vpack.c.b16 %v509, %v505
      %v594 = vpack.c.b16 %v510, %v506
      %v595 = vpack.c.b16 %v511, %v507
      %v596 = vpack.c.b16 %v516, %v512
      %v597 = vpack.c.b16 %v517, %v513
      %v598 = vpack.c.b16 %v518, %v514
      %v599 = vpack.c.b16 %v519, %v515
      %v600 = vpack.c.b16 %v524, %v520
      %v601 = vpack.c.b16 %v525, %v521
      %v602 = vpack.c.b16 %v526, %v522
      %v603 = vpack.c.b16 %v527, %v523
      %v604 = vpack.c.b16 %v532, %v528
      %v605 = vpack.c.b16 %v533, %v529
      %v606 = vpack.c.b16 %v534, %v530
      %v607 = vpack.c.b16 %v535, %v531
      %v608 = vpack.c.b16 %v540, %v536
      %v609 = vpack.c.b16 %v541, %v537
      %v610 = vpack.c.b16 %v542, %v538
      %v611 = vpack.c.b16 %v543, %v539
      %v612 = vpack.c.b16 %v548, %v544
      %v613 = vpack.c.b16 %v549, %v545
      %v614 = vpack.c.b16 %v550, %v546
      %v615 = vpack.c.b16 %v551, %v547
      %v744 = vunpack.c.l.b16 %v296
      %v745 = vunpack.c.l.b16 %v297
      %v746 = vunpack.c.l.b16 %v298
      %v747 = vunpack.c.l.b16 %v299
      %v748 = vunpack.c.l.b16 %v300
      %v749 = vunpack.c.l.b16 %v301
      %v750 = vunpack.c.l.b16 %v302
      %v751 = vunpack.c.l.b16 %v303
      %v752 = vunpack.c.l.b16 %v304
      %v753 = vunpack.c.l.b16 %v305
      %v754 = vunpack.c.l.b16 %v306
      %v755 = vunpack.c.l.b16 %v307
      %v756 = vunpack.c.l.b16 %v308
      %v757 = vunpack.c.l.b16 %v309
      %v758 = vunpack.c.l.b16 %v310
      %v759 = vunpack.c.l.b16 %v311
      %v760 = vunpack.c.l.b16 %v312
      %v761 = vunpack.c.l.b16 %v313
      %v762 = vunpack.c.l.b16 %v314
      %v763 = vunpack.c.l.b16 %v315
      %v764 = vunpack.c.l.b16 %v316
      %v765 = vunpack.c.l.b16 %v317
      %v766 = vunpack.c.l.b16 %v318
      %v767 = vunpack.c.l.b16 %v319
      %v768 = vunpack.c.l.b16 %v320
      %v769 = vunpack.c.l.b16 %v321
      %v770 = vunpack.c.l.b16 %v322
      %v771 = vunpack.c.l.b16 %v323
      %v772 = vunpack.c.l.b16 %v324
      %v773 = vunpack.c.l.b16 %v325
      %v774 = vunpack.c.l.b16 %v326
      %v775 = vunpack.c.l.b16 %v327
      %v776 = vunpack.c.l.b16 %v328
      %v777 = vunpack.c.l.b16 %v329
      %v778 = vunpack.c.l.b16 %v330
      %v779 = vunpack.c.l.b16 %v331
      %v780 = vunpack.c.l.b16 %v332
      %v781 = vunpack.c.l.b16 %v333
      %v782 = vunpack.c.l.b16 %v334
      %v783 = vunpack.c.l.b16 %v335
      %v784 = vunpack.c.l.b16 %v336
      %v785 = vunpack.c.l.b16 %v337
      %v786 = vunpack.c.l.b16 %v338
      %v787 = vunpack.c.l.b16 %v339
      %v788 = vunpack.c.l.b16 %v340
      %v789 = vunpack.c.l.b16 %v341
      %v790 = vunpack.c.l.b16 %v342
      %v791 = vunpack.c.l.b16 %v343
      %v792 = vunpack.c.l.b16 %v344
      %v793 = vunpack.c.l.b16 %v345
      %v794 = vunpack.c.l.b16 %v346
      %v795 = vunpack.c.l.b16 %v347
      %v796 = vunpack.c.l.b16 %v348
      %v797 = vunpack.c.l.b16 %v349
      %v798 = vunpack.c.l.b16 %v350
      %v799 = vunpack.c.l.b16 %v351
      %v800 = vunpack.c.l.b16 %v352
      %v801 = vunpack.c.l.b16 %v353
      %v802 = vunpack.c.l.b16 %v354
      %v803 = vunpack.c.l.b16 %v355
      %v804 = vunpack.c.l.b16 %v356
      %v805 = vunpack.c.l.b16 %v357
      %v806 = vunpack.c.l.b16 %v358
      %v807 = vunpack.c.l.b16 %v359
      %v808 = vpack.c.b16 %v745, %v744
      %v809 = vpack.c.b16 %v747, %v746
      %v810 = vpack.c.b16 %v749, %v748
      %v811 = vpack.c.b16 %v751, %v750
      %v812 = vpack.c.b16 %v753, %v752
      %v813 = vpack.c.b16 %v755, %v754
      %v814 = vpack.c.b16 %v757, %v756
      %v815 = vpack.c.b16 %v759, %v758
      %v816 = vpack.c.b16 %v761, %v760
      %v817 = vpack.c.b16 %v763, %v762
      %v818 = vpack.c.b16 %v765, %v764
      %v819 = vpack.c.b16 %v767, %v766
      %v820 = vpack.c.b16 %v769, %v768
      %v821 = vpack.c.b16 %v771, %v770
      %v822 = vpack.c.b16 %v773, %v772
      %v823 = vpack.c.b16 %v775, %v774
      %v824 = vpack.c.b16 %v777, %v776
      %v825 = vpack.c.b16 %v779, %v778
      %v826 = vpack.c.b16 %v781, %v780
      %v827 = vpack.c.b16 %v783, %v782
      %v828 = vpack.c.b16 %v785, %v784
      %v829 = vpack.c.b16 %v787, %v786
      %v830 = vpack.c.b16 %v789, %v788
      %v831 = vpack.c.b16 %v791, %v790
      %v832 = vpack.c.b16 %v793, %v792
      %v833 = vpack.c.b16 %v795, %v794
      %v834 = vpack.c.b16 %v797, %v796
      %v835 = vpack.c.b16 %v799, %v798
      %v836 = vpack.c.b16 %v801, %v800
      %v837 = vpack.c.b16 %v803, %v802
      %v838 = vpack.c.b16 %v805, %v804
      %v839 = vpack.c.b16 %v807, %v806
      %872 = vmatprep.subr.bf16.mxu0 0
      %873 = vmatpush1.bf16.msra.mxu0 %v815
      %874 = vmatprep.subr.bf16.mxu0 0
      %875 = vmatpush1.bf16.msra.mxu0 %v814
      %876 = vmatprep.subr.bf16.mxu0 0
      %877 = vmatpush1.bf16.msra.mxu0 %v813
      %878 = vmatprep.subr.bf16.mxu0 0
      %879 = vmatpush1.bf16.msra.mxu0 %v812
      %880 = vmatprep.subr.bf16.mxu0 0
      %881 = vmatpush1.bf16.msra.mxu0 %v811
      %882 = vmatprep.subr.bf16.mxu0 0
      %883 = vmatpush1.bf16.msra.mxu0 %v810
      %884 = vmatprep.subr.bf16.mxu0 0
      %885 = vmatpush1.bf16.msra.mxu0 %v809
      %886 = vmatprep.subr.bf16.mxu0 0
      %887 = vmatpush1.bf16.msra.mxu0 %v808
      %888 = vmatprep.subr.bf16.mxu0 0
      %889 = vmatpush2.bf16.msra.mxu0 %v823
      %890 = vmatprep.subr.bf16.mxu0 0
      %891 = vmatpush2.bf16.msra.mxu0 %v822
      %892 = vmatprep.subr.bf16.mxu0 0
      %893 = vmatpush2.bf16.msra.mxu0 %v821
      %894 = vmatprep.subr.bf16.mxu0 0
      %895 = vmatpush2.bf16.msra.mxu0 %v820
      %896 = vmatprep.subr.bf16.mxu0 0
      %897 = vmatpush2.bf16.msra.mxu0 %v819
      %898 = vmatprep.subr.bf16.mxu0 0
      %899 = vmatpush2.bf16.msra.mxu0 %v818
      %900 = vmatprep.subr.bf16.mxu0 0
      %901 = vmatpush2.bf16.msra.mxu0 %v817
      %902 = vmatprep.subr.bf16.mxu0 0
      %903 = vmatpush2.bf16.msra.mxu0 %v816
      %904 = vmatprep.mubr.bf16.mxu0 %v553
      %905 = vmatmul.mubr.bf16.gmra.mxu0 %v552
      %v906 = vpop.f32.mrf.mxu0
      %v907 = vadd.f32 0.0, %v906
      %v908 = vpop.f32.mrf.mxu0
      %v909 = vpop.f32.mrf.mxu0
      %v910 = vadd.f32 0.0, %v909
      %v911 = vpop.f32.mrf.mxu0
      %912 = vmatprep.mubr.bf16.mxu0 %v557
      %913 = vmatmul.mubr.bf16.gmra.mxu0 %v556
      %v914 = vpop.f32.mrf.mxu0
      %v915 = vadd.f32 0.0, %v914
      %v916 = vpop.f32.mrf.mxu0
      %v917 = vpop.f32.mrf.mxu0
      %v918 = vadd.f32 0.0, %v917
      %v919 = vpop.f32.mrf.mxu0
      %920 = vmatprep.mubr.bf16.mxu0 %v561
      %921 = vmatmul.mubr.bf16.gmra.mxu0 %v560
      %v922 = vpop.f32.mrf.mxu0
      %v923 = vadd.f32 0.0, %v922
      %v924 = vpop.f32.mrf.mxu0
      %v925 = vpop.f32.mrf.mxu0
      %v926 = vadd.f32 0.0, %v925
      %v927 = vpop.f32.mrf.mxu0
      %928 = vmatprep.mubr.bf16.mxu0 %v565
      %929 = vmatmul.mubr.bf16.gmra.mxu0 %v564
      %v930 = vpop.f32.mrf.mxu0
      %v931 = vadd.f32 0.0, %v930
      %v932 = vpop.f32.mrf.mxu0
      %v933 = vpop.f32.mrf.mxu0
      %v934 = vadd.f32 0.0, %v933
      %v935 = vpop.f32.mrf.mxu0
      %936 = vmatprep.mubr.bf16.mxu0 %v569
      %937 = vmatmul.mubr.bf16.gmra.mxu0 %v568
      %v938 = vpop.f32.mrf.mxu0
      %v939 = vadd.f32 0.0, %v938
      %v940 = vpop.f32.mrf.mxu0
      %v941 = vpop.f32.mrf.mxu0
      %v942 = vadd.f32 0.0, %v941
      %v943 = vpop.f32.mrf.mxu0
      %944 = vmatprep.mubr.bf16.mxu0 %v573
      %945 = vmatmul.mubr.bf16.gmra.mxu0 %v572
      %v946 = vpop.f32.mrf.mxu0
      %v947 = vadd.f32 0.0, %v946
      %v948 = vpop.f32.mrf.mxu0
      %v949 = vpop.f32.mrf.mxu0
      %v950 = vadd.f32 0.0, %v949
      %v951 = vpop.f32.mrf.mxu0
      %952 = vmatprep.mubr.bf16.mxu0 %v577
      %953 = vmatmul.mubr.bf16.gmra.mxu0 %v576
      %v954 = vpop.f32.mrf.mxu0
      %v955 = vadd.f32 0.0, %v954
      %v956 = vpop.f32.mrf.mxu0
      %v957 = vpop.f32.mrf.mxu0
      %v958 = vadd.f32 0.0, %v957
      %v959 = vpop.f32.mrf.mxu0
      %960 = vmatprep.mubr.bf16.mxu0 %v581
      %961 = vmatmul.mubr.bf16.gmra.mxu0 %v580
      %v962 = vpop.f32.mrf.mxu0
      %v963 = vadd.f32 0.0, %v962
      %v964 = vpop.f32.mrf.mxu0
      %v965 = vpop.f32.mrf.mxu0
      %v966 = vadd.f32 0.0, %v965
      %v967 = vpop.f32.mrf.mxu0
      %968 = vmatprep.mubr.bf16.mxu0 %v585
      %969 = vmatmul.mubr.bf16.gmra.mxu0 %v584
      %v970 = vpop.f32.mrf.mxu0
      %v971 = vadd.f32 0.0, %v970
      %v972 = vpop.f32.mrf.mxu0
      %v973 = vpop.f32.mrf.mxu0
      %v974 = vadd.f32 0.0, %v973
      %v975 = vpop.f32.mrf.mxu0
      %976 = vmatprep.mubr.bf16.mxu0 %v589
      %977 = vmatmul.mubr.bf16.gmra.mxu0 %v588
      %v978 = vpop.f32.mrf.mxu0
      %v979 = vadd.f32 0.0, %v978
      %v980 = vpop.f32.mrf.mxu0
      %v981 = vpop.f32.mrf.mxu0
      %v982 = vadd.f32 0.0, %v981
      %v983 = vpop.f32.mrf.mxu0
      %984 = vmatprep.mubr.bf16.mxu0 %v593
      %985 = vmatmul.mubr.bf16.gmra.mxu0 %v592
      %v986 = vpop.f32.mrf.mxu0
      %v987 = vadd.f32 0.0, %v986
      %v988 = vpop.f32.mrf.mxu0
      %v989 = vpop.f32.mrf.mxu0
      %v990 = vadd.f32 0.0, %v989
      %v991 = vpop.f32.mrf.mxu0
      %992 = vmatprep.mubr.bf16.mxu0 %v597
      %993 = vmatmul.mubr.bf16.gmra.mxu0 %v596
      %v994 = vpop.f32.mrf.mxu0
      %v995 = vadd.f32 0.0, %v994
      %v996 = vpop.f32.mrf.mxu0
      %v997 = vpop.f32.mrf.mxu0
      %v998 = vadd.f32 0.0, %v997
      %v999 = vpop.f32.mrf.mxu0
      %1000 = vmatprep.mubr.bf16.mxu0 %v601
      %1001 = vmatmul.mubr.bf16.gmra.mxu0 %v600
      %v1002 = vpop.f32.mrf.mxu0
      %v1003 = vadd.f32 0.0, %v1002
      %v1004 = vpop.f32.mrf.mxu0
      %v1005 = vpop.f32.mrf.mxu0
      %v1006 = vadd.f32 0.0, %v1005
      %v1007 = vpop.f32.mrf.mxu0
      %1008 = vmatprep.mubr.bf16.mxu0 %v605
      %1009 = vmatmul.mubr.bf16.gmra.mxu0 %v604
      %v1010 = vpop.f32.mrf.mxu0
      %v1011 = vadd.f32 0.0, %v1010
      %v1012 = vpop.f32.mrf.mxu0
      %v1013 = vpop.f32.mrf.mxu0
      %v1014 = vadd.f32 0.0, %v1013
      %v1015 = vpop.f32.mrf.mxu0
      %1016 = vmatprep.mubr.bf16.mxu0 %v609
      %1017 = vmatmul.mubr.bf16.gmra.mxu0 %v608
      %v1018 = vpop.f32.mrf.mxu0
      %v1019 = vadd.f32 0.0, %v1018
      %v1020 = vpop.f32.mrf.mxu0
      %v1021 = vpop.f32.mrf.mxu0
      %v1022 = vadd.f32 0.0, %v1021
      %v1023 = vpop.f32.mrf.mxu0
      %1024 = vmatprep.mubr.bf16.mxu0 %v613
      %1025 = vmatmul.mubr.bf16.gmra.mxu0 %v612
      %v1026 = vpop.f32.mrf.mxu0
      %v1027 = vadd.f32 0.0, %v1026
      %v1028 = vpop.f32.mrf.mxu0
      %v1029 = vpop.f32.mrf.mxu0
      %v1030 = vadd.f32 0.0, %v1029
      %v1031 = vpop.f32.mrf.mxu0
      %1032 = vdwg.mxu0
      %1033 = vmatprep.subr.bf16.mxu0 0
      %1034 = vmatpush1.bf16.msra.mxu0 %v831
      %1035 = vmatprep.subr.bf16.mxu0 0
      %1036 = vmatpush1.bf16.msra.mxu0 %v830
      %1037 = vmatprep.subr.bf16.mxu0 0
      %1038 = vmatpush1.bf16.msra.mxu0 %v829
      %1039 = vmatprep.subr.bf16.mxu0 0
      %1040 = vmatpush1.bf16.msra.mxu0 %v828
      %1041 = vmatprep.subr.bf16.mxu0 0
      %1042 = vmatpush1.bf16.msra.mxu0 %v827
      %1043 = vmatprep.subr.bf16.mxu0 0
      %1044 = vmatpush1.bf16.msra.mxu0 %v826
      %1045 = vmatprep.subr.bf16.mxu0 0
      %1046 = vmatpush1.bf16.msra.mxu0 %v825
      %1047 = vmatprep.subr.bf16.mxu0 0
      %1048 = vmatpush1.bf16.msra.mxu0 %v824
      %1049 = vmatprep.subr.bf16.mxu0 0
      %1050 = vmatpush2.bf16.msra.mxu0 %v839
      %1051 = vmatprep.subr.bf16.mxu0 0
      %1052 = vmatpush2.bf16.msra.mxu0 %v838
      %1053 = vmatprep.subr.bf16.mxu0 0
      %1054 = vmatpush2.bf16.msra.mxu0 %v837
      %1055 = vmatprep.subr.bf16.mxu0 0
      %1056 = vmatpush2.bf16.msra.mxu0 %v836
      %1057 = vmatprep.subr.bf16.mxu0 0
      %1058 = vmatpush2.bf16.msra.mxu0 %v835
      %1059 = vmatprep.subr.bf16.mxu0 0
      %1060 = vmatpush2.bf16.msra.mxu0 %v834
      %1061 = vmatprep.subr.bf16.mxu0 0
      %1062 = vmatpush2.bf16.msra.mxu0 %v833
      %1063 = vmatprep.subr.bf16.mxu0 0
      %1064 = vmatpush2.bf16.msra.mxu0 %v832
      %1065 = vmatprep.mubr.bf16.mxu0 %v555
      %1066 = vmatmul.mubr.bf16.gmra.mxu0 %v554
      %v1067 = vpop.f32.mrf.mxu0
      %v1068 = vadd.f32 %v907, %v1067
      %v1069 = vpop.f32.mrf.mxu0
      %v1070 = vpop.f32.mrf.mxu0
      %v1071 = vadd.f32 %v910, %v1070
      %v1072 = vpop.f32.mrf.mxu0
      %1073 = vmatprep.mubr.bf16.mxu0 %v559
      %1074 = vmatmul.mubr.bf16.gmra.mxu0 %v558
      %v1075 = vpop.f32.mrf.mxu0
      %v1076 = vadd.f32 %v915, %v1075
      %v1077 = vpop.f32.mrf.mxu0
      %v1078 = vpop.f32.mrf.mxu0
      %v1079 = vadd.f32 %v918, %v1078
      %v1080 = vpop.f32.mrf.mxu0
      %1081 = vmatprep.mubr.bf16.mxu0 %v563
      %1082 = vmatmul.mubr.bf16.gmra.mxu0 %v562
      %v1083 = vpop.f32.mrf.mxu0
      %v1084 = vadd.f32 %v923, %v1083
      %v1085 = vpop.f32.mrf.mxu0
      %v1086 = vpop.f32.mrf.mxu0
      %v1087 = vadd.f32 %v926, %v1086
      %v1088 = vpop.f32.mrf.mxu0
      %1089 = vmatprep.mubr.bf16.mxu0 %v567
      %1090 = vmatmul.mubr.bf16.gmra.mxu0 %v566
      %v1091 = vpop.f32.mrf.mxu0
      %v1092 = vadd.f32 %v931, %v1091
      %v1093 = vpop.f32.mrf.mxu0
      %v1094 = vpop.f32.mrf.mxu0
      %v1095 = vadd.f32 %v934, %v1094
      %v1096 = vpop.f32.mrf.mxu0
      %1097 = vmatprep.mubr.bf16.mxu0 %v571
      %1098 = vmatmul.mubr.bf16.gmra.mxu0 %v570
      %v1099 = vpop.f32.mrf.mxu0
      %v1100 = vadd.f32 %v939, %v1099
      %v1101 = vpop.f32.mrf.mxu0
      %v1102 = vpop.f32.mrf.mxu0
      %v1103 = vadd.f32 %v942, %v1102
      %v1104 = vpop.f32.mrf.mxu0
      %1105 = vmatprep.mubr.bf16.mxu0 %v575
      %1106 = vmatmul.mubr.bf16.gmra.mxu0 %v574
      %v1107 = vpop.f32.mrf.mxu0
      %v1108 = vadd.f32 %v947, %v1107
      %v1109 = vpop.f32.mrf.mxu0
      %v1110 = vpop.f32.mrf.mxu0
      %v1111 = vadd.f32 %v950, %v1110
      %v1112 = vpop.f32.mrf.mxu0
      %1113 = vmatprep.mubr.bf16.mxu0 %v579
      %1114 = vmatmul.mubr.bf16.gmra.mxu0 %v578
      %v1115 = vpop.f32.mrf.mxu0
      %v1116 = vadd.f32 %v955, %v1115
      %v1117 = vpop.f32.mrf.mxu0
      %v1118 = vpop.f32.mrf.mxu0
      %v1119 = vadd.f32 %v958, %v1118
      %v1120 = vpop.f32.mrf.mxu0
      %1121 = vmatprep.mubr.bf16.mxu0 %v583
      %1122 = vmatmul.mubr.bf16.gmra.mxu0 %v582
      %v1123 = vpop.f32.mrf.mxu0
      %v1124 = vadd.f32 %v963, %v1123
      %v1125 = vpop.f32.mrf.mxu0
      %v1126 = vpop.f32.mrf.mxu0
      %v1127 = vadd.f32 %v966, %v1126
      %v1128 = vpop.f32.mrf.mxu0
      %1129 = vmatprep.mubr.bf16.mxu0 %v587
      %1130 = vmatmul.mubr.bf16.gmra.mxu0 %v586
      %v1131 = vpop.f32.mrf.mxu0
      %v1132 = vadd.f32 %v971, %v1131
      %v1133 = vpop.f32.mrf.mxu0
      %v1134 = vpop.f32.mrf.mxu0
      %v1135 = vadd.f32 %v974, %v1134
      %v1136 = vpop.f32.mrf.mxu0
      %1137 = vmatprep.mubr.bf16.mxu0 %v591
      %1138 = vmatmul.mubr.bf16.gmra.mxu0 %v590
      %v1139 = vpop.f32.mrf.mxu0
      %v1140 = vadd.f32 %v979, %v1139
      %v1141 = vpop.f32.mrf.mxu0
      %v1142 = vpop.f32.mrf.mxu0
      %v1143 = vadd.f32 %v982, %v1142
      %v1144 = vpop.f32.mrf.mxu0
      %1145 = vmatprep.mubr.bf16.mxu0 %v595
      %1146 = vmatmul.mubr.bf16.gmra.mxu0 %v594
      %v1147 = vpop.f32.mrf.mxu0
      %v1148 = vadd.f32 %v987, %v1147
      %v1149 = vpop.f32.mrf.mxu0
      %v1150 = vpop.f32.mrf.mxu0
      %v1151 = vadd.f32 %v990, %v1150
      %v1152 = vpop.f32.mrf.mxu0
      %1153 = vmatprep.mubr.bf16.mxu0 %v599
      %1154 = vmatmul.mubr.bf16.gmra.mxu0 %v598
      %v1155 = vpop.f32.mrf.mxu0
      %v1156 = vadd.f32 %v995, %v1155
      %v1157 = vpop.f32.mrf.mxu0
      %v1158 = vpop.f32.mrf.mxu0
      %v1159 = vadd.f32 %v998, %v1158
      %v1160 = vpop.f32.mrf.mxu0
      %1161 = vmatprep.mubr.bf16.mxu0 %v603
      %1162 = vmatmul.mubr.bf16.gmra.mxu0 %v602
      %v1163 = vpop.f32.mrf.mxu0
      %v1164 = vadd.f32 %v1003, %v1163
      %v1165 = vpop.f32.mrf.mxu0
      %v1166 = vpop.f32.mrf.mxu0
      %v1167 = vadd.f32 %v1006, %v1166
      %v1168 = vpop.f32.mrf.mxu0
      %1169 = vmatprep.mubr.bf16.mxu0 %v607
      %1170 = vmatmul.mubr.bf16.gmra.mxu0 %v606
      %v1171 = vpop.f32.mrf.mxu0
      %v1172 = vadd.f32 %v1011, %v1171
      %v1173 = vpop.f32.mrf.mxu0
      %v1174 = vpop.f32.mrf.mxu0
      %v1175 = vadd.f32 %v1014, %v1174
      %v1176 = vpop.f32.mrf.mxu0
      %1177 = vmatprep.mubr.bf16.mxu0 %v611
      %1178 = vmatmul.mubr.bf16.gmra.mxu0 %v610
      %v1179 = vpop.f32.mrf.mxu0
      %v1180 = vadd.f32 %v1019, %v1179
      %v1181 = vpop.f32.mrf.mxu0
      %v1182 = vpop.f32.mrf.mxu0
      %v1183 = vadd.f32 %v1022, %v1182
      %v1184 = vpop.f32.mrf.mxu0
      %1185 = vmatprep.mubr.bf16.mxu0 %v615
      %1186 = vmatmul.mubr.bf16.gmra.mxu0 %v614
      %v1187 = vpop.f32.mrf.mxu0
      %v1188 = vadd.f32 %v1027, %v1187
      %v1189 = vpop.f32.mrf.mxu0
      %v1190 = vpop.f32.mrf.mxu0
      %v1191 = vadd.f32 %v1030, %v1190
      %v1192 = vpop.f32.mrf.mxu0
      %1193 = vdwg.mxu0
      %v1194 = vld [vmem:[%s2] sm:$0xff]
      %v1195 = vld [vmem:[%s2 + $0x8] sm:$0xff]
      %v1196 = vld [vmem:[%s2 + $0x10] sm:$0xff]
      %v1197 = vld [vmem:[%s2 + $0x18] sm:$0xff]
      %v1198 = vld [vmem:[%s2 + $0x20] sm:$0xff]
      %v1199 = vld [vmem:[%s2 + $0x28] sm:$0xff]
      %v1200 = vld [vmem:[%s2 + $0x30] sm:$0xff]
      %v1201 = vld [vmem:[%s2 + $0x38] sm:$0xff]
      %v1202 = vld [vmem:[%s3] sm:$0x3]
      %v1204 = vlaneseq
      %v1205 = vshrl.u32 %v1204, 7
      %v1206 = vsub.s32 0, %v1205
      %v1207 = vrot.slane %v1202, %v1206
      %v1208 = vlaneseq
      %v1209 = vshrl.u32 %v1208, 7
      %v1210 = vsub.s32 1, %v1209
      %v1211 = vrot.slane %v1202, %v1210
      %vm1214 = vcmask 261120
      %v1216 = vsel %vm1214, %v1068, 0
      %v1219 = vsel %vm1214, %v1071, 0
      %v1222 = vsel %vm1214, %v1076, 0
      %v1225 = vsel %vm1214, %v1079, 0
      %v1228 = vsel %vm1214, %v1084, 0
      %v1231 = vsel %vm1214, %v1087, 0
      %v1234 = vsel %vm1214, %v1092, 0
      %v1237 = vsel %vm1214, %v1095, 0
      %v1240 = vsel %vm1214, %v1100, 0
      %v1243 = vsel %vm1214, %v1103, 0
      %v1246 = vsel %vm1214, %v1108, 0
      %v1249 = vsel %vm1214, %v1111, 0
      %v1252 = vsel %vm1214, %v1116, 0
      %v1255 = vsel %vm1214, %v1119, 0
      %v1258 = vsel %vm1214, %v1124, 0
      %v1261 = vsel %vm1214, %v1127, 0
      %v1264 = vsel %vm1214, %v1132, 0
      %v1267 = vsel %vm1214, %v1135, 0
      %v1270 = vsel %vm1214, %v1140, 0
      %v1273 = vsel %vm1214, %v1143, 0
      %v1276 = vsel %vm1214, %v1148, 0
      %v1279 = vsel %vm1214, %v1151, 0
      %v1282 = vsel %vm1214, %v1156, 0
      %v1285 = vsel %vm1214, %v1159, 0
      %v1288 = vsel %vm1214, %v1164, 0
      %v1291 = vsel %vm1214, %v1167, 0
      %v1294 = vsel %vm1214, %v1172, 0
      %v1297 = vsel %vm1214, %v1175, 0
      %v1300 = vsel %vm1214, %v1180, 0
      %v1303 = vsel %vm1214, %v1183, 0
      %v1306 = vsel %vm1214, %v1188, 0
      %v1309 = vsel %vm1214, %v1191, 0
      %1311 = vmatprep.subr.mxu0 0.0
      %1312 = vmatpush1.msra.mxu0 0.0
      %1313 = vmatprep.subr.mxu0 0.0
      %1314 = vmatpush1.msra.mxu0 0.0
      %1315 = vmatprep.subr.mxu0 0.0
      %1316 = vmatpush1.msra.mxu0 0.0
      %1317 = vmatprep.subr.mxu0 0.0
      %1318 = vmatpush1.msra.mxu0 0.0
      %1319 = vmatprep.subr.mxu0 0.0
      %1320 = vmatpush1.msra.mxu0 0.0
      %1321 = vmatprep.subr.mxu0 0.0
      %1322 = vmatpush1.msra.mxu0 0.0
      %1323 = vmatprep.subr.mxu0 0.0
      %1324 = vmatpush1.msra.mxu0 0.0
      %1325 = vmatprep.subr.mxu0 0.0
      %1326 = vmatpush1.msra.mxu0 0.0
      %1327 = vmatprep.subr.mxu0 0.0
      %1328 = vmatpush1.msra.mxu0 0.0
      %1329 = vmatprep.subr.mxu0 0.0
      %1330 = vmatpush1.msra.mxu0 0.0
      %1331 = vmatprep.subr.mxu0 0.0
      %1332 = vmatpush1.msra.mxu0 0.0
      %1333 = vmatprep.subr.mxu0 0.0
      %1334 = vmatpush1.msra.mxu0 0.0
      %1335 = vmatprep.subr.mxu0 %v1201
      %1336 = vmatpush1.msra.mxu0 %v1200
      %1337 = vmatprep.subr.mxu0 %v1199
      %1338 = vmatpush1.msra.mxu0 %v1198
      %1339 = vmatprep.subr.mxu0 %v1197
      %1340 = vmatpush1.msra.mxu0 %v1196
      %1341 = vmatprep.subr.mxu0 %v1195
      %1342 = vmatpush1.msra.mxu0 %v1194
      %1343 = vmatprep.subr.mxu0 0.0
      %1344 = vmatpush2.msra.mxu0 0.0
      %1345 = vmatprep.subr.mxu0 0.0
      %1346 = vmatpush2.msra.mxu0 0.0
      %1347 = vmatprep.subr.mxu0 0.0
      %1348 = vmatpush2.msra.mxu0 0.0
      %1349 = vmatprep.subr.mxu0 0.0
      %1350 = vmatpush2.msra.mxu0 0.0
      %1351 = vmatprep.subr.mxu0 0.0
      %1352 = vmatpush2.msra.mxu0 0.0
      %1353 = vmatprep.subr.mxu0 0.0
      %1354 = vmatpush2.msra.mxu0 0.0
      %1355 = vmatprep.subr.mxu0 0.0
      %1356 = vmatpush2.msra.mxu0 0.0
      %1357 = vmatprep.subr.mxu0 0.0
      %1358 = vmatpush2.msra.mxu0 0.0
      %1359 = vmatprep.subr.mxu0 0.0
      %1360 = vmatpush2.msra.mxu0 0.0
      %1361 = vmatprep.subr.mxu0 0.0
      %1362 = vmatpush2.msra.mxu0 0.0
      %1363 = vmatprep.subr.mxu0 0.0
      %1364 = vmatpush2.msra.mxu0 0.0
      %1365 = vmatprep.subr.mxu0 0.0
      %1366 = vmatpush2.msra.mxu0 0.0
      %1367 = vmatprep.subr.mxu0 0.0
      %1368 = vmatpush2.msra.mxu0 0.0
      %1369 = vmatprep.subr.mxu0 0.0
      %1370 = vmatpush2.msra.mxu0 0.0
      %1371 = vmatprep.subr.mxu0 0.0
      %1372 = vmatpush2.msra.mxu0 0.0
      %1373 = vmatprep.subr.mxu0 0.0
      %1374 = vmatpush2.msra.mxu0 0.0
      %1375 = vmatprep.mubr.f32.mxu0 0.0
      %1376 = vmatmul.mubr.f32.gmra.mxu0 %v1216
      %v1377 = vpop.f32.mrf.mxu0
      %v1378 = vadd.f32 %v1207, %v1377
      %v1379 = vpop.f32.mrf.mxu0
      %v1380 = vadd.f32 %v1211, %v1379
      %1381 = vmatprep.mubr.f32.mxu0 0.0
      %1382 = vmatmul.mubr.f32.gmra.mxu0 %v1219
      %v1383 = vpop.f32.mrf.mxu0
      %v1384 = vadd.f32 %v1207, %v1383
      %v1385 = vpop.f32.mrf.mxu0
      %v1386 = vadd.f32 %v1211, %v1385
      %1387 = vmatprep.mubr.f32.mxu0 0.0
      %1388 = vmatmul.mubr.f32.gmra.mxu0 %v1222
      %v1389 = vpop.f32.mrf.mxu0
      %v1390 = vadd.f32 %v1207, %v1389
      %v1391 = vpop.f32.mrf.mxu0
      %v1392 = vadd.f32 %v1211, %v1391
      %1393 = vmatprep.mubr.f32.mxu0 0.0
      %1394 = vmatmul.mubr.f32.gmra.mxu0 %v1225
      %v1395 = vpop.f32.mrf.mxu0
      %v1396 = vadd.f32 %v1207, %v1395
      %v1397 = vpop.f32.mrf.mxu0
      %v1398 = vadd.f32 %v1211, %v1397
      %1399 = vmatprep.mubr.f32.mxu0 0.0
      %1400 = vmatmul.mubr.f32.gmra.mxu0 %v1228
      %v1401 = vpop.f32.mrf.mxu0
      %v1402 = vadd.f32 %v1207, %v1401
      %v1403 = vpop.f32.mrf.mxu0
      %v1404 = vadd.f32 %v1211, %v1403
      %1405 = vmatprep.mubr.f32.mxu0 0.0
      %1406 = vmatmul.mubr.f32.gmra.mxu0 %v1231
      %v1407 = vpop.f32.mrf.mxu0
      %v1408 = vadd.f32 %v1207, %v1407
      %v1409 = vpop.f32.mrf.mxu0
      %v1410 = vadd.f32 %v1211, %v1409
      %1411 = vmatprep.mubr.f32.mxu0 0.0
      %1412 = vmatmul.mubr.f32.gmra.mxu0 %v1234
      %v1413 = vpop.f32.mrf.mxu0
      %v1414 = vadd.f32 %v1207, %v1413
      %v1415 = vpop.f32.mrf.mxu0
      %v1416 = vadd.f32 %v1211, %v1415
      %1417 = vmatprep.mubr.f32.mxu0 0.0
      %1418 = vmatmul.mubr.f32.gmra.mxu0 %v1237
      %v1419 = vpop.f32.mrf.mxu0
      %v1420 = vadd.f32 %v1207, %v1419
      %v1421 = vpop.f32.mrf.mxu0
      %v1422 = vadd.f32 %v1211, %v1421
      %1423 = vmatprep.mubr.f32.mxu0 0.0
      %1424 = vmatmul.mubr.f32.gmra.mxu0 %v1240
      %v1425 = vpop.f32.mrf.mxu0
      %v1426 = vadd.f32 %v1207, %v1425
      %v1427 = vpop.f32.mrf.mxu0
      %v1428 = vadd.f32 %v1211, %v1427
      %1429 = vmatprep.mubr.f32.mxu0 0.0
      %1430 = vmatmul.mubr.f32.gmra.mxu0 %v1243
      %v1431 = vpop.f32.mrf.mxu0
      %v1432 = vadd.f32 %v1207, %v1431
      %v1433 = vpop.f32.mrf.mxu0
      %v1434 = vadd.f32 %v1211, %v1433
      %1435 = vmatprep.mubr.f32.mxu0 0.0
      %1436 = vmatmul.mubr.f32.gmra.mxu0 %v1246
      %v1437 = vpop.f32.mrf.mxu0
      %v1438 = vadd.f32 %v1207, %v1437
      %v1439 = vpop.f32.mrf.mxu0
      %v1440 = vadd.f32 %v1211, %v1439
      %1441 = vmatprep.mubr.f32.mxu0 0.0
      %1442 = vmatmul.mubr.f32.gmra.mxu0 %v1249
      %v1443 = vpop.f32.mrf.mxu0
      %v1444 = vadd.f32 %v1207, %v1443
      %v1445 = vpop.f32.mrf.mxu0
      %v1446 = vadd.f32 %v1211, %v1445
      %1447 = vmatprep.mubr.f32.mxu0 0.0
      %1448 = vmatmul.mubr.f32.gmra.mxu0 %v1252
      %v1449 = vpop.f32.mrf.mxu0
      %v1450 = vadd.f32 %v1207, %v1449
      %v1451 = vpop.f32.mrf.mxu0
      %v1452 = vadd.f32 %v1211, %v1451
      %1453 = vmatprep.mubr.f32.mxu0 0.0
      %1454 = vmatmul.mubr.f32.gmra.mxu0 %v1255
      %v1455 = vpop.f32.mrf.mxu0
      %v1456 = vadd.f32 %v1207, %v1455
      %v1457 = vpop.f32.mrf.mxu0
      %v1458 = vadd.f32 %v1211, %v1457
      %1459 = vmatprep.mubr.f32.mxu0 0.0
      %1460 = vmatmul.mubr.f32.gmra.mxu0 %v1258
      %v1461 = vpop.f32.mrf.mxu0
      %v1462 = vadd.f32 %v1207, %v1461
      %v1463 = vpop.f32.mrf.mxu0
      %v1464 = vadd.f32 %v1211, %v1463
      %1465 = vmatprep.mubr.f32.mxu0 0.0
      %1466 = vmatmul.mubr.f32.gmra.mxu0 %v1261
      %v1467 = vpop.f32.mrf.mxu0
      %v1468 = vadd.f32 %v1207, %v1467
      %v1469 = vpop.f32.mrf.mxu0
      %v1470 = vadd.f32 %v1211, %v1469
      %1471 = vmatprep.mubr.f32.mxu0 0.0
      %1472 = vmatmul.mubr.f32.gmra.mxu0 %v1264
      %v1473 = vpop.f32.mrf.mxu0
      %v1474 = vadd.f32 %v1207, %v1473
      %v1475 = vpop.f32.mrf.mxu0
      %v1476 = vadd.f32 %v1211, %v1475
      %1477 = vmatprep.mubr.f32.mxu0 0.0
      %1478 = vmatmul.mubr.f32.gmra.mxu0 %v1267
      %v1479 = vpop.f32.mrf.mxu0
      %v1480 = vadd.f32 %v1207, %v1479
      %v1481 = vpop.f32.mrf.mxu0
      %v1482 = vadd.f32 %v1211, %v1481
      %1483 = vmatprep.mubr.f32.mxu0 0.0
      %1484 = vmatmul.mubr.f32.gmra.mxu0 %v1270
      %v1485 = vpop.f32.mrf.mxu0
      %v1486 = vadd.f32 %v1207, %v1485
      %v1487 = vpop.f32.mrf.mxu0
      %v1488 = vadd.f32 %v1211, %v1487
      %1489 = vmatprep.mubr.f32.mxu0 0.0
      %1490 = vmatmul.mubr.f32.gmra.mxu0 %v1273
      %v1491 = vpop.f32.mrf.mxu0
      %v1492 = vadd.f32 %v1207, %v1491
      %v1493 = vpop.f32.mrf.mxu0
      %v1494 = vadd.f32 %v1211, %v1493
      %1495 = vmatprep.mubr.f32.mxu0 0.0
      %1496 = vmatmul.mubr.f32.gmra.mxu0 %v1276
      %v1497 = vpop.f32.mrf.mxu0
      %v1498 = vadd.f32 %v1207, %v1497
      %v1499 = vpop.f32.mrf.mxu0
      %v1500 = vadd.f32 %v1211, %v1499
      %1501 = vmatprep.mubr.f32.mxu0 0.0
      %1502 = vmatmul.mubr.f32.gmra.mxu0 %v1279
      %v1503 = vpop.f32.mrf.mxu0
      %v1504 = vadd.f32 %v1207, %v1503
      %v1505 = vpop.f32.mrf.mxu0
      %v1506 = vadd.f32 %v1211, %v1505
      %1507 = vmatprep.mubr.f32.mxu0 0.0
      %1508 = vmatmul.mubr.f32.gmra.mxu0 %v1282
      %v1509 = vpop.f32.mrf.mxu0
      %v1510 = vadd.f32 %v1207, %v1509
      %v1511 = vpop.f32.mrf.mxu0
      %v1512 = vadd.f32 %v1211, %v1511
      %1513 = vmatprep.mubr.f32.mxu0 0.0
      %1514 = vmatmul.mubr.f32.gmra.mxu0 %v1285
      %v1515 = vpop.f32.mrf.mxu0
      %v1516 = vadd.f32 %v1207, %v1515
      %v1517 = vpop.f32.mrf.mxu0
      %v1518 = vadd.f32 %v1211, %v1517
      %1519 = vmatprep.mubr.f32.mxu0 0.0
      %1520 = vmatmul.mubr.f32.gmra.mxu0 %v1288
      %v1521 = vpop.f32.mrf.mxu0
      %v1522 = vadd.f32 %v1207, %v1521
      %v1523 = vpop.f32.mrf.mxu0
      %v1524 = vadd.f32 %v1211, %v1523
      %1525 = vmatprep.mubr.f32.mxu0 0.0
      %1526 = vmatmul.mubr.f32.gmra.mxu0 %v1291
      %v1527 = vpop.f32.mrf.mxu0
      %v1528 = vadd.f32 %v1207, %v1527
      %v1529 = vpop.f32.mrf.mxu0
      %v1530 = vadd.f32 %v1211, %v1529
      %1531 = vmatprep.mubr.f32.mxu0 0.0
      %1532 = vmatmul.mubr.f32.gmra.mxu0 %v1294
      %v1533 = vpop.f32.mrf.mxu0
      %v1534 = vadd.f32 %v1207, %v1533
      %v1535 = vpop.f32.mrf.mxu0
      %v1536 = vadd.f32 %v1211, %v1535
      %1537 = vmatprep.mubr.f32.mxu0 0.0
      %1538 = vmatmul.mubr.f32.gmra.mxu0 %v1297
      %v1539 = vpop.f32.mrf.mxu0
      %v1540 = vadd.f32 %v1207, %v1539
      %v1541 = vpop.f32.mrf.mxu0
      %v1542 = vadd.f32 %v1211, %v1541
      %1543 = vmatprep.mubr.f32.mxu0 0.0
      %1544 = vmatmul.mubr.f32.gmra.mxu0 %v1300
      %v1545 = vpop.f32.mrf.mxu0
      %v1546 = vadd.f32 %v1207, %v1545
      %v1547 = vpop.f32.mrf.mxu0
      %v1548 = vadd.f32 %v1211, %v1547
      %1549 = vmatprep.mubr.f32.mxu0 0.0
      %1550 = vmatmul.mubr.f32.gmra.mxu0 %v1303
      %v1551 = vpop.f32.mrf.mxu0
      %v1552 = vadd.f32 %v1207, %v1551
      %v1553 = vpop.f32.mrf.mxu0
      %v1554 = vadd.f32 %v1211, %v1553
      %1555 = vmatprep.mubr.f32.mxu0 0.0
      %1556 = vmatmul.mubr.f32.gmra.mxu0 %v1306
      %v1557 = vpop.f32.mrf.mxu0
      %v1558 = vadd.f32 %v1207, %v1557
      %v1559 = vpop.f32.mrf.mxu0
      %v1560 = vadd.f32 %v1211, %v1559
      %1561 = vmatprep.mubr.f32.mxu0 0.0
      %1562 = vmatmul.mubr.f32.gmra.mxu0 %v1309
      %v1563 = vpop.f32.mrf.mxu0
      %v1564 = vadd.f32 %v1207, %v1563
      %v1565 = vpop.f32.mrf.mxu0
      %v1566 = vadd.f32 %v1211, %v1565
      %1567 = vdwg.mxu0
      %vm1568 = vcmp.gt.f32.partialorder %v1378, 0.0
      %vm1569 = vcmp.gt.f32.partialorder %v1380, 0.0
      %vm1570 = vcmp.gt.f32.partialorder %v1384, 0.0
      %vm1571 = vcmp.gt.f32.partialorder %v1386, 0.0
      %vm1572 = vcmp.gt.f32.partialorder %v1390, 0.0
      %vm1573 = vcmp.gt.f32.partialorder %v1392, 0.0
      %vm1574 = vcmp.gt.f32.partialorder %v1396, 0.0
      %vm1575 = vcmp.gt.f32.partialorder %v1398, 0.0
      %vm1576 = vcmp.gt.f32.partialorder %v1402, 0.0
      %vm1577 = vcmp.gt.f32.partialorder %v1404, 0.0
      %vm1578 = vcmp.gt.f32.partialorder %v1408, 0.0
      %vm1579 = vcmp.gt.f32.partialorder %v1410, 0.0
      %vm1580 = vcmp.gt.f32.partialorder %v1414, 0.0
      %vm1581 = vcmp.gt.f32.partialorder %v1416, 0.0
      %vm1582 = vcmp.gt.f32.partialorder %v1420, 0.0
      %vm1583 = vcmp.gt.f32.partialorder %v1422, 0.0
      %vm1584 = vcmp.gt.f32.partialorder %v1426, 0.0
      %vm1585 = vcmp.gt.f32.partialorder %v1428, 0.0
      %vm1586 = vcmp.gt.f32.partialorder %v1432, 0.0
      %vm1587 = vcmp.gt.f32.partialorder %v1434, 0.0
      %vm1588 = vcmp.gt.f32.partialorder %v1438, 0.0
      %vm1589 = vcmp.gt.f32.partialorder %v1440, 0.0
      %vm1590 = vcmp.gt.f32.partialorder %v1444, 0.0
      %vm1591 = vcmp.gt.f32.partialorder %v1446, 0.0
      %vm1592 = vcmp.gt.f32.partialorder %v1450, 0.0
      %vm1593 = vcmp.gt.f32.partialorder %v1452, 0.0
      %vm1594 = vcmp.gt.f32.partialorder %v1456, 0.0
      %vm1595 = vcmp.gt.f32.partialorder %v1458, 0.0
      %vm1596 = vcmp.gt.f32.partialorder %v1462, 0.0
      %vm1597 = vcmp.gt.f32.partialorder %v1464, 0.0
      %vm1598 = vcmp.gt.f32.partialorder %v1468, 0.0
      %vm1599 = vcmp.gt.f32.partialorder %v1470, 0.0
      %vm1600 = vcmp.gt.f32.partialorder %v1474, 0.0
      %vm1601 = vcmp.gt.f32.partialorder %v1476, 0.0
      %vm1602 = vcmp.gt.f32.partialorder %v1480, 0.0
      %vm1603 = vcmp.gt.f32.partialorder %v1482, 0.0
      %vm1604 = vcmp.gt.f32.partialorder %v1486, 0.0
      %vm1605 = vcmp.gt.f32.partialorder %v1488, 0.0
      %vm1606 = vcmp.gt.f32.partialorder %v1492, 0.0
      %vm1607 = vcmp.gt.f32.partialorder %v1494, 0.0
      %vm1608 = vcmp.gt.f32.partialorder %v1498, 0.0
      %vm1609 = vcmp.gt.f32.partialorder %v1500, 0.0
      %vm1610 = vcmp.gt.f32.partialorder %v1504, 0.0
      %vm1611 = vcmp.gt.f32.partialorder %v1506, 0.0
      %vm1612 = vcmp.gt.f32.partialorder %v1510, 0.0
      %vm1613 = vcmp.gt.f32.partialorder %v1512, 0.0
      %vm1614 = vcmp.gt.f32.partialorder %v1516, 0.0
      %vm1615 = vcmp.gt.f32.partialorder %v1518, 0.0
      %vm1616 = vcmp.gt.f32.partialorder %v1522, 0.0
      %vm1617 = vcmp.gt.f32.partialorder %v1524, 0.0
      %vm1618 = vcmp.gt.f32.partialorder %v1528, 0.0
      %vm1619 = vcmp.gt.f32.partialorder %v1530, 0.0
      %vm1620 = vcmp.gt.f32.partialorder %v1534, 0.0
      %vm1621 = vcmp.gt.f32.partialorder %v1536, 0.0
      %vm1622 = vcmp.gt.f32.partialorder %v1540, 0.0
      %vm1623 = vcmp.gt.f32.partialorder %v1542, 0.0
      %vm1624 = vcmp.gt.f32.partialorder %v1546, 0.0
      %vm1625 = vcmp.gt.f32.partialorder %v1548, 0.0
      %vm1626 = vcmp.gt.f32.partialorder %v1552, 0.0
      %vm1627 = vcmp.gt.f32.partialorder %v1554, 0.0
      %vm1628 = vcmp.gt.f32.partialorder %v1558, 0.0
      %vm1629 = vcmp.gt.f32.partialorder %v1560, 0.0
      %vm1630 = vcmp.gt.f32.partialorder %v1564, 0.0
      %vm1631 = vcmp.gt.f32.partialorder %v1566, 0.0
      %v1632 = vmul.f32 %v1378, 1.442695
      %v1633 = vpow.pop %v1632
      %v1634 = vmul.f32 %v1380, 1.442695
      %v1635 = vpow.pop %v1634
      %v1636 = vmul.f32 %v1384, 1.442695
      %v1637 = vpow.pop %v1636
      %v1638 = vmul.f32 %v1386, 1.442695
      %v1639 = vpow.pop %v1638
      %v1640 = vmul.f32 %v1390, 1.442695
      %v1641 = vpow.pop %v1640
      %v1642 = vmul.f32 %v1392, 1.442695
      %v1643 = vpow.pop %v1642
      %v1644 = vmul.f32 %v1396, 1.442695
      %v1645 = vpow.pop %v1644
      %v1646 = vmul.f32 %v1398, 1.442695
      %v1647 = vpow.pop %v1646
      %v1648 = vmul.f32 %v1402, 1.442695
      %v1649 = vpow.pop %v1648
      %v1650 = vmul.f32 %v1404, 1.442695
      %v1651 = vpow.pop %v1650
      %v1652 = vmul.f32 %v1408, 1.442695
      %v1653 = vpow.pop %v1652
      %v1654 = vmul.f32 %v1410, 1.442695
      %v1655 = vpow.pop %v1654
      %v1656 = vmul.f32 %v1414, 1.442695
      %v1657 = vpow.pop %v1656
      %v1658 = vmul.f32 %v1416, 1.442695
      %v1659 = vpow.pop %v1658
      %v1660 = vmul.f32 %v1420, 1.442695
      %v1661 = vpow.pop %v1660
      %v1662 = vmul.f32 %v1422, 1.442695
      %v1663 = vpow.pop %v1662
      %v1664 = vmul.f32 %v1426, 1.442695
      %v1665 = vpow.pop %v1664
      %v1666 = vmul.f32 %v1428, 1.442695
      %v1667 = vpow.pop %v1666
      %v1668 = vmul.f32 %v1432, 1.442695
      %v1669 = vpow.pop %v1668
      %v1670 = vmul.f32 %v1434, 1.442695
      %v1671 = vpow.pop %v1670
      %v1672 = vmul.f32 %v1438, 1.442695
      %v1673 = vpow.pop %v1672
      %v1674 = vmul.f32 %v1440, 1.442695
      %v1675 = vpow.pop %v1674
      %v1676 = vmul.f32 %v1444, 1.442695
      %v1677 = vpow.pop %v1676
      %v1678 = vmul.f32 %v1446, 1.442695
      %v1679 = vpow.pop %v1678
      %v1680 = vmul.f32 %v1450, 1.442695
      %v1681 = vpow.pop %v1680
      %v1682 = vmul.f32 %v1452, 1.442695
      %v1683 = vpow.pop %v1682
      %v1684 = vmul.f32 %v1456, 1.442695
      %v1685 = vpow.pop %v1684
      %v1686 = vmul.f32 %v1458, 1.442695
      %v1687 = vpow.pop %v1686
      %v1688 = vmul.f32 %v1462, 1.442695
      %v1689 = vpow.pop %v1688
      %v1690 = vmul.f32 %v1464, 1.442695
      %v1691 = vpow.pop %v1690
      %v1692 = vmul.f32 %v1468, 1.442695
      %v1693 = vpow.pop %v1692
      %v1694 = vmul.f32 %v1470, 1.442695
      %v1695 = vpow.pop %v1694
      %v1696 = vmul.f32 %v1474, 1.442695
      %v1697 = vpow.pop %v1696
      %v1698 = vmul.f32 %v1476, 1.442695
      %v1699 = vpow.pop %v1698
      %v1700 = vmul.f32 %v1480, 1.442695
      %v1701 = vpow.pop %v1700
      %v1702 = vmul.f32 %v1482, 1.442695
      %v1703 = vpow.pop %v1702
      %v1704 = vmul.f32 %v1486, 1.442695
      %v1705 = vpow.pop %v1704
      %v1706 = vmul.f32 %v1488, 1.442695
      %v1707 = vpow.pop %v1706
      %v1708 = vmul.f32 %v1492, 1.442695
      %v1709 = vpow.pop %v1708
      %v1710 = vmul.f32 %v1494, 1.442695
      %v1711 = vpow.pop %v1710
      %v1712 = vmul.f32 %v1498, 1.442695
      %v1713 = vpow.pop %v1712
      %v1714 = vmul.f32 %v1500, 1.442695
      %v1715 = vpow.pop %v1714
      %v1716 = vmul.f32 %v1504, 1.442695
      %v1717 = vpow.pop %v1716
      %v1718 = vmul.f32 %v1506, 1.442695
      %v1719 = vpow.pop %v1718
      %v1720 = vmul.f32 %v1510, 1.442695
      %v1721 = vpow.pop %v1720
      %v1722 = vmul.f32 %v1512, 1.442695
      %v1723 = vpow.pop %v1722
      %v1724 = vmul.f32 %v1516, 1.442695
      %v1725 = vpow.pop %v1724
      %v1726 = vmul.f32 %v1518, 1.442695
      %v1727 = vpow.pop %v1726
      %v1728 = vmul.f32 %v1522, 1.442695
      %v1729 = vpow.pop %v1728
      %v1730 = vmul.f32 %v1524, 1.442695
      %v1731 = vpow.pop %v1730
      %v1732 = vmul.f32 %v1528, 1.442695
      %v1733 = vpow.pop %v1732
      %v1734 = vmul.f32 %v1530, 1.442695
      %v1735 = vpow.pop %v1734
      %v1736 = vmul.f32 %v1534, 1.442695
      %v1737 = vpow.pop %v1736
      %v1738 = vmul.f32 %v1536, 1.442695
      %v1739 = vpow.pop %v1738
      %v1740 = vmul.f32 %v1540, 1.442695
      %v1741 = vpow.pop %v1740
      %v1742 = vmul.f32 %v1542, 1.442695
      %v1743 = vpow.pop %v1742
      %v1744 = vmul.f32 %v1546, 1.442695
      %v1745 = vpow.pop %v1744
      %v1746 = vmul.f32 %v1548, 1.442695
      %v1747 = vpow.pop %v1746
      %v1748 = vmul.f32 %v1552, 1.442695
      %v1749 = vpow.pop %v1748
      %v1750 = vmul.f32 %v1554, 1.442695
      %v1751 = vpow.pop %v1750
      %v1752 = vmul.f32 %v1558, 1.442695
      %v1753 = vpow.pop %v1752
      %v1754 = vmul.f32 %v1560, 1.442695
      %v1755 = vpow.pop %v1754
      %v1756 = vmul.f32 %v1564, 1.442695
      %v1757 = vpow.pop %v1756
      %v1758 = vmul.f32 %v1566, 1.442695
      %v1759 = vpow.pop %v1758
      %v1760 = vsub.f32 %v1633, 1.0
      %v1761 = vsub.f32 %v1635, 1.0
      %v1762 = vsub.f32 %v1637, 1.0
      %v1763 = vsub.f32 %v1639, 1.0
      %v1764 = vsub.f32 %v1641, 1.0
      %v1765 = vsub.f32 %v1643, 1.0
      %v1766 = vsub.f32 %v1645, 1.0
      %v1767 = vsub.f32 %v1647, 1.0
      %v1768 = vsub.f32 %v1649, 1.0
      %v1769 = vsub.f32 %v1651, 1.0
      %v1770 = vsub.f32 %v1653, 1.0
      %v1771 = vsub.f32 %v1655, 1.0
      %v1772 = vsub.f32 %v1657, 1.0
      %v1773 = vsub.f32 %v1659, 1.0
      %v1774 = vsub.f32 %v1661, 1.0
      %v1775 = vsub.f32 %v1663, 1.0
      %v1776 = vsub.f32 %v1665, 1.0
      %v1777 = vsub.f32 %v1667, 1.0
      %v1778 = vsub.f32 %v1669, 1.0
      %v1779 = vsub.f32 %v1671, 1.0
      %v1780 = vsub.f32 %v1673, 1.0
      %v1781 = vsub.f32 %v1675, 1.0
      %v1782 = vsub.f32 %v1677, 1.0
      %v1783 = vsub.f32 %v1679, 1.0
      %v1784 = vsub.f32 %v1681, 1.0
      %v1785 = vsub.f32 %v1683, 1.0
      %v1786 = vsub.f32 %v1685, 1.0
      %v1787 = vsub.f32 %v1687, 1.0
      %v1788 = vsub.f32 %v1689, 1.0
      %v1789 = vsub.f32 %v1691, 1.0
      %v1790 = vsub.f32 %v1693, 1.0
      %v1791 = vsub.f32 %v1695, 1.0
      %v1792 = vsub.f32 %v1697, 1.0
      %v1793 = vsub.f32 %v1699, 1.0
      %v1794 = vsub.f32 %v1701, 1.0
      %v1795 = vsub.f32 %v1703, 1.0
      %v1796 = vsub.f32 %v1705, 1.0
      %v1797 = vsub.f32 %v1707, 1.0
      %v1798 = vsub.f32 %v1709, 1.0
      %v1799 = vsub.f32 %v1711, 1.0
      %v1800 = vsub.f32 %v1713, 1.0
      %v1801 = vsub.f32 %v1715, 1.0
      %v1802 = vsub.f32 %v1717, 1.0
      %v1803 = vsub.f32 %v1719, 1.0
      %v1804 = vsub.f32 %v1721, 1.0
      %v1805 = vsub.f32 %v1723, 1.0
      %v1806 = vsub.f32 %v1725, 1.0
      %v1807 = vsub.f32 %v1727, 1.0
      %v1808 = vsub.f32 %v1729, 1.0
      %v1809 = vsub.f32 %v1731, 1.0
      %v1810 = vsub.f32 %v1733, 1.0
      %v1811 = vsub.f32 %v1735, 1.0
      %v1812 = vsub.f32 %v1737, 1.0
      %v1813 = vsub.f32 %v1739, 1.0
      %v1814 = vsub.f32 %v1741, 1.0
      %v1815 = vsub.f32 %v1743, 1.0
      %v1816 = vsub.f32 %v1745, 1.0
      %v1817 = vsub.f32 %v1747, 1.0
      %v1818 = vsub.f32 %v1749, 1.0
      %v1819 = vsub.f32 %v1751, 1.0
      %v1820 = vsub.f32 %v1753, 1.0
      %v1821 = vsub.f32 %v1755, 1.0
      %v1822 = vsub.f32 %v1757, 1.0
      %v1823 = vsub.f32 %v1759, 1.0
      %v1824 = vmul.f32 %v1760, 1.6732632
      %v1825 = vmul.f32 %v1761, 1.6732632
      %v1826 = vmul.f32 %v1762, 1.6732632
      %v1827 = vmul.f32 %v1763, 1.6732632
      %v1828 = vmul.f32 %v1764, 1.6732632
      %v1829 = vmul.f32 %v1765, 1.6732632
      %v1830 = vmul.f32 %v1766, 1.6732632
      %v1831 = vmul.f32 %v1767, 1.6732632
      %v1832 = vmul.f32 %v1768, 1.6732632
      %v1833 = vmul.f32 %v1769, 1.6732632
      %v1834 = vmul.f32 %v1770, 1.6732632
      %v1835 = vmul.f32 %v1771, 1.6732632
      %v1836 = vmul.f32 %v1772, 1.6732632
      %v1837 = vmul.f32 %v1773, 1.6732632
      %v1838 = vmul.f32 %v1774, 1.6732632
      %v1839 = vmul.f32 %v1775, 1.6732632
      %v1840 = vmul.f32 %v1776, 1.6732632
      %v1841 = vmul.f32 %v1777, 1.6732632
      %v1842 = vmul.f32 %v1778, 1.6732632
      %v1843 = vmul.f32 %v1779, 1.6732632
      %v1844 = vmul.f32 %v1780, 1.6732632
      %v1845 = vmul.f32 %v1781, 1.6732632
      %v1846 = vmul.f32 %v1782, 1.6732632
      %v1847 = vmul.f32 %v1783, 1.6732632
      %v1848 = vmul.f32 %v1784, 1.6732632
      %v1849 = vmul.f32 %v1785, 1.6732632
      %v1850 = vmul.f32 %v1786, 1.6732632
      %v1851 = vmul.f32 %v1787, 1.6732632
      %v1852 = vmul.f32 %v1788, 1.6732632
      %v1853 = vmul.f32 %v1789, 1.6732632
      %v1854 = vmul.f32 %v1790, 1.6732632
      %v1855 = vmul.f32 %v1791, 1.6732632
      %v1856 = vmul.f32 %v1792, 1.6732632
      %v1857 = vmul.f32 %v1793, 1.6732632
      %v1858 = vmul.f32 %v1794, 1.6732632
      %v1859 = vmul.f32 %v1795, 1.6732632
      %v1860 = vmul.f32 %v1796, 1.6732632
      %v1861 = vmul.f32 %v1797, 1.6732632
      %v1862 = vmul.f32 %v1798, 1.6732632
      %v1863 = vmul.f32 %v1799, 1.6732632
      %v1864 = vmul.f32 %v1800, 1.6732632
      %v1865 = vmul.f32 %v1801, 1.6732632
      %v1866 = vmul.f32 %v1802, 1.6732632
      %v1867 = vmul.f32 %v1803, 1.6732632
      %v1868 = vmul.f32 %v1804, 1.6732632
      %v1869 = vmul.f32 %v1805, 1.6732632
      %v1870 = vmul.f32 %v1806, 1.6732632
      %v1871 = vmul.f32 %v1807, 1.6732632
      %v1872 = vmul.f32 %v1808, 1.6732632
      %v1873 = vmul.f32 %v1809, 1.6732632
      %v1874 = vmul.f32 %v1810, 1.6732632
      %v1875 = vmul.f32 %v1811, 1.6732632
      %v1876 = vmul.f32 %v1812, 1.6732632
      %v1877 = vmul.f32 %v1813, 1.6732632
      %v1878 = vmul.f32 %v1814, 1.6732632
      %v1879 = vmul.f32 %v1815, 1.6732632
      %v1880 = vmul.f32 %v1816, 1.6732632
      %v1881 = vmul.f32 %v1817, 1.6732632
      %v1882 = vmul.f32 %v1818, 1.6732632
      %v1883 = vmul.f32 %v1819, 1.6732632
      %v1884 = vmul.f32 %v1820, 1.6732632
      %v1885 = vmul.f32 %v1821, 1.6732632
      %v1886 = vmul.f32 %v1822, 1.6732632
      %v1887 = vmul.f32 %v1823, 1.6732632
      %v1888 = vsel %vm1568, %v1378, %v1824
      %v1889 = vsel %vm1569, %v1380, %v1825
      %v1890 = vsel %vm1570, %v1384, %v1826
      %v1891 = vsel %vm1571, %v1386, %v1827
      %v1892 = vsel %vm1572, %v1390, %v1828
      %v1893 = vsel %vm1573, %v1392, %v1829
      %v1894 = vsel %vm1574, %v1396, %v1830
      %v1895 = vsel %vm1575, %v1398, %v1831
      %v1896 = vsel %vm1576, %v1402, %v1832
      %v1897 = vsel %vm1577, %v1404, %v1833
      %v1898 = vsel %vm1578, %v1408, %v1834
      %v1899 = vsel %vm1579, %v1410, %v1835
      %v1900 = vsel %vm1580, %v1414, %v1836
      %v1901 = vsel %vm1581, %v1416, %v1837
      %v1902 = vsel %vm1582, %v1420, %v1838
      %v1903 = vsel %vm1583, %v1422, %v1839
      %v1904 = vsel %vm1584, %v1426, %v1840
      %v1905 = vsel %vm1585, %v1428, %v1841
      %v1906 = vsel %vm1586, %v1432, %v1842
      %v1907 = vsel %vm1587, %v1434, %v1843
      %v1908 = vsel %vm1588, %v1438, %v1844
      %v1909 = vsel %vm1589, %v1440, %v1845
      %v1910 = vsel %vm1590, %v1444, %v1846
      %v1911 = vsel %vm1591, %v1446, %v1847
      %v1912 = vsel %vm1592, %v1450, %v1848
      %v1913 = vsel %vm1593, %v1452, %v1849
      %v1914 = vsel %vm1594, %v1456, %v1850
      %v1915 = vsel %vm1595, %v1458, %v1851
      %v1916 = vsel %vm1596, %v1462, %v1852
      %v1917 = vsel %vm1597, %v1464, %v1853
      %v1918 = vsel %vm1598, %v1468, %v1854
      %v1919 = vsel %vm1599, %v1470, %v1855
      %v1920 = vsel %vm1600, %v1474, %v1856
      %v1921 = vsel %vm1601, %v1476, %v1857
      %v1922 = vsel %vm1602, %v1480, %v1858
      %v1923 = vsel %vm1603, %v1482, %v1859
      %v1924 = vsel %vm1604, %v1486, %v1860
      %v1925 = vsel %vm1605, %v1488, %v1861
      %v1926 = vsel %vm1606, %v1492, %v1862
      %v1927 = vsel %vm1607, %v1494, %v1863
      %v1928 = vsel %vm1608, %v1498, %v1864
      %v1929 = vsel %vm1609, %v1500, %v1865
      %v1930 = vsel %vm1610, %v1504, %v1866
      %v1931 = vsel %vm1611, %v1506, %v1867
      %v1932 = vsel %vm1612, %v1510, %v1868
      %v1933 = vsel %vm1613, %v1512, %v1869
      %v1934 = vsel %vm1614, %v1516, %v1870
      %v1935 = vsel %vm1615, %v1518, %v1871
      %v1936 = vsel %vm1616, %v1522, %v1872
      %v1937 = vsel %vm1617, %v1524, %v1873
      %v1938 = vsel %vm1618, %v1528, %v1874
      %v1939 = vsel %vm1619, %v1530, %v1875
      %v1940 = vsel %vm1620, %v1534, %v1876
      %v1941 = vsel %vm1621, %v1536, %v1877
      %v1942 = vsel %vm1622, %v1540, %v1878
      %v1943 = vsel %vm1623, %v1542, %v1879
      %v1944 = vsel %vm1624, %v1546, %v1880
      %v1945 = vsel %vm1625, %v1548, %v1881
      %v1946 = vsel %vm1626, %v1552, %v1882
      %v1947 = vsel %vm1627, %v1554, %v1883
      %v1948 = vsel %vm1628, %v1558, %v1884
      %v1949 = vsel %vm1629, %v1560, %v1885
      %v1950 = vsel %vm1630, %v1564, %v1886
      %v1951 = vsel %vm1631, %v1566, %v1887
      %v1952 = vmul.f32 %v1888, 1.050701
      %v1953 = vmul.f32 %v1889, 1.050701
      %v1954 = vmul.f32 %v1890, 1.050701
      %v1955 = vmul.f32 %v1891, 1.050701
      %v1956 = vmul.f32 %v1892, 1.050701
      %v1957 = vmul.f32 %v1893, 1.050701
      %v1958 = vmul.f32 %v1894, 1.050701
      %v1959 = vmul.f32 %v1895, 1.050701
      %v1960 = vmul.f32 %v1896, 1.050701
      %v1961 = vmul.f32 %v1897, 1.050701
      %v1962 = vmul.f32 %v1898, 1.050701
      %v1963 = vmul.f32 %v1899, 1.050701
      %v1964 = vmul.f32 %v1900, 1.050701
      %v1965 = vmul.f32 %v1901, 1.050701
      %v1966 = vmul.f32 %v1902, 1.050701
      %v1967 = vmul.f32 %v1903, 1.050701
      %v1968 = vmul.f32 %v1904, 1.050701
      %v1969 = vmul.f32 %v1905, 1.050701
      %v1970 = vmul.f32 %v1906, 1.050701
      %v1971 = vmul.f32 %v1907, 1.050701
      %v1972 = vmul.f32 %v1908, 1.050701
      %v1973 = vmul.f32 %v1909, 1.050701
      %v1974 = vmul.f32 %v1910, 1.050701
      %v1975 = vmul.f32 %v1911, 1.050701
      %v1976 = vmul.f32 %v1912, 1.050701
      %v1977 = vmul.f32 %v1913, 1.050701
      %v1978 = vmul.f32 %v1914, 1.050701
      %v1979 = vmul.f32 %v1915, 1.050701
      %v1980 = vmul.f32 %v1916, 1.050701
      %v1981 = vmul.f32 %v1917, 1.050701
      %v1982 = vmul.f32 %v1918, 1.050701
      %v1983 = vmul.f32 %v1919, 1.050701
      %v1984 = vmul.f32 %v1920, 1.050701
      %v1985 = vmul.f32 %v1921, 1.050701
      %v1986 = vmul.f32 %v1922, 1.050701
      %v1987 = vmul.f32 %v1923, 1.050701
      %v1988 = vmul.f32 %v1924, 1.050701
      %v1989 = vmul.f32 %v1925, 1.050701
      %v1990 = vmul.f32 %v1926, 1.050701
      %v1991 = vmul.f32 %v1927, 1.050701
      %v1992 = vmul.f32 %v1928, 1.050701
      %v1993 = vmul.f32 %v1929, 1.050701
      %v1994 = vmul.f32 %v1930, 1.050701
      %v1995 = vmul.f32 %v1931, 1.050701
      %v1996 = vmul.f32 %v1932, 1.050701
      %v1997 = vmul.f32 %v1933, 1.050701
      %v1998 = vmul.f32 %v1934, 1.050701
      %v1999 = vmul.f32 %v1935, 1.050701
      %v2000 = vmul.f32 %v1936, 1.050701
      %v2001 = vmul.f32 %v1937, 1.050701
      %v2002 = vmul.f32 %v1938, 1.050701
      %v2003 = vmul.f32 %v1939, 1.050701
      %v2004 = vmul.f32 %v1940, 1.050701
      %v2005 = vmul.f32 %v1941, 1.050701
      %v2006 = vmul.f32 %v1942, 1.050701
      %v2007 = vmul.f32 %v1943, 1.050701
      %v2008 = vmul.f32 %v1944, 1.050701
      %v2009 = vmul.f32 %v1945, 1.050701
      %v2010 = vmul.f32 %v1946, 1.050701
      %v2011 = vmul.f32 %v1947, 1.050701
      %v2012 = vmul.f32 %v1948, 1.050701
      %v2013 = vmul.f32 %v1949, 1.050701
      %v2014 = vmul.f32 %v1950, 1.050701
      %v2015 = vmul.f32 %v1951, 1.050701
      %v2016 = vld [vmem:[%s4] sm:$0xff]
      %v2017 = vld [vmem:[%s4 + $0x8] sm:$0xff]
      %v2018 = vld [vmem:[%s4 + $0x10] sm:$0xff]
      %v2019 = vld [vmem:[%s4 + $0x18] sm:$0xff]
      %v2020 = vld [vmem:[%s4 + $0x20] sm:$0xff]
      %v2021 = vld [vmem:[%s4 + $0x28] sm:$0xff]
      %v2022 = vld [vmem:[%s4 + $0x30] sm:$0xff]
      %v2023 = vld [vmem:[%s4 + $0x38] sm:$0xff]
      %v2024 = vld [vmem:[%s4 + $0x40] sm:$0xff]
      %v2025 = vld [vmem:[%s4 + $0x48] sm:$0xff]
      %v2026 = vld [vmem:[%s4 + $0x50] sm:$0xff]
      %v2027 = vld [vmem:[%s4 + $0x58] sm:$0xff]
      %v2028 = vld [vmem:[%s4 + $0x60] sm:$0xff]
      %v2029 = vld [vmem:[%s4 + $0x68] sm:$0xff]
      %v2030 = vld [vmem:[%s4 + $0x70] sm:$0xff]
      %v2031 = vld [vmem:[%s4 + $0x78] sm:$0xff]
      %v2032 = vld [vmem:[%s4 + $0x80] sm:$0xff]
      %v2033 = vld [vmem:[%s4 + $0x88] sm:$0xff]
      %v2034 = vld [vmem:[%s4 + $0x90] sm:$0xff]
      %v2035 = vld [vmem:[%s4 + $0x98] sm:$0xff]
      %v2036 = vld [vmem:[%s4 + $0xa0] sm:$0xff]
      %v2037 = vld [vmem:[%s4 + $0xa8] sm:$0xff]
      %v2038 = vld [vmem:[%s4 + $0xb0] sm:$0xff]
      %v2039 = vld [vmem:[%s4 + $0xb8] sm:$0xff]
      %v2040 = vld [vmem:[%s4 + $0xc0] sm:$0xff]
      %v2041 = vld [vmem:[%s4 + $0xc8] sm:$0xff]
      %v2042 = vld [vmem:[%s4 + $0xd0] sm:$0xff]
      %v2043 = vld [vmem:[%s4 + $0xd8] sm:$0xff]
      %v2044 = vld [vmem:[%s4 + $0xe0] sm:$0xff]
      %v2045 = vld [vmem:[%s4 + $0xe8] sm:$0xff]
      %v2046 = vld [vmem:[%s4 + $0xf0] sm:$0xff]
      %v2047 = vld [vmem:[%s4 + $0xf8] sm:$0xff]
      %2048 = vmatprep.subr.mxu0 0.0
      %2049 = vmatpush1.msra.mxu0 %v2031
      %2050 = vmatprep.subr.mxu0 0.0
      %2051 = vmatpush1.msra.mxu0 %v2030
      %2052 = vmatprep.subr.mxu0 0.0
      %2053 = vmatpush1.msra.mxu0 %v2029
      %2054 = vmatprep.subr.mxu0 0.0
      %2055 = vmatpush1.msra.mxu0 %v2028
      %2056 = vmatprep.subr.mxu0 0.0
      %2057 = vmatpush1.msra.mxu0 %v2027
      %2058 = vmatprep.subr.mxu0 0.0
      %2059 = vmatpush1.msra.mxu0 %v2026
      %2060 = vmatprep.subr.mxu0 0.0
      %2061 = vmatpush1.msra.mxu0 %v2025
      %2062 = vmatprep.subr.mxu0 0.0
      %2063 = vmatpush1.msra.mxu0 %v2024
      %2064 = vmatprep.subr.mxu0 0.0
      %2065 = vmatpush1.msra.mxu0 %v2023
      %2066 = vmatprep.subr.mxu0 0.0
      %2067 = vmatpush1.msra.mxu0 %v2022
      %2068 = vmatprep.subr.mxu0 0.0
      %2069 = vmatpush1.msra.mxu0 %v2021
      %2070 = vmatprep.subr.mxu0 0.0
      %2071 = vmatpush1.msra.mxu0 %v2020
      %2072 = vmatprep.subr.mxu0 0.0
      %2073 = vmatpush1.msra.mxu0 %v2019
      %2074 = vmatprep.subr.mxu0 0.0
      %2075 = vmatpush1.msra.mxu0 %v2018
      %2076 = vmatprep.subr.mxu0 0.0
      %2077 = vmatpush1.msra.mxu0 %v2017
      %2078 = vmatprep.subr.mxu0 0.0
      %2079 = vmatpush1.msra.mxu0 %v2016
      %2080 = vmatprep.subr.mxu0 0.0
      %2081 = vmatpush2.msra.mxu0 %v2047
      %2082 = vmatprep.subr.mxu0 0.0
      %2083 = vmatpush2.msra.mxu0 %v2046
      %2084 = vmatprep.subr.mxu0 0.0
      %2085 = vmatpush2.msra.mxu0 %v2045
      %2086 = vmatprep.subr.mxu0 0.0
      %2087 = vmatpush2.msra.mxu0 %v2044
      %2088 = vmatprep.subr.mxu0 0.0
      %2089 = vmatpush2.msra.mxu0 %v2043
      %2090 = vmatprep.subr.mxu0 0.0
      %2091 = vmatpush2.msra.mxu0 %v2042
      %2092 = vmatprep.subr.mxu0 0.0
      %2093 = vmatpush2.msra.mxu0 %v2041
      %2094 = vmatprep.subr.mxu0 0.0
      %2095 = vmatpush2.msra.mxu0 %v2040
      %2096 = vmatprep.subr.mxu0 0.0
      %2097 = vmatpush2.msra.mxu0 %v2039
      %2098 = vmatprep.subr.mxu0 0.0
      %2099 = vmatpush2.msra.mxu0 %v2038
      %2100 = vmatprep.subr.mxu0 0.0
      %2101 = vmatpush2.msra.mxu0 %v2037
      %2102 = vmatprep.subr.mxu0 0.0
      %2103 = vmatpush2.msra.mxu0 %v2036
      %2104 = vmatprep.subr.mxu0 0.0
      %2105 = vmatpush2.msra.mxu0 %v2035
      %2106 = vmatprep.subr.mxu0 0.0
      %2107 = vmatpush2.msra.mxu0 %v2034
      %2108 = vmatprep.subr.mxu0 0.0
      %2109 = vmatpush2.msra.mxu0 %v2033
      %2110 = vmatprep.subr.mxu0 0.0
      %2111 = vmatpush2.msra.mxu0 %v2032
      %2112 = vmatprep.mubr.f32.mxu0 %v1953
      %2113 = vmatmul.mubr.f32.gmra.mxu0 %v1952
      %v2114 = vpop.f32.mrf.mxu0
      %v2115 = vadd.f32 0.0, %v2114
      %v2116 = vpop.f32.mrf.mxu0
      %2117 = vmatprep.mubr.f32.mxu0 %v1955
      %2118 = vmatmul.mubr.f32.gmra.mxu0 %v1954
      %v2119 = vpop.f32.mrf.mxu0
      %v2120 = vadd.f32 0.0, %v2119
      %v2121 = vpop.f32.mrf.mxu0
      %2122 = vmatprep.mubr.f32.mxu0 %v1957
      %2123 = vmatmul.mubr.f32.gmra.mxu0 %v1956
      %v2124 = vpop.f32.mrf.mxu0
      %v2125 = vadd.f32 0.0, %v2124
      %v2126 = vpop.f32.mrf.mxu0
      %2127 = vmatprep.mubr.f32.mxu0 %v1959
      %2128 = vmatmul.mubr.f32.gmra.mxu0 %v1958
      %v2129 = vpop.f32.mrf.mxu0
      %v2130 = vadd.f32 0.0, %v2129
      %v2131 = vpop.f32.mrf.mxu0
      %2132 = vmatprep.mubr.f32.mxu0 %v1961
      %2133 = vmatmul.mubr.f32.gmra.mxu0 %v1960
      %v2134 = vpop.f32.mrf.mxu0
      %v2135 = vadd.f32 0.0, %v2134
      %v2136 = vpop.f32.mrf.mxu0
      %2137 = vmatprep.mubr.f32.mxu0 %v1963
      %2138 = vmatmul.mubr.f32.gmra.mxu0 %v1962
      %v2139 = vpop.f32.mrf.mxu0
      %v2140 = vadd.f32 0.0, %v2139
      %v2141 = vpop.f32.mrf.mxu0
      %2142 = vmatprep.mubr.f32.mxu0 %v1965
      %2143 = vmatmul.mubr.f32.gmra.mxu0 %v1964
      %v2144 = vpop.f32.mrf.mxu0
      %v2145 = vadd.f32 0.0, %v2144
      %v2146 = vpop.f32.mrf.mxu0
      %2147 = vmatprep.mubr.f32.mxu0 %v1967
      %2148 = vmatmul.mubr.f32.gmra.mxu0 %v1966
      %v2149 = vpop.f32.mrf.mxu0
      %v2150 = vadd.f32 0.0, %v2149
      %v2151 = vpop.f32.mrf.mxu0
      %2152 = vmatprep.mubr.f32.mxu0 %v1969
      %2153 = vmatmul.mubr.f32.gmra.mxu0 %v1968
      %v2154 = vpop.f32.mrf.mxu0
      %v2155 = vadd.f32 0.0, %v2154
      %v2156 = vpop.f32.mrf.mxu0
      %2157 = vmatprep.mubr.f32.mxu0 %v1971
      %2158 = vmatmul.mubr.f32.gmra.mxu0 %v1970
      %v2159 = vpop.f32.mrf.mxu0
      %v2160 = vadd.f32 0.0, %v2159
      %v2161 = vpop.f32.mrf.mxu0
      %2162 = vmatprep.mubr.f32.mxu0 %v1973
      %2163 = vmatmul.mubr.f32.gmra.mxu0 %v1972
      %v2164 = vpop.f32.mrf.mxu0
      %v2165 = vadd.f32 0.0, %v2164
      %v2166 = vpop.f32.mrf.mxu0
      %2167 = vmatprep.mubr.f32.mxu0 %v1975
      %2168 = vmatmul.mubr.f32.gmra.mxu0 %v1974
      %v2169 = vpop.f32.mrf.mxu0
      %v2170 = vadd.f32 0.0, %v2169
      %v2171 = vpop.f32.mrf.mxu0
      %2172 = vmatprep.mubr.f32.mxu0 %v1977
      %2173 = vmatmul.mubr.f32.gmra.mxu0 %v1976
      %v2174 = vpop.f32.mrf.mxu0
      %v2175 = vadd.f32 0.0, %v2174
      %v2176 = vpop.f32.mrf.mxu0
      %2177 = vmatprep.mubr.f32.mxu0 %v1979
      %2178 = vmatmul.mubr.f32.gmra.mxu0 %v1978
      %v2179 = vpop.f32.mrf.mxu0
      %v2180 = vadd.f32 0.0, %v2179
      %v2181 = vpop.f32.mrf.mxu0
      %2182 = vmatprep.mubr.f32.mxu0 %v1981
      %2183 = vmatmul.mubr.f32.gmra.mxu0 %v1980
      %v2184 = vpop.f32.mrf.mxu0
      %v2185 = vadd.f32 0.0, %v2184
      %v2186 = vpop.f32.mrf.mxu0
      %2187 = vmatprep.mubr.f32.mxu0 %v1983
      %2188 = vmatmul.mubr.f32.gmra.mxu0 %v1982
      %v2189 = vpop.f32.mrf.mxu0
      %v2190 = vadd.f32 0.0, %v2189
      %v2191 = vpop.f32.mrf.mxu0
      %2192 = vmatprep.mubr.f32.mxu0 %v1985
      %2193 = vmatmul.mubr.f32.gmra.mxu0 %v1984
      %v2194 = vpop.f32.mrf.mxu0
      %v2195 = vadd.f32 0.0, %v2194
      %v2196 = vpop.f32.mrf.mxu0
      %2197 = vmatprep.mubr.f32.mxu0 %v1987
      %2198 = vmatmul.mubr.f32.gmra.mxu0 %v1986
      %v2199 = vpop.f32.mrf.mxu0
      %v2200 = vadd.f32 0.0, %v2199
      %v2201 = vpop.f32.mrf.mxu0
      %2202 = vmatprep.mubr.f32.mxu0 %v1989
      %2203 = vmatmul.mubr.f32.gmra.mxu0 %v1988
      %v2204 = vpop.f32.mrf.mxu0
      %v2205 = vadd.f32 0.0, %v2204
      %v2206 = vpop.f32.mrf.mxu0
      %2207 = vmatprep.mubr.f32.mxu0 %v1991
      %2208 = vmatmul.mubr.f32.gmra.mxu0 %v1990
      %v2209 = vpop.f32.mrf.mxu0
      %v2210 = vadd.f32 0.0, %v2209
      %v2211 = vpop.f32.mrf.mxu0
      %2212 = vmatprep.mubr.f32.mxu0 %v1993
      %2213 = vmatmul.mubr.f32.gmra.mxu0 %v1992
      %v2214 = vpop.f32.mrf.mxu0
      %v2215 = vadd.f32 0.0, %v2214
      %v2216 = vpop.f32.mrf.mxu0
      %2217 = vmatprep.mubr.f32.mxu0 %v1995
      %2218 = vmatmul.mubr.f32.gmra.mxu0 %v1994
      %v2219 = vpop.f32.mrf.mxu0
      %v2220 = vadd.f32 0.0, %v2219
      %v2221 = vpop.f32.mrf.mxu0
      %2222 = vmatprep.mubr.f32.mxu0 %v1997
      %2223 = vmatmul.mubr.f32.gmra.mxu0 %v1996
      %v2224 = vpop.f32.mrf.mxu0
      %v2225 = vadd.f32 0.0, %v2224
      %v2226 = vpop.f32.mrf.mxu0
      %2227 = vmatprep.mubr.f32.mxu0 %v1999
      %2228 = vmatmul.mubr.f32.gmra.mxu0 %v1998
      %v2229 = vpop.f32.mrf.mxu0
      %v2230 = vadd.f32 0.0, %v2229
      %v2231 = vpop.f32.mrf.mxu0
      %2232 = vmatprep.mubr.f32.mxu0 %v2001
      %2233 = vmatmul.mubr.f32.gmra.mxu0 %v2000
      %v2234 = vpop.f32.mrf.mxu0
      %v2235 = vadd.f32 0.0, %v2234
      %v2236 = vpop.f32.mrf.mxu0
      %2237 = vmatprep.mubr.f32.mxu0 %v2003
      %2238 = vmatmul.mubr.f32.gmra.mxu0 %v2002
      %v2239 = vpop.f32.mrf.mxu0
      %v2240 = vadd.f32 0.0, %v2239
      %v2241 = vpop.f32.mrf.mxu0
      %2242 = vmatprep.mubr.f32.mxu0 %v2005
      %2243 = vmatmul.mubr.f32.gmra.mxu0 %v2004
      %v2244 = vpop.f32.mrf.mxu0
      %v2245 = vadd.f32 0.0, %v2244
      %v2246 = vpop.f32.mrf.mxu0
      %2247 = vmatprep.mubr.f32.mxu0 %v2007
      %2248 = vmatmul.mubr.f32.gmra.mxu0 %v2006
      %v2249 = vpop.f32.mrf.mxu0
      %v2250 = vadd.f32 0.0, %v2249
      %v2251 = vpop.f32.mrf.mxu0
      %2252 = vmatprep.mubr.f32.mxu0 %v2009
      %2253 = vmatmul.mubr.f32.gmra.mxu0 %v2008
      %v2254 = vpop.f32.mrf.mxu0
      %v2255 = vadd.f32 0.0, %v2254
      %v2256 = vpop.f32.mrf.mxu0
      %2257 = vmatprep.mubr.f32.mxu0 %v2011
      %2258 = vmatmul.mubr.f32.gmra.mxu0 %v2010
      %v2259 = vpop.f32.mrf.mxu0
      %v2260 = vadd.f32 0.0, %v2259
      %v2261 = vpop.f32.mrf.mxu0
      %2262 = vmatprep.mubr.f32.mxu0 %v2013
      %2263 = vmatmul.mubr.f32.gmra.mxu0 %v2012
      %v2264 = vpop.f32.mrf.mxu0
      %v2265 = vadd.f32 0.0, %v2264
      %v2266 = vpop.f32.mrf.mxu0
      %2267 = vmatprep.mubr.f32.mxu0 %v2015
      %2268 = vmatmul.mubr.f32.gmra.mxu0 %v2014
      %v2269 = vpop.f32.mrf.mxu0
      %v2270 = vadd.f32 0.0, %v2269
      %v2271 = vpop.f32.mrf.mxu0
      %2272 = vdwg.mxu0
      %v2273 = vpack.c.bf16 %v2120, %v2115
      %v2274 = vpack.c.bf16 %v2130, %v2125
      %v2275 = vpack.c.bf16 %v2140, %v2135
      %v2276 = vpack.c.bf16 %v2150, %v2145
      %v2277 = vpack.c.bf16 %v2160, %v2155
      %v2278 = vpack.c.bf16 %v2170, %v2165
      %v2279 = vpack.c.bf16 %v2180, %v2175
      %v2280 = vpack.c.bf16 %v2190, %v2185
      %v2281 = vpack.c.bf16 %v2200, %v2195
      %v2282 = vpack.c.bf16 %v2210, %v2205
      %v2283 = vpack.c.bf16 %v2220, %v2215
      %v2284 = vpack.c.bf16 %v2230, %v2225
      %v2285 = vpack.c.bf16 %v2240, %v2235
      %v2286 = vpack.c.bf16 %v2250, %v2245
      %v2287 = vpack.c.bf16 %v2260, %v2255
      %v2288 = vpack.c.bf16 %v2270, %v2265
      %v2305 = vunpack.c.l.b16 %v2273
      %v2306 = vunpack.c.h.b16 %v2273
      %v2307 = vunpack.c.l.b16 %v2274
      %v2308 = vunpack.c.h.b16 %v2274
      %v2309 = vunpack.c.l.b16 %v2275
      %v2310 = vunpack.c.h.b16 %v2275
      %v2311 = vunpack.c.l.b16 %v2276
      %v2312 = vunpack.c.h.b16 %v2276
      %v2313 = vunpack.c.l.b16 %v2277
      %v2314 = vunpack.c.h.b16 %v2277
      %v2315 = vunpack.c.l.b16 %v2278
      %v2316 = vunpack.c.h.b16 %v2278
      %v2317 = vunpack.c.l.b16 %v2279
      %v2318 = vunpack.c.h.b16 %v2279
      %v2319 = vunpack.c.l.b16 %v2280
      %v2320 = vunpack.c.h.b16 %v2280
      %v2321 = vunpack.c.l.b16 %v2281
      %v2322 = vunpack.c.h.b16 %v2281
      %v2323 = vunpack.c.l.b16 %v2282
      %v2324 = vunpack.c.h.b16 %v2282
      %v2325 = vunpack.c.l.b16 %v2283
      %v2326 = vunpack.c.h.b16 %v2283
      %v2327 = vunpack.c.l.b16 %v2284
      %v2328 = vunpack.c.h.b16 %v2284
      %v2329 = vunpack.c.l.b16 %v2285
      %v2330 = vunpack.c.h.b16 %v2285
      %v2331 = vunpack.c.l.b16 %v2286
      %v2332 = vunpack.c.h.b16 %v2286
      %v2333 = vunpack.c.l.b16 %v2287
      %v2334 = vunpack.c.h.b16 %v2287
      %v2335 = vunpack.c.l.b16 %v2288
      %v2336 = vunpack.c.h.b16 %v2288
      %v2337 = vpack.c.b16 %v2305, %v2305
      %v2338 = vpack.c.b16 %v2306, %v2306
      %v2339 = vpack.c.b16 %v2307, %v2307
      %v2340 = vpack.c.b16 %v2308, %v2308
      %v2341 = vpack.c.b16 %v2309, %v2309
      %v2342 = vpack.c.b16 %v2310, %v2310
      %v2343 = vpack.c.b16 %v2311, %v2311
      %v2344 = vpack.c.b16 %v2312, %v2312
      %v2345 = vpack.c.b16 %v2313, %v2313
      %v2346 = vpack.c.b16 %v2314, %v2314
      %v2347 = vpack.c.b16 %v2315, %v2315
      %v2348 = vpack.c.b16 %v2316, %v2316
      %v2349 = vpack.c.b16 %v2317, %v2317
      %v2350 = vpack.c.b16 %v2318, %v2318
      %v2351 = vpack.c.b16 %v2319, %v2319
      %v2352 = vpack.c.b16 %v2320, %v2320
      %v2353 = vpack.c.b16 %v2321, %v2321
      %v2354 = vpack.c.b16 %v2322, %v2322
      %v2355 = vpack.c.b16 %v2323, %v2323
      %v2356 = vpack.c.b16 %v2324, %v2324
      %v2357 = vpack.c.b16 %v2325, %v2325
      %v2358 = vpack.c.b16 %v2326, %v2326
      %v2359 = vpack.c.b16 %v2327, %v2327
      %v2360 = vpack.c.b16 %v2328, %v2328
      %v2361 = vpack.c.b16 %v2329, %v2329
      %v2362 = vpack.c.b16 %v2330, %v2330
      %v2363 = vpack.c.b16 %v2331, %v2331
      %v2364 = vpack.c.b16 %v2332, %v2332
      %v2365 = vpack.c.b16 %v2333, %v2333
      %v2366 = vpack.c.b16 %v2334, %v2334
      %v2367 = vpack.c.b16 %v2335, %v2335
      %v2368 = vpack.c.b16 %v2336, %v2336
      %2401 = vst [vmem:[%s229] sm:$0xf] %v2337
      %2402 = vst [vmem:[%s229 + $0x4] sm:$0xf] %v2338
      %2403 = vst [vmem:[%s229 + $0x8] sm:$0xf] %v2339
      %2404 = vst [vmem:[%s229 + $0xc] sm:$0xf] %v2340
      %2405 = vst [vmem:[%s229 + $0x10] sm:$0xf] %v2341
      %2406 = vst [vmem:[%s229 + $0x14] sm:$0xf] %v2342
      %2407 = vst [vmem:[%s229 + $0x18] sm:$0xf] %v2343
      %2408 = vst [vmem:[%s229 + $0x1c] sm:$0xf] %v2344
      %2409 = vst [vmem:[%s229 + $0x20] sm:$0xf] %v2345
      %2410 = vst [vmem:[%s229 + $0x24] sm:$0xf] %v2346
      %2411 = vst [vmem:[%s229 + $0x28] sm:$0xf] %v2347
      %2412 = vst [vmem:[%s229 + $0x2c] sm:$0xf] %v2348
      %2413 = vst [vmem:[%s229 + $0x30] sm:$0xf] %v2349
      %2414 = vst [vmem:[%s229 + $0x34] sm:$0xf] %v2350
      %2415 = vst [vmem:[%s229 + $0x38] sm:$0xf] %v2351
      %2416 = vst [vmem:[%s229 + $0x3c] sm:$0xf] %v2352
      %2417 = vst [vmem:[%s229 + $0x40] sm:$0xf] %v2353
      %2418 = vst [vmem:[%s229 + $0x44] sm:$0xf] %v2354
      %2419 = vst [vmem:[%s229 + $0x48] sm:$0xf] %v2355
      %2420 = vst [vmem:[%s229 + $0x4c] sm:$0xf] %v2356
      %2421 = vst [vmem:[%s229 + $0x50] sm:$0xf] %v2357
      %2422 = vst [vmem:[%s229 + $0x54] sm:$0xf] %v2358
      %2423 = vst [vmem:[%s229 + $0x58] sm:$0xf] %v2359
      %2424 = vst [vmem:[%s229 + $0x5c] sm:$0xf] %v2360
      %2425 = vst [vmem:[%s229 + $0x60] sm:$0xf] %v2361
      %2426 = vst [vmem:[%s229 + $0x64] sm:$0xf] %v2362
      %2427 = vst [vmem:[%s229 + $0x68] sm:$0xf] %v2363
      %2428 = vst [vmem:[%s229 + $0x6c] sm:$0xf] %v2364
      %2429 = vst [vmem:[%s229 + $0x70] sm:$0xf] %v2365
      %2430 = vst [vmem:[%s229 + $0x74] sm:$0xf] %v2366
      %2431 = vst [vmem:[%s229 + $0x78] sm:$0xf] %v2367
      %2432 = vst [vmem:[%s229 + $0x7c] sm:$0xf] %v2368
      %s2433 = smul.u32 32, %s16
      %p2434 = scmp.lt.s32.totalorder %s2433, 63
      %s2435 = scalar_select %p2434, %s2433, 63
      %s2436 = smul.addr %s2435, 4
      %s2437 = scalar_lea.vmem %s5, %s2436
      // Predicated region
      $region41: #{gnn_forward.4} parent=39 // pred_check
        %p2438 = pneg %p144
      $region42: #{gnn_forward.4} parent=39 // pred_check_branch
        %2440 = sbr.rel (%p2438) target = $region44
      $region43: #{gnn_forward.4} parent=39 // pred_region
        %s2441 = smul.u32 32, %s16
      $region44: #{gnn_forward.4} parent=39 // pred_fallthru
        _
    $region40: #{gnn_forward.4} parent=5 // pred_fallthru
      _
    %p2442 = scmp.le.s32.totalorder 2, %s11
    // Predicated region
    $region45: #{gnn_forward.4} parent=5 // pred_check
      %p2443 = pneg %p2442
    $region46: #{gnn_forward.4} parent=5 // pred_check_branch
      %2445 = sbr.rel (%p2443) target = $region48
    $region47: #{gnn_forward.4} parent=5 // pred_region
      %s2446 = ssub.s32 %s11, 2
      // Predicated region
      $region49: #{gnn_forward.4} parent=47 // pred_check
        %p2447 = pneg %p150
      $region50: #{gnn_forward.4} parent=47 // pred_check_branch
        %2449 = sbr.rel (%p2447) target = $region52
      $region51: #{gnn_forward.4} parent=47 // pred_region
        %s2450 = smul.u32 32, %s17
        %p2451 = scmp.lt.s32.totalorder %s2450, 63
        %s2452 = scalar_select %p2451, %s2450, 63
        %s2453 = smul.addr %s2452, 4
        %s2454 = scalar_lea.vmem %s5, %s2453
      $region52: #{gnn_forward.4} parent=47 // pred_fallthru
        _
    $region48: #{gnn_forward.4} parent=5 // pred_fallthru
      _
  $region6: #{gnn_forward.4} parent=0 // loop_footer
    %s15 = sadd.s32 1, %s11
  $region7: #{gnn_forward.4} parent=0 // loop_footer_branch
    %10 = sbr.rel target = $region3
  $region8: #{gnn_forward.4} parent=0 // loop_exit
    _

// kernel: gnn_forward.7
$region0: #{gnn_forward.7}
  #allocation0 [shape = 'u32[]', space=smem, size = 0x4, offset = 0x4, fixed_abs, tag = 'smem constant byte address 0x4 - core index']
  #allocation1 [shape = 'u32[144,128]{1,0:T(1,128)}', space=vmem, size = 0x12000, scoped, tag = 'internal scratch']
  #allocation2 [shape = 'f32[1,1]{1,0:T(1,128)S(6)}', space=smem, size = 0x200, scoped, tag = 'scoped memory for gnn_forward.7']
  %s0 = inlined_call_operand.<no memory space> [shape: f32[1,1], index: 0, kind: input, shape index: {}]
  %s1 = inlined_call_operand.vmem [shape: f32[512,128], index: 1, kind: input, shape index: {}]
  %s2 = inlined_call_operand.vmem [shape: f32[512,128], index: 2, kind: output, shape index: {}]
  %s3 = sld [smem:[#allocation0]]
  $region41: #{gnn_forward.7} parent=0
    _
  %s5 = ssub.s32 1, %s3
  %s6 = scalar_select 0, %s5, %s3
  %7 = sst [smem:[#allocation2]] %s0
  loop: start=0, step=1, limit=4
  $region2: #{gnn_forward.7} parent=0 // loop_pre_header
    _
  $region3: #{gnn_forward.7} parent=0 // loop_header
    %s9 = sphi 0, %s13
    %p10 = scmp.ge.s32.totalorder %s9, 4
    %s17 = sphi 0, %s17
    %s19 = sphi 0, %s17
    %s20 = sphi 0, %s19
    %s34 = sphi 0, %s20
    %s40 = sphi 0, %s42
    %s43 = sphi 0, %s40
    %s44 = sphi 0, %s43
    %s60 = sphi 0, %s44
    %s66 = sphi 0, %s68
    %s69 = sphi 0, %s66
    %s70 = sphi 0, %s69
    %s86 = sphi 0, %s70
  $region4: #{gnn_forward.7} parent=0 // loop_header_branch
    %12 = sbr.rel (%p10) target = $region8
  $region5: #{gnn_forward.7} parent=0 // loop_body
    %s14 = ssub.s32 %s9, 1
    %s15 = ssub.s32 %s9, 2
    %s16 = sadd.s32 %s9, 1
    %s18 = sadd.s32 %s17, 1
    %p21 = scmp.eq.s32.totalorder %s9, 1
    %p22 = scmp.ne.s32.totalorder %s17, %s19
    %p23 = scmp.eq.s32.totalorder %s9, 0
    %p24 = por %p22, %p23
    %p25 = scmp.ne.s32.totalorder %s17, %s19
    %p26 = scmp.eq.s32.totalorder %s14, 1
    %p27 = por %p25, %p26
    %p28 = scmp.ne.s32.totalorder %s19, %s20
    %p29 = scmp.eq.s32.totalorder %s14, 0
    %p30 = por %p28, %p29
    %p31 = scmp.ne.s32.totalorder %s19, %s20
    %p32 = scmp.eq.s32.totalorder %s15, 1
    %p33 = por %p31, %p32
    %p35 = scmp.ne.s32.totalorder %s20, %s34
    %p36 = scmp.eq.s32.totalorder %s15, 0
    %p37 = por %p35, %p36
    %s38 = ssub.s32 %s9, %s16
    %p39 = scmp.eq.s32.totalorder %s38, 0
    %s41 = sadd.s32 %s40, 1
    %s42 = scalar_select %p39, %s40, %s41
    %p45 = pneg %p39
    %p46 = scmp.eq.s32.totalorder %s9, 1
    %p47 = por %p45, %p46
    %p48 = scmp.ne.s32.totalorder %s40, %s43
    %p49 = scmp.eq.s32.totalorder %s9, 0
    %p50 = por %p48, %p49
    %p51 = scmp.ne.s32.totalorder %s40, %s43
    %p52 = scmp.eq.s32.totalorder %s14, 1
    %p53 = por %p51, %p52
    %p54 = scmp.ne.s32.totalorder %s43, %s44
    %p55 = scmp.eq.s32.totalorder %s14, 0
    %p56 = por %p54, %p55
    %p57 = scmp.ne.s32.totalorder %s43, %s44
    %p58 = scmp.eq.s32.totalorder %s15, 1
    %p59 = por %p57, %p58
    %p61 = scmp.ne.s32.totalorder %s44, %s60
    %p62 = scmp.eq.s32.totalorder %s15, 0
    %p63 = por %p61, %p62
    %s64 = ssub.s32 %s9, %s16
    %p65 = scmp.eq.s32.totalorder %s64, 0
    %s67 = sadd.s32 %s66, 1
    %s68 = scalar_select %p65, %s66, %s67
    %p71 = pneg %p65
    %p72 = scmp.eq.s32.totalorder %s9, 1
    %p73 = por %p71, %p72
    %p74 = scmp.ne.s32.totalorder %s66, %s69
    %p75 = scmp.eq.s32.totalorder %s9, 0
    %p76 = por %p74, %p75
    %p77 = scmp.ne.s32.totalorder %s66, %s69
    %p78 = scmp.eq.s32.totalorder %s14, 1
    %p79 = por %p77, %p78
    %p80 = scmp.ne.s32.totalorder %s69, %s70
    %p81 = scmp.eq.s32.totalorder %s14, 0
    %p82 = por %p80, %p81
    %p83 = scmp.ne.s32.totalorder %s69, %s70
    %p84 = scmp.eq.s32.totalorder %s15, 1
    %p85 = por %p83, %p84
    %p87 = scmp.ne.s32.totalorder %s70, %s86
    %p88 = scmp.eq.s32.totalorder %s15, 0
    %p89 = por %p87, %p88
    %p90 = scmp.le.s32.totalorder 1, %s9
    %p91 = scmp.lt.s32.totalorder %s9, 3
    %p92 = pnand %p90, %p91
    %p93 = pneg %p92
    // Predicated region
    $region9: #{gnn_forward.7} parent=5 // pred_check
      _
    $region10: #{gnn_forward.7} parent=5 // pred_check_branch
      %95 = sbr.rel (%p92) target = $region12
    $region11: #{gnn_forward.7} parent=5 // pred_region
      %s96 = ssub.s32 %s9, 1
      // Predicated region
      $region13: #{gnn_forward.7} parent=11 // pred_check
        %p97 = pneg %p30
      $region14: #{gnn_forward.7} parent=11 // pred_check_branch
        %99 = sbr.rel (%p97) target = $region16
      $region15: #{gnn_forward.7} parent=11 // pred_region
        _
      $region16: #{gnn_forward.7} parent=11 // pred_fallthru
        _
    $region12: #{gnn_forward.7} parent=5 // pred_fallthru
      _
    %p100 = scmp.lt.s32.totalorder %s9, 2
    // Predicated region
    $region17: #{gnn_forward.7} parent=5 // pred_check
      %p101 = pneg %p100
    $region18: #{gnn_forward.7} parent=5 // pred_check_branch
      %103 = sbr.rel (%p101) target = $region20
    $region19: #{gnn_forward.7} parent=5 // pred_region
      // Predicated region
      $region21: #{gnn_forward.7} parent=19 // pred_check
        %p104 = pneg %p50
      $region22: #{gnn_forward.7} parent=19 // pred_check_branch
        %106 = sbr.rel (%p104) target = $region24
      $region23: #{gnn_forward.7} parent=19 // pred_region
        %s107 = smul.u32 32, %s9
        %p108 = scmp.lt.s32.totalorder %s107, 63
        %s109 = scalar_select %p108, %s107, 63
        %s110 = smul.addr %s109, 8
        %s111 = scalar_lea.vmem %s1, %s110
        %s112 = smul.u32 32, %s9
      $region24: #{gnn_forward.7} parent=19 // pred_fallthru
        _
    $region20: #{gnn_forward.7} parent=5 // pred_fallthru
      _
    %p113 = scmp.le.s32.totalorder 1, %s9
    %p114 = scmp.lt.s32.totalorder %s9, 3
    %p115 = pnand %p113, %p114
    %p116 = pneg %p115
    // Predicated region
    $region25: #{gnn_forward.7} parent=5 // pred_check
      _
    $region26: #{gnn_forward.7} parent=5 // pred_check_branch
      %118 = sbr.rel (%p115) target = $region28
    $region27: #{gnn_forward.7} parent=5 // pred_region
      %s119 = ssub.s32 %s9, 1
      %p120 = pneg %p30
      %p121 = pneg %p27
      %s122 = smul.u32 32, %s14
      %p123 = scmp.lt.s32.totalorder %s122, 63
      %s124 = scalar_select %p123, %s122, 63
      %s125 = smul.addr %s124, 8
      %s126 = scalar_lea.vmem %s1, %s125
      %p127 = pneg %p56
      %p128 = pneg %p53
      %p129 = pneg %p82
      %p130 = pneg %p79
      %s131 = smul.u32 32, %s14
      %p132 = scmp.lt.s32.totalorder %s131, 63
      %s133 = scalar_select %p132, %s131, 63
      %s134 = smul.addr %s133, 8
      %s135 = scalar_lea.vmem %s2, %s134
      %s136 = smul.u32 32, %s14
      %p137 = scmp.lt.s32.totalorder %s136, 63
      %s138 = scalar_select %p137, %s136, 63
      %s139 = smul.addr %s138, 8
      %s140 = scalar_lea.vmem %s1, %s139
      %s141 = smul.u32 32, %s14
      %s142 = smul.u32 32, %s14
      %p143 = scmp.lt.s32.totalorder %s142, 63
      %s144 = scalar_select %p143, %s142, 63
      %s145 = smul.addr %s144, 8
      %s146 = scalar_lea.vmem %s2, %s145
      %s147 = smul.u32 32, %s14
      %v148 = vld [vmem:[%s140] sm:$0xff]
      %v149 = vld [vmem:[%s140 + $0x8] sm:$0xff]
      %v150 = vld [vmem:[%s140 + $0x10] sm:$0xff]
      %v151 = vld [vmem:[%s140 + $0x18] sm:$0xff]
      %v152 = vld [vmem:[%s140 + $0x20] sm:$0xff]
      %v153 = vld [vmem:[%s140 + $0x28] sm:$0xff]
      %v154 = vld [vmem:[%s140 + $0x30] sm:$0xff]
      %v155 = vld [vmem:[%s140 + $0x38] sm:$0xff]
      %v156 = vld [vmem:[%s140 + $0x40] sm:$0xff]
      %v157 = vld [vmem:[%s140 + $0x48] sm:$0xff]
      %v158 = vld [vmem:[%s140 + $0x50] sm:$0xff]
      %v159 = vld [vmem:[%s140 + $0x58] sm:$0xff]
      %v160 = vld [vmem:[%s140 + $0x60] sm:$0xff]
      %v161 = vld [vmem:[%s140 + $0x68] sm:$0xff]
      %v162 = vld [vmem:[%s140 + $0x70] sm:$0xff]
      %v163 = vld [vmem:[%s140 + $0x78] sm:$0xff]
      %v164 = vld [vmem:[%s140 + $0x80] sm:$0xff]
      %v165 = vld [vmem:[%s140 + $0x88] sm:$0xff]
      %v166 = vld [vmem:[%s140 + $0x90] sm:$0xff]
      %v167 = vld [vmem:[%s140 + $0x98] sm:$0xff]
      %v168 = vld [vmem:[%s140 + $0xa0] sm:$0xff]
      %v169 = vld [vmem:[%s140 + $0xa8] sm:$0xff]
      %v170 = vld [vmem:[%s140 + $0xb0] sm:$0xff]
      %v171 = vld [vmem:[%s140 + $0xb8] sm:$0xff]
      %v172 = vld [vmem:[%s140 + $0xc0] sm:$0xff]
      %v173 = vld [vmem:[%s140 + $0xc8] sm:$0xff]
      %v174 = vld [vmem:[%s140 + $0xd0] sm:$0xff]
      %v175 = vld [vmem:[%s140 + $0xd8] sm:$0xff]
      %v176 = vld [vmem:[%s140 + $0xe0] sm:$0xff]
      %v177 = vld [vmem:[%s140 + $0xe8] sm:$0xff]
      %v178 = vld [vmem:[%s140 + $0xf0] sm:$0xff]
      %v179 = vld [vmem:[%s140 + $0xf8] sm:$0xff]
      %s180 = sld [smem:[#allocation2]]
      %v181 = vstv %s180
      %v182 = vrcp.pop %v181
      %v183 = vmul.f32 %v148, %v182
      %v184 = vmul.f32 %v149, %v182
      %v185 = vmul.f32 %v150, %v182
      %v186 = vmul.f32 %v151, %v182
      %v187 = vmul.f32 %v152, %v182
      %v188 = vmul.f32 %v153, %v182
      %v189 = vmul.f32 %v154, %v182
      %v190 = vmul.f32 %v155, %v182
      %v191 = vmul.f32 %v156, %v182
      %v192 = vmul.f32 %v157, %v182
      %v193 = vmul.f32 %v158, %v182
      %v194 = vmul.f32 %v159, %v182
      %v195 = vmul.f32 %v160, %v182
      %v196 = vmul.f32 %v161, %v182
      %v197 = vmul.f32 %v162, %v182
      %v198 = vmul.f32 %v163, %v182
      %v199 = vmul.f32 %v164, %v182
      %v200 = vmul.f32 %v165, %v182
      %v201 = vmul.f32 %v166, %v182
      %v202 = vmul.f32 %v167, %v182
      %v203 = vmul.f32 %v168, %v182
      %v204 = vmul.f32 %v169, %v182
      %v205 = vmul.f32 %v170, %v182
      %v206 = vmul.f32 %v171, %v182
      %v207 = vmul.f32 %v172, %v182
      %v208 = vmul.f32 %v173, %v182
      %v209 = vmul.f32 %v174, %v182
      %v210 = vmul.f32 %v175, %v182
      %v211 = vmul.f32 %v176, %v182
      %v212 = vmul.f32 %v177, %v182
      %v213 = vmul.f32 %v178, %v182
      %v214 = vmul.f32 %v179, %v182
      %v215 = vtanh.pop %v183
      %v216 = vtanh.pop %v184
      %v217 = vtanh.pop %v185
      %v218 = vtanh.pop %v186
      %v219 = vtanh.pop %v187
      %v220 = vtanh.pop %v188
      %v221 = vtanh.pop %v189
      %v222 = vtanh.pop %v190
      %v223 = vtanh.pop %v191
      %v224 = vtanh.pop %v192
      %v225 = vtanh.pop %v193
      %v226 = vtanh.pop %v194
      %v227 = vtanh.pop %v195
      %v228 = vtanh.pop %v196
      %v229 = vtanh.pop %v197
      %v230 = vtanh.pop %v198
      %v231 = vtanh.pop %v199
      %v232 = vtanh.pop %v200
      %v233 = vtanh.pop %v201
      %v234 = vtanh.pop %v202
      %v235 = vtanh.pop %v203
      %v236 = vtanh.pop %v204
      %v237 = vtanh.pop %v205
      %v238 = vtanh.pop %v206
      %v239 = vtanh.pop %v207
      %v240 = vtanh.pop %v208
      %v241 = vtanh.pop %v209
      %v242 = vtanh.pop %v210
      %v243 = vtanh.pop %v211
      %v244 = vtanh.pop %v212
      %v245 = vtanh.pop %v213
      %v246 = vtanh.pop %v214
      %v247 = vmul.f32 %v215, %v215
      %v248 = vmul.f32 %v216, %v216
      %v249 = vmul.f32 %v217, %v217
      %v250 = vmul.f32 %v218, %v218
      %v251 = vmul.f32 %v219, %v219
      %v252 = vmul.f32 %v220, %v220
      %v253 = vmul.f32 %v221, %v221
      %v254 = vmul.f32 %v222, %v222
      %v255 = vmul.f32 %v223, %v223
      %v256 = vmul.f32 %v224, %v224
      %v257 = vmul.f32 %v225, %v225
      %v258 = vmul.f32 %v226, %v226
      %v259 = vmul.f32 %v227, %v227
      %v260 = vmul.f32 %v228, %v228
      %v261 = vmul.f32 %v229, %v229
      %v262 = vmul.f32 %v230, %v230
      %v263 = vmul.f32 %v231, %v231
      %v264 = vmul.f32 %v232, %v232
      %v265 = vmul.f32 %v233, %v233
      %v266 = vmul.f32 %v234, %v234
      %v267 = vmul.f32 %v235, %v235
      %v268 = vmul.f32 %v236, %v236
      %v269 = vmul.f32 %v237, %v237
      %v270 = vmul.f32 %v238, %v238
      %v271 = vmul.f32 %v239, %v239
      %v272 = vmul.f32 %v240, %v240
      %v273 = vmul.f32 %v241, %v241
      %v274 = vmul.f32 %v242, %v242
      %v275 = vmul.f32 %v243, %v243
      %v276 = vmul.f32 %v244, %v244
      %v277 = vmul.f32 %v245, %v245
      %v278 = vmul.f32 %v246, %v246
      %v279 = vmul.f32 %v247, %v247
      %v280 = vmul.f32 %v248, %v248
      %v281 = vmul.f32 %v249, %v249
      %v282 = vmul.f32 %v250, %v250
      %v283 = vmul.f32 %v251, %v251
      %v284 = vmul.f32 %v252, %v252
      %v285 = vmul.f32 %v253, %v253
      %v286 = vmul.f32 %v254, %v254
      %v287 = vmul.f32 %v255, %v255
      %v288 = vmul.f32 %v256, %v256
      %v289 = vmul.f32 %v257, %v257
      %v290 = vmul.f32 %v258, %v258
      %v291 = vmul.f32 %v259, %v259
      %v292 = vmul.f32 %v260, %v260
      %v293 = vmul.f32 %v261, %v261
      %v294 = vmul.f32 %v262, %v262
      %v295 = vmul.f32 %v263, %v263
      %v296 = vmul.f32 %v264, %v264
      %v297 = vmul.f32 %v265, %v265
      %v298 = vmul.f32 %v266, %v266
      %v299 = vmul.f32 %v267, %v267
      %v300 = vmul.f32 %v268, %v268
      %v301 = vmul.f32 %v269, %v269
      %v302 = vmul.f32 %v270, %v270
      %v303 = vmul.f32 %v271, %v271
      %v304 = vmul.f32 %v272, %v272
      %v305 = vmul.f32 %v273, %v273
      %v306 = vmul.f32 %v274, %v274
      %v307 = vmul.f32 %v275, %v275
      %v308 = vmul.f32 %v276, %v276
      %v309 = vmul.f32 %v277, %v277
      %v310 = vmul.f32 %v278, %v278
      %311 = vadd.xlane.f32.xlu0 %v279
      %v312 = vpop.xlane.xlu0 %311
      %313 = vadd.xlane.f32.xlu0 %v280
      %v314 = vpop.xlane.xlu0 %313
      %315 = vadd.xlane.f32.xlu0 %v281
      %v316 = vpop.xlane.xlu0 %315
      %317 = vadd.xlane.f32.xlu0 %v282
      %v318 = vpop.xlane.xlu0 %317
      %319 = vadd.xlane.f32.xlu0 %v283
      %v320 = vpop.xlane.xlu0 %319
      %321 = vadd.xlane.f32.xlu0 %v284
      %v322 = vpop.xlane.xlu0 %321
      %323 = vadd.xlane.f32.xlu0 %v285
      %v324 = vpop.xlane.xlu0 %323
      %325 = vadd.xlane.f32.xlu0 %v286
      %v326 = vpop.xlane.xlu0 %325
      %327 = vadd.xlane.f32.xlu0 %v287
      %v328 = vpop.xlane.xlu0 %327
      %329 = vadd.xlane.f32.xlu0 %v288
      %v330 = vpop.xlane.xlu0 %329
      %331 = vadd.xlane.f32.xlu0 %v289
      %v332 = vpop.xlane.xlu0 %331
      %333 = vadd.xlane.f32.xlu0 %v290
      %v334 = vpop.xlane.xlu0 %333
      %335 = vadd.xlane.f32.xlu0 %v291
      %v336 = vpop.xlane.xlu0 %335
      %337 = vadd.xlane.f32.xlu0 %v292
      %v338 = vpop.xlane.xlu0 %337
      %339 = vadd.xlane.f32.xlu0 %v293
      %v340 = vpop.xlane.xlu0 %339
      %341 = vadd.xlane.f32.xlu0 %v294
      %v342 = vpop.xlane.xlu0 %341
      %343 = vadd.xlane.f32.xlu0 %v295
      %v344 = vpop.xlane.xlu0 %343
      %345 = vadd.xlane.f32.xlu0 %v296
      %v346 = vpop.xlane.xlu0 %345
      %347 = vadd.xlane.f32.xlu0 %v297
      %v348 = vpop.xlane.xlu0 %347
      %349 = vadd.xlane.f32.xlu0 %v298
      %v350 = vpop.xlane.xlu0 %349
      %351 = vadd.xlane.f32.xlu0 %v299
      %v352 = vpop.xlane.xlu0 %351
      %353 = vadd.xlane.f32.xlu0 %v300
      %v354 = vpop.xlane.xlu0 %353
      %355 = vadd.xlane.f32.xlu0 %v301
      %v356 = vpop.xlane.xlu0 %355
      %357 = vadd.xlane.f32.xlu0 %v302
      %v358 = vpop.xlane.xlu0 %357
      %359 = vadd.xlane.f32.xlu0 %v303
      %v360 = vpop.xlane.xlu0 %359
      %361 = vadd.xlane.f32.xlu0 %v304
      %v362 = vpop.xlane.xlu0 %361
      %363 = vadd.xlane.f32.xlu0 %v305
      %v364 = vpop.xlane.xlu0 %363
      %365 = vadd.xlane.f32.xlu0 %v306
      %v366 = vpop.xlane.xlu0 %365
      %367 = vadd.xlane.f32.xlu0 %v307
      %v368 = vpop.xlane.xlu0 %367
      %369 = vadd.xlane.f32.xlu0 %v308
      %v370 = vpop.xlane.xlu0 %369
      %371 = vadd.xlane.f32.xlu0 %v309
      %v372 = vpop.xlane.xlu0 %371
      %373 = vadd.xlane.f32.xlu0 %v310
      %v374 = vpop.xlane.xlu0 %373
      %v375 = vmax.f32 %v312, 1e-24
      %v376 = vmax.f32 %v314, 1e-24
      %v377 = vmax.f32 %v316, 1e-24
      %v378 = vmax.f32 %v318, 1e-24
      %v379 = vmax.f32 %v320, 1e-24
      %v380 = vmax.f32 %v322, 1e-24
      %v381 = vmax.f32 %v324, 1e-24
      %v382 = vmax.f32 %v326, 1e-24
      %v383 = vmax.f32 %v328, 1e-24
      %v384 = vmax.f32 %v330, 1e-24
      %v385 = vmax.f32 %v332, 1e-24
      %v386 = vmax.f32 %v334, 1e-24
      %v387 = vmax.f32 %v336, 1e-24
      %v388 = vmax.f32 %v338, 1e-24
      %v389 = vmax.f32 %v340, 1e-24
      %v390 = vmax.f32 %v342, 1e-24
      %v391 = vmax.f32 %v344, 1e-24
      %v392 = vmax.f32 %v346, 1e-24
      %v393 = vmax.f32 %v348, 1e-24
      %v394 = vmax.f32 %v350, 1e-24
      %v395 = vmax.f32 %v352, 1e-24
      %v396 = vmax.f32 %v354, 1e-24
      %v397 = vmax.f32 %v356, 1e-24
      %v398 = vmax.f32 %v358, 1e-24
      %v399 = vmax.f32 %v360, 1e-24
      %v400 = vmax.f32 %v362, 1e-24
      %v401 = vmax.f32 %v364, 1e-24
      %v402 = vmax.f32 %v366, 1e-24
      %v403 = vmax.f32 %v368, 1e-24
      %v404 = vmax.f32 %v370, 1e-24
      %v405 = vmax.f32 %v372, 1e-24
      %v406 = vmax.f32 %v374, 1e-24
      %v407 = vrsqrt.pop %v375
      %v408 = vrsqrt.pop %v376
      %v409 = vrsqrt.pop %v377
      %v410 = vrsqrt.pop %v378
      %v411 = vrsqrt.pop %v379
      %v412 = vrsqrt.pop %v380
      %v413 = vrsqrt.pop %v381
      %v414 = vrsqrt.pop %v382
      %v415 = vrsqrt.pop %v383
      %v416 = vrsqrt.pop %v384
      %v417 = vrsqrt.pop %v385
      %v418 = vrsqrt.pop %v386
      %v419 = vrsqrt.pop %v387
      %v420 = vrsqrt.pop %v388
      %v421 = vrsqrt.pop %v389
      %v422 = vrsqrt.pop %v390
      %v423 = vrsqrt.pop %v391
      %v424 = vrsqrt.pop %v392
      %v425 = vrsqrt.pop %v393
      %v426 = vrsqrt.pop %v394
      %v427 = vrsqrt.pop %v395
      %v428 = vrsqrt.pop %v396
      %v429 = vrsqrt.pop %v397
      %v430 = vrsqrt.pop %v398
      %v431 = vrsqrt.pop %v399
      %v432 = vrsqrt.pop %v400
      %v433 = vrsqrt.pop %v401
      %v434 = vrsqrt.pop %v402
      %v435 = vrsqrt.pop %v403
      %v436 = vrsqrt.pop %v404
      %v437 = vrsqrt.pop %v405
      %v438 = vrsqrt.pop %v406
      %v439 = vmul.f32 %v247, %v407
      %v440 = vmul.f32 %v248, %v408
      %v441 = vmul.f32 %v249, %v409
      %v442 = vmul.f32 %v250, %v410
      %v443 = vmul.f32 %v251, %v411
      %v444 = vmul.f32 %v252, %v412
      %v445 = vmul.f32 %v253, %v413
      %v446 = vmul.f32 %v254, %v414
      %v447 = vmul.f32 %v255, %v415
      %v448 = vmul.f32 %v256, %v416
      %v449 = vmul.f32 %v257, %v417
      %v450 = vmul.f32 %v258, %v418
      %v451 = vmul.f32 %v259, %v419
      %v452 = vmul.f32 %v260, %v420
      %v453 = vmul.f32 %v261, %v421
      %v454 = vmul.f32 %v262, %v422
      %v455 = vmul.f32 %v263, %v423
      %v456 = vmul.f32 %v264, %v424
      %v457 = vmul.f32 %v265, %v425
      %v458 = vmul.f32 %v266, %v426
      %v459 = vmul.f32 %v267, %v427
      %v460 = vmul.f32 %v268, %v428
      %v461 = vmul.f32 %v269, %v429
      %v462 = vmul.f32 %v270, %v430
      %v463 = vmul.f32 %v271, %v431
      %v464 = vmul.f32 %v272, %v432
      %v465 = vmul.f32 %v273, %v433
      %v466 = vmul.f32 %v274, %v434
      %v467 = vmul.f32 %v275, %v435
      %v468 = vmul.f32 %v276, %v436
      %v469 = vmul.f32 %v277, %v437
      %v470 = vmul.f32 %v278, %v438
      %471 = vst [vmem:[%s146] sm:$0xff] %v439
      %472 = vst [vmem:[%s146 + $0x8] sm:$0xff] %v440
      %473 = vst [vmem:[%s146 + $0x10] sm:$0xff] %v441
      %474 = vst [vmem:[%s146 + $0x18] sm:$0xff] %v442
      %475 = vst [vmem:[%s146 + $0x20] sm:$0xff] %v443
      %476 = vst [vmem:[%s146 + $0x28] sm:$0xff] %v444
      %477 = vst [vmem:[%s146 + $0x30] sm:$0xff] %v445
      %478 = vst [vmem:[%s146 + $0x38] sm:$0xff] %v446
      %479 = vst [vmem:[%s146 + $0x40] sm:$0xff] %v447
      %480 = vst [vmem:[%s146 + $0x48] sm:$0xff] %v448
      %481 = vst [vmem:[%s146 + $0x50] sm:$0xff] %v449
      %482 = vst [vmem:[%s146 + $0x58] sm:$0xff] %v450
      %483 = vst [vmem:[%s146 + $0x60] sm:$0xff] %v451
      %484 = vst [vmem:[%s146 + $0x68] sm:$0xff] %v452
      %485 = vst [vmem:[%s146 + $0x70] sm:$0xff] %v453
      %486 = vst [vmem:[%s146 + $0x78] sm:$0xff] %v454
      %487 = vst [vmem:[%s146 + $0x80] sm:$0xff] %v455
      %488 = vst [vmem:[%s146 + $0x88] sm:$0xff] %v456
      %489 = vst [vmem:[%s146 + $0x90] sm:$0xff] %v457
      %490 = vst [vmem:[%s146 + $0x98] sm:$0xff] %v458
      %491 = vst [vmem:[%s146 + $0xa0] sm:$0xff] %v459
      %492 = vst [vmem:[%s146 + $0xa8] sm:$0xff] %v460
      %493 = vst [vmem:[%s146 + $0xb0] sm:$0xff] %v461
      %494 = vst [vmem:[%s146 + $0xb8] sm:$0xff] %v462
      %495 = vst [vmem:[%s146 + $0xc0] sm:$0xff] %v463
      %496 = vst [vmem:[%s146 + $0xc8] sm:$0xff] %v464
      %497 = vst [vmem:[%s146 + $0xd0] sm:$0xff] %v465
      %498 = vst [vmem:[%s146 + $0xd8] sm:$0xff] %v466
      %499 = vst [vmem:[%s146 + $0xe0] sm:$0xff] %v467
      %500 = vst [vmem:[%s146 + $0xe8] sm:$0xff] %v468
      %501 = vst [vmem:[%s146 + $0xf0] sm:$0xff] %v469
      %502 = vst [vmem:[%s146 + $0xf8] sm:$0xff] %v470
      %s503 = smul.u32 32, %s14
      %p504 = scmp.lt.s32.totalorder %s503, 63
      %s505 = scalar_select %p504, %s503, 63
      %s506 = smul.addr %s505, 8
      %s507 = scalar_lea.vmem %s2, %s506
      // Predicated region
      $region29: #{gnn_forward.7} parent=27 // pred_check
        %p508 = pneg %p79
      $region30: #{gnn_forward.7} parent=27 // pred_check_branch
        %510 = sbr.rel (%p508) target = $region32
      $region31: #{gnn_forward.7} parent=27 // pred_region
        %s511 = smul.u32 32, %s14
      $region32: #{gnn_forward.7} parent=27 // pred_fallthru
        _
    $region28: #{gnn_forward.7} parent=5 // pred_fallthru
      _
    %p512 = scmp.le.s32.totalorder 2, %s9
    // Predicated region
    $region33: #{gnn_forward.7} parent=5 // pred_check
      %p513 = pneg %p512
    $region34: #{gnn_forward.7} parent=5 // pred_check_branch
      %515 = sbr.rel (%p513) target = $region36
    $region35: #{gnn_forward.7} parent=5 // pred_region
      %s516 = ssub.s32 %s9, 2
      // Predicated region
      $region37: #{gnn_forward.7} parent=35 // pred_check
        %p517 = pneg %p85
      $region38: #{gnn_forward.7} parent=35 // pred_check_branch
        %519 = sbr.rel (%p517) target = $region40
      $region39: #{gnn_forward.7} parent=35 // pred_region
        %s520 = smul.u32 32, %s15
        %p521 = scmp.lt.s32.totalorder %s520, 63
        %s522 = scalar_select %p521, %s520, 63
        %s523 = smul.addr %s522, 8
        %s524 = scalar_lea.vmem %s2, %s523
      $region40: #{gnn_forward.7} parent=35 // pred_fallthru
        _
    $region36: #{gnn_forward.7} parent=5 // pred_fallthru
      _
  $region6: #{gnn_forward.7} parent=0 // loop_footer
    %s13 = sadd.s32 1, %s9
  $region7: #{gnn_forward.7} parent=0 // loop_footer_branch
    %8 = sbr.rel target = $region3
  $region8: #{gnn_forward.7} parent=0 // loop_exit
    _

</llo_original>
